<compile_context>
chip_gen: v7x
topology: tpu7x:2x2x1
jax: 0.10.0
libtpu: 0.0.40
codegen_flags: <defaults>
</compile_context>

<pallas_src>
import jax
import jax.numpy as jnp
from jax.experimental import pallas as pl
from jax.experimental.pallas import tpu as pltpu


def _double_conv_kernel(x_ref, w1_ref, s1_ref, t1_ref, w2_ref, s2_ref, t2_ref,
                        o_ref, mid_ref):
    # x_ref  : (C_in,  H+2, W+2)  padded input image (VMEM)
    # w*_ref : flat (C_out*C_in*9,) conv weights      (SMEM scalars)
    # s*_ref : (C,) folded BN scale,  t*_ref: (C,) folded BN shift (SMEM)
    # o_ref  : (C_out, H, W) output image (VMEM)
    # mid_ref: (C_mid, H+2, W+2) zero-padded intermediate (VMEM scratch)
    C_in, Hp, Wp = x_ref.shape
    H, W = Hp - 2, Wp - 2
    C_mid = mid_ref.shape[0]
    C_out = o_ref.shape[0]

    # Zero the padded intermediate so its 1-pixel halo provides conv2's padding.
    mid_ref[...] = jnp.zeros_like(mid_ref)

    # Hoist the 9*C_in shifted windows of the padded input once; reuse them for
    # every mid channel (pure VPU broadcast-MACs, no MXU).
    x_win = [[[x_ref[ci, kh:kh + H, kw:kw + W]
               for kw in range(3)] for kh in range(3)] for ci in range(C_in)]

    # ---- conv1 (3x3, pad=1) + BN1(eval) + ReLU -> mid_ref interior ----
    for cm in range(C_mid):
        acc = jnp.zeros((H, W), jnp.float32)
        for ci in range(C_in):
            for kh in range(3):
                for kw in range(3):
                    wv = w1_ref[((cm * C_in + ci) * 3 + kh) * 3 + kw]
                    acc = acc + wv * x_win[ci][kh][kw]
        y = jnp.maximum(acc * s1_ref[cm] + t1_ref[cm], 0.0)
        mid_ref[cm, 1:H + 1, 1:W + 1] = y

    # Shifted windows of the (now written) padded intermediate.
    m_win = [[[mid_ref[cm, kh:kh + H, kw:kw + W]
               for kw in range(3)] for kh in range(3)] for cm in range(C_mid)]

    # ---- conv2 (3x3, pad=1) + BN2(eval) + ReLU -> output ----
    for co in range(C_out):
        acc = jnp.zeros((H, W), jnp.float32)
        for cm in range(C_mid):
            for kh in range(3):
                for kw in range(3):
                    wv = w2_ref[((co * C_mid + cm) * 3 + kh) * 3 + kw]
                    acc = acc + wv * m_win[cm][kh][kw]
        o_ref[co, :, :] = jnp.maximum(
            acc * s2_ref[co] + t2_ref[co], 0.0).astype(o_ref.dtype)


def double_conv_pallas(x, w1, b1, g1, beta1, rm1, rv1,
                       w2, b2, g2, beta2, rm2, rv2, *, eps=1e-5):
    """DoubleConv forward (eval-mode BN), NCHW in / NCHW out.

    x  : (N, C_in, H, W)
    w1 : (C_mid, C_in, 3, 3), b1/g1/beta1/rm1/rv1 : (C_mid,)
    w2 : (C_out, C_mid, 3, 3), b2/g2/beta2/rm2/rv2 : (C_out,)
    """
    N, C_in, H, W = x.shape
    C_mid = w1.shape[0]
    C_out = w2.shape[0]

    # Fold conv bias + eval-mode BatchNorm into per-channel scale/shift:
    #   relu( (conv(x,W)+b - mean) * g/sqrt(var+eps) + beta )
    # = relu(  conv(x,W) * scale + shift )
    inv1 = g1 / jnp.sqrt(rv1 + eps)
    scale1 = inv1.astype(jnp.float32)
    shift1 = ((b1 - rm1) * inv1 + beta1).astype(jnp.float32)
    inv2 = g2 / jnp.sqrt(rv2 + eps)
    scale2 = inv2.astype(jnp.float32)
    shift2 = ((b2 - rm2) * inv2 + beta2).astype(jnp.float32)

    # Halo for conv1's padding=1 (reshape-free; no NHWC transposes anywhere).
    x_pad = jnp.pad(x, ((0, 0), (0, 0), (1, 1), (1, 1)))

    w1_flat = w1.reshape(-1).astype(jnp.float32)   # (C_mid*C_in*9,)
    w2_flat = w2.reshape(-1).astype(jnp.float32)   # (C_out*C_mid*9,)

    smem_spec = pl.BlockSpec(memory_space=pltpu.MemorySpace.SMEM)

    out = pl.pallas_call(
        _double_conv_kernel,
        out_shape=jax.ShapeDtypeStruct((N, C_out, H, W), x.dtype),
        grid=(N,),
        in_specs=[
            pl.BlockSpec((None, C_in, H + 2, W + 2), lambda n: (n, 0, 0, 0)),
            smem_spec,  # w1_flat
            smem_spec,  # scale1
            smem_spec,  # shift1
            smem_spec,  # w2_flat
            smem_spec,  # scale2
            smem_spec,  # shift2
        ],
        out_specs=pl.BlockSpec((None, C_out, H, W), lambda n: (n, 0, 0, 0)),
        scratch_shapes=[pltpu.VMEM((C_mid, H + 2, W + 2), jnp.float32)],
        compiler_params=pltpu.CompilerParams(
            dimension_semantics=("parallel",),
            vmem_limit_bytes=32 * 1024 * 1024,
        ),
    )(x_pad, w1_flat, scale1, shift1, w2_flat, scale2, shift2)
    return out


def _ref_double_conv(x, w1, b1, g1, beta1, rm1, rv1,
                     w2, b2, g2, beta2, rm2, rv2, eps=1e-5):
    def conv3x3(xx, w, b):
        y = jax.lax.conv_general_dilated(
            xx, w, window_strides=(1, 1), padding=((1, 1), (1, 1)),
            dimension_numbers=("NCHW", "OIHW", "NCHW"))
        return y + b[None, :, None, None]

    def bn_relu(y, g, beta, rm, rv):
        yn = (y - rm[None, :, None, None]) / jnp.sqrt(rv[None, :, None, None] + eps)
        return jnp.maximum(yn * g[None, :, None, None] + beta[None, :, None, None], 0.0)

    y = bn_relu(conv3x3(x, w1, b1), g1, beta1, rm1, rv1)
    return bn_relu(conv3x3(y, w2, b2), g2, beta2, rm2, rv2)


if __name__ == "__main__":
    key = jax.random.PRNGKey(0)
    keys = jax.random.split(key, 12)

    N, C_in, H, W = 2, 4, 16, 16
    C_mid = 4   # mid_channels defaults to out_channels
    C_out = 4

    x = jax.random.normal(keys[0], (N, C_in, H, W), dtype=jnp.float32)

    # Conv1 + BN1 parameters
    w1 = jax.random.normal(keys[1], (C_mid, C_in, 3, 3), jnp.float32) * 0.2
    b1 = jax.random.normal(keys[2], (C_mid,), jnp.float32) * 0.1
    g1 = 1.0 + 0.1 * jax.random.normal(keys[3], (C_mid,), jnp.float32)
    beta1 = 0.1 * jax.random.normal(keys[4], (C_mid,), jnp.float32)
    rm1 = 0.1 * jax.random.normal(keys[5], (C_mid,), jnp.float32)
    rv1 = jax.random.uniform(keys[6], (C_mid,), jnp.float32, 0.5, 1.5)

    # Conv2 + BN2 parameters
    w2 = jax.random.normal(keys[7], (C_out, C_mid, 3, 3), jnp.float32) * 0.2
    b2 = jax.random.normal(keys[8], (C_out,), jnp.float32) * 0.1
    g2 = 1.0 + 0.1 * jax.random.normal(keys[9], (C_out,), jnp.float32)
    beta2 = 0.1 * jax.random.normal(keys[10], (C_out,), jnp.float32)
    rm2 = 0.1 * jax.random.normal(keys[11], (C_out,), jnp.float32)
    rv2 = jax.random.uniform(jax.random.PRNGKey(42), (C_out,), jnp.float32, 0.5, 1.5)

    y = double_conv_pallas(x, w1, b1, g1, beta1, rm1, rv1,
                           w2, b2, g2, beta2, rm2, rv2)
    jax.block_until_ready(y)

    ref = _ref_double_conv(x, w1, b1, g1, beta1, rm1, rv1,
                           w2, b2, g2, beta2, rm2, rv2)

    assert y.shape == (N, C_out, H, W)
    assert jnp.allclose(y, ref, atol=1e-4, rtol=1e-4), (
        float(jnp.max(jnp.abs(y - ref))))

    print("KERNEL_OK")
</pallas_src>

<mosaic_0001>
module attributes {stable_mosaic.version = 11 : i64} {
  func.func @_double_conv_kernel(%arg0: i32, %arg1: memref<1x4x18x18xf32, #tpu.memory_space<vmem>>, %arg2: memref<144xf32, #tpu.memory_space<smem>>, %arg3: memref<4xf32, #tpu.memory_space<smem>>, %arg4: memref<4xf32, #tpu.memory_space<smem>>, %arg5: memref<144xf32, #tpu.memory_space<smem>>, %arg6: memref<4xf32, #tpu.memory_space<smem>>, %arg7: memref<4xf32, #tpu.memory_space<smem>>, %arg8: memref<1x4x16x16xf32, #tpu.memory_space<vmem>>, %arg9: memref<4x18x18xf32, #tpu.memory_space<vmem>>) attributes {dimension_semantics = [#tpu.dimension_semantics<parallel>], iteration_bounds = array<i64: 2>, scalar_prefetch = 0 : i64, scratch_operands = 1 : i64, tpu.core_type = #tpu.core_type<tc>, window_params = [{transform_indices = @transform_0, window_bounds = array<i64: 1, 4, 18, 18>}, {transform_indices = @transform_1, window_bounds = array<i64: 144>}, {transform_indices = @transform_2, window_bounds = array<i64: 4>}, {transform_indices = @transform_3, window_bounds = array<i64: 4>}, {transform_indices = @transform_4, window_bounds = array<i64: 144>}, {transform_indices = @transform_5, window_bounds = array<i64: 4>}, {transform_indices = @transform_6, window_bounds = array<i64: 4>}, {transform_indices = @transform_7, window_bounds = array<i64: 1, 4, 16, 16>}]} {
    %cst = arith.constant 0.000000e+00 : f32
    %0 = vector.broadcast %cst : f32 to vector<4x18x18xf32>
    %c0 = arith.constant 0 : index
    %c0_0 = arith.constant 0 : index
    %c0_1 = arith.constant 0 : index
    %1 = vector.load %arg9[%c0, %c0_0, %c0_1] : memref<4x18x18xf32, #tpu.memory_space<vmem>>, vector<4x18x18xf32>
    tpu.vector_store %arg9[%c0, %c0_0, %c0_1], %0 {strides = array<i32>} : memref<4x18x18xf32, #tpu.memory_space<vmem>>, vector<4x18x18xf32>,
    %c0_2 = arith.constant 0 : index
    %c0_3 = arith.constant 0 : index
    %c0_4 = arith.constant 0 : index
    %c0_5 = arith.constant 0 : index
    %2 = vector.load %arg1[%c0_2, %c0_3, %c0_4, %c0_5] : memref<1x4x18x18xf32, #tpu.memory_space<vmem>>, vector<1x1x16x16xf32>
    %3 = vector.shape_cast %2 : vector<1x1x16x16xf32> to vector<16x16xf32>
    %c0_6 = arith.constant 0 : index
    %c0_7 = arith.constant 0 : index
    %c0_8 = arith.constant 0 : index
    %c1 = arith.constant 1 : index
    %4 = vector.load %arg1[%c0_6, %c0_7, %c0_8, %c1] : memref<1x4x18x18xf32, #tpu.memory_space<vmem>>, vector<1x1x16x16xf32>
    %5 = vector.shape_cast %4 : vector<1x1x16x16xf32> to vector<16x16xf32>
    %c0_9 = arith.constant 0 : index
    %c0_10 = arith.constant 0 : index
    %c0_11 = arith.constant 0 : index
    %c2 = arith.constant 2 : index
    %6 = vector.load %arg1[%c0_9, %c0_10, %c0_11, %c2] : memref<1x4x18x18xf32, #tpu.memory_space<vmem>>, vector<1x1x16x16xf32>
    %7 = vector.shape_cast %6 : vector<1x1x16x16xf32> to vector<16x16xf32>
    %c0_12 = arith.constant 0 : index
    %c0_13 = arith.constant 0 : index
    %c1_14 = arith.constant 1 : index
    %c0_15 = arith.constant 0 : index
    %8 = vector.load %arg1[%c0_12, %c0_13, %c1_14, %c0_15] : memref<1x4x18x18xf32, #tpu.memory_space<vmem>>, vector<1x1x16x16xf32>
    %9 = vector.shape_cast %8 : vector<1x1x16x16xf32> to vector<16x16xf32>
    %c0_16 = arith.constant 0 : index
    %c0_17 = arith.constant 0 : index
    %c1_18 = arith.constant 1 : index
    %c1_19 = arith.constant 1 : index
    %10 = vector.load %arg1[%c0_16, %c0_17, %c1_18, %c1_19] : memref<1x4x18x18xf32, #tpu.memory_space<vmem>>, vector<1x1x16x16xf32>
    %11 = vector.shape_cast %10 : vector<1x1x16x16xf32> to vector<16x16xf32>
    %c0_20 = arith.constant 0 : index
    %c0_21 = arith.constant 0 : index
    %c1_22 = arith.constant 1 : index
    %c2_23 = arith.constant 2 : index
    %12 = vector.load %arg1[%c0_20, %c0_21, %c1_22, %c2_23] : memref<1x4x18x18xf32, #tpu.memory_space<vmem>>, vector<1x1x16x16xf32>
    %13 = vector.shape_cast %12 : vector<1x1x16x16xf32> to vector<16x16xf32>
    %c0_24 = arith.constant 0 : index
    %c0_25 = arith.constant 0 : index
    %c2_26 = arith.constant 2 : index
    %c0_27 = arith.constant 0 : index
    %14 = vector.load %arg1[%c0_24, %c0_25, %c2_26, %c0_27] : memref<1x4x18x18xf32, #tpu.memory_space<vmem>>, vector<1x1x16x16xf32>
    %15 = vector.shape_cast %14 : vector<1x1x16x16xf32> to vector<16x16xf32>
    %c0_28 = arith.constant 0 : index
    %c0_29 = arith.constant 0 : index
    %c2_30 = arith.constant 2 : index
    %c1_31 = arith.constant 1 : index
    %16 = vector.load %arg1[%c0_28, %c0_29, %c2_30, %c1_31] : memref<1x4x18x18xf32, #tpu.memory_space<vmem>>, vector<1x1x16x16xf32>
    %17 = vector.shape_cast %16 : vector<1x1x16x16xf32> to vector<16x16xf32>
    %c0_32 = arith.constant 0 : index
    %c0_33 = arith.constant 0 : index
    %c2_34 = arith.constant 2 : index
    %c2_35 = arith.constant 2 : index
    %18 = vector.load %arg1[%c0_32, %c0_33, %c2_34, %c2_35] : memref<1x4x18x18xf32, #tpu.memory_space<vmem>>, vector<1x1x16x16xf32>
    %19 = vector.shape_cast %18 : vector<1x1x16x16xf32> to vector<16x16xf32>
    %c0_36 = arith.constant 0 : index
    %c1_37 = arith.constant 1 : index
    %c0_38 = arith.constant 0 : index
    %c0_39 = arith.constant 0 : index
    %20 = vector.load %arg1[%c0_36, %c1_37, %c0_38, %c0_39] : memref<1x4x18x18xf32, #tpu.memory_space<vmem>>, vector<1x1x16x16xf32>
    %21 = vector.shape_cast %20 : vector<1x1x16x16xf32> to vector<16x16xf32>
    %c0_40 = arith.constant 0 : index
    %c1_41 = arith.constant 1 : index
    %c0_42 = arith.constant 0 : index
    %c1_43 = arith.constant 1 : index
    %22 = vector.load %arg1[%c0_40, %c1_41, %c0_42, %c1_43] : memref<1x4x18x18xf32, #tpu.memory_space<vmem>>, vector<1x1x16x16xf32>
    %23 = vector.shape_cast %22 : vector<1x1x16x16xf32> to vector<16x16xf32>
    %c0_44 = arith.constant 0 : index
    %c1_45 = arith.constant 1 : index
    %c0_46 = arith.constant 0 : index
    %c2_47 = arith.constant 2 : index
    %24 = vector.load %arg1[%c0_44, %c1_45, %c0_46, %c2_47] : memref<1x4x18x18xf32, #tpu.memory_space<vmem>>, vector<1x1x16x16xf32>
    %25 = vector.shape_cast %24 : vector<1x1x16x16xf32> to vector<16x16xf32>
    %c0_48 = arith.constant 0 : index
    %c1_49 = arith.constant 1 : index
    %c1_50 = arith.constant 1 : index
    %c0_51 = arith.constant 0 : index
    %26 = vector.load %arg1[%c0_48, %c1_49, %c1_50, %c0_51] : memref<1x4x18x18xf32, #tpu.memory_space<vmem>>, vector<1x1x16x16xf32>
    %27 = vector.shape_cast %26 : vector<1x1x16x16xf32> to vector<16x16xf32>
    %c0_52 = arith.constant 0 : index
    %c1_53 = arith.constant 1 : index
    %c1_54 = arith.constant 1 : index
    %c1_55 = arith.constant 1 : index
    %28 = vector.load %arg1[%c0_52, %c1_53, %c1_54, %c1_55] : memref<1x4x18x18xf32, #tpu.memory_space<vmem>>, vector<1x1x16x16xf32>
    %29 = vector.shape_cast %28 : vector<1x1x16x16xf32> to vector<16x16xf32>
    %c0_56 = arith.constant 0 : index
    %c1_57 = arith.constant 1 : index
    %c1_58 = arith.constant 1 : index
    %c2_59 = arith.constant 2 : index
    %30 = vector.load %arg1[%c0_56, %c1_57, %c1_58, %c2_59] : memref<1x4x18x18xf32, #tpu.memory_space<vmem>>, vector<1x1x16x16xf32>
    %31 = vector.shape_cast %30 : vector<1x1x16x16xf32> to vector<16x16xf32>
    %c0_60 = arith.constant 0 : index
    %c1_61 = arith.constant 1 : index
    %c2_62 = arith.constant 2 : index
    %c0_63 = arith.constant 0 : index
    %32 = vector.load %arg1[%c0_60, %c1_61, %c2_62, %c0_63] : memref<1x4x18x18xf32, #tpu.memory_space<vmem>>, vector<1x1x16x16xf32>
    %33 = vector.shape_cast %32 : vector<1x1x16x16xf32> to vector<16x16xf32>
    %c0_64 = arith.constant 0 : index
    %c1_65 = arith.constant 1 : index
    %c2_66 = arith.constant 2 : index
    %c1_67 = arith.constant 1 : index
    %34 = vector.load %arg1[%c0_64, %c1_65, %c2_66, %c1_67] : memref<1x4x18x18xf32, #tpu.memory_space<vmem>>, vector<1x1x16x16xf32>
    %35 = vector.shape_cast %34 : vector<1x1x16x16xf32> to vector<16x16xf32>
    %c0_68 = arith.constant 0 : index
    %c1_69 = arith.constant 1 : index
    %c2_70 = arith.constant 2 : index
    %c2_71 = arith.constant 2 : index
    %36 = vector.load %arg1[%c0_68, %c1_69, %c2_70, %c2_71] : memref<1x4x18x18xf32, #tpu.memory_space<vmem>>, vector<1x1x16x16xf32>
    %37 = vector.shape_cast %36 : vector<1x1x16x16xf32> to vector<16x16xf32>
    %c0_72 = arith.constant 0 : index
    %c2_73 = arith.constant 2 : index
    %c0_74 = arith.constant 0 : index
    %c0_75 = arith.constant 0 : index
    %38 = vector.load %arg1[%c0_72, %c2_73, %c0_74, %c0_75] : memref<1x4x18x18xf32, #tpu.memory_space<vmem>>, vector<1x1x16x16xf32>
    %39 = vector.shape_cast %38 : vector<1x1x16x16xf32> to vector<16x16xf32>
    %c0_76 = arith.constant 0 : index
    %c2_77 = arith.constant 2 : index
    %c0_78 = arith.constant 0 : index
    %c1_79 = arith.constant 1 : index
    %40 = vector.load %arg1[%c0_76, %c2_77, %c0_78, %c1_79] : memref<1x4x18x18xf32, #tpu.memory_space<vmem>>, vector<1x1x16x16xf32>
    %41 = vector.shape_cast %40 : vector<1x1x16x16xf32> to vector<16x16xf32>
    %c0_80 = arith.constant 0 : index
    %c2_81 = arith.constant 2 : index
    %c0_82 = arith.constant 0 : index
    %c2_83 = arith.constant 2 : index
    %42 = vector.load %arg1[%c0_80, %c2_81, %c0_82, %c2_83] : memref<1x4x18x18xf32, #tpu.memory_space<vmem>>, vector<1x1x16x16xf32>
    %43 = vector.shape_cast %42 : vector<1x1x16x16xf32> to vector<16x16xf32>
    %c0_84 = arith.constant 0 : index
    %c2_85 = arith.constant 2 : index
    %c1_86 = arith.constant 1 : index
    %c0_87 = arith.constant 0 : index
    %44 = vector.load %arg1[%c0_84, %c2_85, %c1_86, %c0_87] : memref<1x4x18x18xf32, #tpu.memory_space<vmem>>, vector<1x1x16x16xf32>
    %45 = vector.shape_cast %44 : vector<1x1x16x16xf32> to vector<16x16xf32>
    %c0_88 = arith.constant 0 : index
    %c2_89 = arith.constant 2 : index
    %c1_90 = arith.constant 1 : index
    %c1_91 = arith.constant 1 : index
    %46 = vector.load %arg1[%c0_88, %c2_89, %c1_90, %c1_91] : memref<1x4x18x18xf32, #tpu.memory_space<vmem>>, vector<1x1x16x16xf32>
    %47 = vector.shape_cast %46 : vector<1x1x16x16xf32> to vector<16x16xf32>
    %c0_92 = arith.constant 0 : index
    %c2_93 = arith.constant 2 : index
    %c1_94 = arith.constant 1 : index
    %c2_95 = arith.constant 2 : index
    %48 = vector.load %arg1[%c0_92, %c2_93, %c1_94, %c2_95] : memref<1x4x18x18xf32, #tpu.memory_space<vmem>>, vector<1x1x16x16xf32>
    %49 = vector.shape_cast %48 : vector<1x1x16x16xf32> to vector<16x16xf32>
    %c0_96 = arith.constant 0 : index
    %c2_97 = arith.constant 2 : index
    %c2_98 = arith.constant 2 : index
    %c0_99 = arith.constant 0 : index
    %50 = vector.load %arg1[%c0_96, %c2_97, %c2_98, %c0_99] : memref<1x4x18x18xf32, #tpu.memory_space<vmem>>, vector<1x1x16x16xf32>
    %51 = vector.shape_cast %50 : vector<1x1x16x16xf32> to vector<16x16xf32>
    %c0_100 = arith.constant 0 : index
    %c2_101 = arith.constant 2 : index
    %c2_102 = arith.constant 2 : index
    %c1_103 = arith.constant 1 : index
    %52 = vector.load %arg1[%c0_100, %c2_101, %c2_102, %c1_103] : memref<1x4x18x18xf32, #tpu.memory_space<vmem>>, vector<1x1x16x16xf32>
    %53 = vector.shape_cast %52 : vector<1x1x16x16xf32> to vector<16x16xf32>
    %c0_104 = arith.constant 0 : index
    %c2_105 = arith.constant 2 : index
    %c2_106 = arith.constant 2 : index
    %c2_107 = arith.constant 2 : index
    %54 = vector.load %arg1[%c0_104, %c2_105, %c2_106, %c2_107] : memref<1x4x18x18xf32, #tpu.memory_space<vmem>>, vector<1x1x16x16xf32>
    %55 = vector.shape_cast %54 : vector<1x1x16x16xf32> to vector<16x16xf32>
    %c0_108 = arith.constant 0 : index
    %c3 = arith.constant 3 : index
    %c0_109 = arith.constant 0 : index
    %c0_110 = arith.constant 0 : index
    %56 = vector.load %arg1[%c0_108, %c3, %c0_109, %c0_110] : memref<1x4x18x18xf32, #tpu.memory_space<vmem>>, vector<1x1x16x16xf32>
    %57 = vector.shape_cast %56 : vector<1x1x16x16xf32> to vector<16x16xf32>
    %c0_111 = arith.constant 0 : index
    %c3_112 = arith.constant 3 : index
    %c0_113 = arith.constant 0 : index
    %c1_114 = arith.constant 1 : index
    %58 = vector.load %arg1[%c0_111, %c3_112, %c0_113, %c1_114] : memref<1x4x18x18xf32, #tpu.memory_space<vmem>>, vector<1x1x16x16xf32>
    %59 = vector.shape_cast %58 : vector<1x1x16x16xf32> to vector<16x16xf32>
    %c0_115 = arith.constant 0 : index
    %c3_116 = arith.constant 3 : index
    %c0_117 = arith.constant 0 : index
    %c2_118 = arith.constant 2 : index
    %60 = vector.load %arg1[%c0_115, %c3_116, %c0_117, %c2_118] : memref<1x4x18x18xf32, #tpu.memory_space<vmem>>, vector<1x1x16x16xf32>
    %61 = vector.shape_cast %60 : vector<1x1x16x16xf32> to vector<16x16xf32>
    %c0_119 = arith.constant 0 : index
    %c3_120 = arith.constant 3 : index
    %c1_121 = arith.constant 1 : index
    %c0_122 = arith.constant 0 : index
    %62 = vector.load %arg1[%c0_119, %c3_120, %c1_121, %c0_122] : memref<1x4x18x18xf32, #tpu.memory_space<vmem>>, vector<1x1x16x16xf32>
    %63 = vector.shape_cast %62 : vector<1x1x16x16xf32> to vector<16x16xf32>
    %c0_123 = arith.constant 0 : index
    %c3_124 = arith.constant 3 : index
    %c1_125 = arith.constant 1 : index
    %c1_126 = arith.constant 1 : index
    %64 = vector.load %arg1[%c0_123, %c3_124, %c1_125, %c1_126] : memref<1x4x18x18xf32, #tpu.memory_space<vmem>>, vector<1x1x16x16xf32>
    %65 = vector.shape_cast %64 : vector<1x1x16x16xf32> to vector<16x16xf32>
    %c0_127 = arith.constant 0 : index
    %c3_128 = arith.constant 3 : index
    %c1_129 = arith.constant 1 : index
    %c2_130 = arith.constant 2 : index
    %66 = vector.load %arg1[%c0_127, %c3_128, %c1_129, %c2_130] : memref<1x4x18x18xf32, #tpu.memory_space<vmem>>, vector<1x1x16x16xf32>
    %67 = vector.shape_cast %66 : vector<1x1x16x16xf32> to vector<16x16xf32>
    %c0_131 = arith.constant 0 : index
    %c3_132 = arith.constant 3 : index
    %c2_133 = arith.constant 2 : index
    %c0_134 = arith.constant 0 : index
    %68 = vector.load %arg1[%c0_131, %c3_132, %c2_133, %c0_134] : memref<1x4x18x18xf32, #tpu.memory_space<vmem>>, vector<1x1x16x16xf32>
    %69 = vector.shape_cast %68 : vector<1x1x16x16xf32> to vector<16x16xf32>
    %c0_135 = arith.constant 0 : index
    %c3_136 = arith.constant 3 : index
    %c2_137 = arith.constant 2 : index
    %c1_138 = arith.constant 1 : index
    %70 = vector.load %arg1[%c0_135, %c3_136, %c2_137, %c1_138] : memref<1x4x18x18xf32, #tpu.memory_space<vmem>>, vector<1x1x16x16xf32>
    %71 = vector.shape_cast %70 : vector<1x1x16x16xf32> to vector<16x16xf32>
    %c0_139 = arith.constant 0 : index
    %c3_140 = arith.constant 3 : index
    %c2_141 = arith.constant 2 : index
    %c2_142 = arith.constant 2 : index
    %72 = vector.load %arg1[%c0_139, %c3_140, %c2_141, %c2_142] : memref<1x4x18x18xf32, #tpu.memory_space<vmem>>, vector<1x1x16x16xf32>
    %73 = vector.shape_cast %72 : vector<1x1x16x16xf32> to vector<16x16xf32>
    %cst_143 = arith.constant 0.000000e+00 : f32
    %74 = vector.broadcast %cst_143 : f32 to vector<16x16xf32>
    %c0_144 = arith.constant 0 : index
    %75 = memref.load %arg2[%c0_144] : memref<144xf32, #tpu.memory_space<smem>>
    %76 = vector.broadcast %75 : f32 to vector<16x16xf32>
    %77 = arith.mulf %76, %3 : vector<16x16xf32>
    %78 = arith.addf %74, %77 : vector<16x16xf32>
    %c1_145 = arith.constant 1 : index
    %79 = memref.load %arg2[%c1_145] : memref<144xf32, #tpu.memory_space<smem>>
    %80 = vector.broadcast %79 : f32 to vector<16x16xf32>
    %81 = arith.mulf %80, %5 : vector<16x16xf32>
    %82 = arith.addf %78, %81 : vector<16x16xf32>
    %c2_146 = arith.constant 2 : index
    %83 = memref.load %arg2[%c2_146] : memref<144xf32, #tpu.memory_space<smem>>
    %84 = vector.broadcast %83 : f32 to vector<16x16xf32>
    %85 = arith.mulf %84, %7 : vector<16x16xf32>
    %86 = arith.addf %82, %85 : vector<16x16xf32>
    %c3_147 = arith.constant 3 : index
    %87 = memref.load %arg2[%c3_147] : memref<144xf32, #tpu.memory_space<smem>>
    %88 = vector.broadcast %87 : f32 to vector<16x16xf32>
    %89 = arith.mulf %88, %9 : vector<16x16xf32>
    %90 = arith.addf %86, %89 : vector<16x16xf32>
    %c4 = arith.constant 4 : index
    %91 = memref.load %arg2[%c4] : memref<144xf32, #tpu.memory_space<smem>>
    %92 = vector.broadcast %91 : f32 to vector<16x16xf32>
    %93 = arith.mulf %92, %11 : vector<16x16xf32>
    %94 = arith.addf %90, %93 : vector<16x16xf32>
    %c5 = arith.constant 5 : index
    %95 = memref.load %arg2[%c5] : memref<144xf32, #tpu.memory_space<smem>>
    %96 = vector.broadcast %95 : f32 to vector<16x16xf32>
    %97 = arith.mulf %96, %13 : vector<16x16xf32>
    %98 = arith.addf %94, %97 : vector<16x16xf32>
    %c6 = arith.constant 6 : index
    %99 = memref.load %arg2[%c6] : memref<144xf32, #tpu.memory_space<smem>>
    %100 = vector.broadcast %99 : f32 to vector<16x16xf32>
    %101 = arith.mulf %100, %15 : vector<16x16xf32>
    %102 = arith.addf %98, %101 : vector<16x16xf32>
    %c7 = arith.constant 7 : index
    %103 = memref.load %arg2[%c7] : memref<144xf32, #tpu.memory_space<smem>>
    %104 = vector.broadcast %103 : f32 to vector<16x16xf32>
    %105 = arith.mulf %104, %17 : vector<16x16xf32>
    %106 = arith.addf %102, %105 : vector<16x16xf32>
    %c8 = arith.constant 8 : index
    %107 = memref.load %arg2[%c8] : memref<144xf32, #tpu.memory_space<smem>>
    %108 = vector.broadcast %107 : f32 to vector<16x16xf32>
    %109 = arith.mulf %108, %19 : vector<16x16xf32>
    %110 = arith.addf %106, %109 : vector<16x16xf32>
    %c9 = arith.constant 9 : index
    %111 = memref.load %arg2[%c9] : memref<144xf32, #tpu.memory_space<smem>>
    %112 = vector.broadcast %111 : f32 to vector<16x16xf32>
    %113 = arith.mulf %112, %21 : vector<16x16xf32>
    %114 = arith.addf %110, %113 : vector<16x16xf32>
    %c10 = arith.constant 10 : index
    %115 = memref.load %arg2[%c10] : memref<144xf32, #tpu.memory_space<smem>>
    %116 = vector.broadcast %115 : f32 to vector<16x16xf32>
    %117 = arith.mulf %116, %23 : vector<16x16xf32>
    %118 = arith.addf %114, %117 : vector<16x16xf32>
    %c11 = arith.constant 11 : index
    %119 = memref.load %arg2[%c11] : memref<144xf32, #tpu.memory_space<smem>>
    %120 = vector.broadcast %119 : f32 to vector<16x16xf32>
    %121 = arith.mulf %120, %25 : vector<16x16xf32>
    %122 = arith.addf %118, %121 : vector<16x16xf32>
    %c12 = arith.constant 12 : index
    %123 = memref.load %arg2[%c12] : memref<144xf32, #tpu.memory_space<smem>>
    %124 = vector.broadcast %123 : f32 to vector<16x16xf32>
    %125 = arith.mulf %124, %27 : vector<16x16xf32>
    %126 = arith.addf %122, %125 : vector<16x16xf32>
    %c13 = arith.constant 13 : index
    %127 = memref.load %arg2[%c13] : memref<144xf32, #tpu.memory_space<smem>>
    %128 = vector.broadcast %127 : f32 to vector<16x16xf32>
    %129 = arith.mulf %128, %29 : vector<16x16xf32>
    %130 = arith.addf %126, %129 : vector<16x16xf32>
    %c14 = arith.constant 14 : index
    %131 = memref.load %arg2[%c14] : memref<144xf32, #tpu.memory_space<smem>>
    %132 = vector.broadcast %131 : f32 to vector<16x16xf32>
    %133 = arith.mulf %132, %31 : vector<16x16xf32>
    %134 = arith.addf %130, %133 : vector<16x16xf32>
    %c15 = arith.constant 15 : index
    %135 = memref.load %arg2[%c15] : memref<144xf32, #tpu.memory_space<smem>>
    %136 = vector.broadcast %135 : f32 to vector<16x16xf32>
    %137 = arith.mulf %136, %33 : vector<16x16xf32>
    %138 = arith.addf %134, %137 : vector<16x16xf32>
    %c16 = arith.constant 16 : index
    %139 = memref.load %arg2[%c16] : memref<144xf32, #tpu.memory_space<smem>>
    %140 = vector.broadcast %139 : f32 to vector<16x16xf32>
    %141 = arith.mulf %140, %35 : vector<16x16xf32>
    %142 = arith.addf %138, %141 : vector<16x16xf32>
    %c17 = arith.constant 17 : index
    %143 = memref.load %arg2[%c17] : memref<144xf32, #tpu.memory_space<smem>>
    %144 = vector.broadcast %143 : f32 to vector<16x16xf32>
    %145 = arith.mulf %144, %37 : vector<16x16xf32>
    %146 = arith.addf %142, %145 : vector<16x16xf32>
    %c18 = arith.constant 18 : index
    %147 = memref.load %arg2[%c18] : memref<144xf32, #tpu.memory_space<smem>>
    %148 = vector.broadcast %147 : f32 to vector<16x16xf32>
    %149 = arith.mulf %148, %39 : vector<16x16xf32>
    %150 = arith.addf %146, %149 : vector<16x16xf32>
    %c19 = arith.constant 19 : index
    %151 = memref.load %arg2[%c19] : memref<144xf32, #tpu.memory_space<smem>>
    %152 = vector.broadcast %151 : f32 to vector<16x16xf32>
    %153 = arith.mulf %152, %41 : vector<16x16xf32>
    %154 = arith.addf %150, %153 : vector<16x16xf32>
    %c20 = arith.constant 20 : index
    %155 = memref.load %arg2[%c20] : memref<144xf32, #tpu.memory_space<smem>>
    %156 = vector.broadcast %155 : f32 to vector<16x16xf32>
    %157 = arith.mulf %156, %43 : vector<16x16xf32>
    %158 = arith.addf %154, %157 : vector<16x16xf32>
    %c21 = arith.constant 21 : index
    %159 = memref.load %arg2[%c21] : memref<144xf32, #tpu.memory_space<smem>>
    %160 = vector.broadcast %159 : f32 to vector<16x16xf32>
    %161 = arith.mulf %160, %45 : vector<16x16xf32>
    %162 = arith.addf %158, %161 : vector<16x16xf32>
    %c22 = arith.constant 22 : index
    %163 = memref.load %arg2[%c22] : memref<144xf32, #tpu.memory_space<smem>>
    %164 = vector.broadcast %163 : f32 to vector<16x16xf32>
    %165 = arith.mulf %164, %47 : vector<16x16xf32>
    %166 = arith.addf %162, %165 : vector<16x16xf32>
    %c23 = arith.constant 23 : index
    %167 = memref.load %arg2[%c23] : memref<144xf32, #tpu.memory_space<smem>>
    %168 = vector.broadcast %167 : f32 to vector<16x16xf32>
    %169 = arith.mulf %168, %49 : vector<16x16xf32>
    %170 = arith.addf %166, %169 : vector<16x16xf32>
    %c24 = arith.constant 24 : index
    %171 = memref.load %arg2[%c24] : memref<144xf32, #tpu.memory_space<smem>>
    %172 = vector.broadcast %171 : f32 to vector<16x16xf32>
    %173 = arith.mulf %172, %51 : vector<16x16xf32>
    %174 = arith.addf %170, %173 : vector<16x16xf32>
    %c25 = arith.constant 25 : index
    %175 = memref.load %arg2[%c25] : memref<144xf32, #tpu.memory_space<smem>>
    %176 = vector.broadcast %175 : f32 to vector<16x16xf32>
    %177 = arith.mulf %176, %53 : vector<16x16xf32>
    %178 = arith.addf %174, %177 : vector<16x16xf32>
    %c26 = arith.constant 26 : index
    %179 = memref.load %arg2[%c26] : memref<144xf32, #tpu.memory_space<smem>>
    %180 = vector.broadcast %179 : f32 to vector<16x16xf32>
    %181 = arith.mulf %180, %55 : vector<16x16xf32>
    %182 = arith.addf %178, %181 : vector<16x16xf32>
    %c27 = arith.constant 27 : index
    %183 = memref.load %arg2[%c27] : memref<144xf32, #tpu.memory_space<smem>>
    %184 = vector.broadcast %183 : f32 to vector<16x16xf32>
    %185 = arith.mulf %184, %57 : vector<16x16xf32>
    %186 = arith.addf %182, %185 : vector<16x16xf32>
    %c28 = arith.constant 28 : index
    %187 = memref.load %arg2[%c28] : memref<144xf32, #tpu.memory_space<smem>>
    %188 = vector.broadcast %187 : f32 to vector<16x16xf32>
    %189 = arith.mulf %188, %59 : vector<16x16xf32>
    %190 = arith.addf %186, %189 : vector<16x16xf32>
    %c29 = arith.constant 29 : index
    %191 = memref.load %arg2[%c29] : memref<144xf32, #tpu.memory_space<smem>>
    %192 = vector.broadcast %191 : f32 to vector<16x16xf32>
    %193 = arith.mulf %192, %61 : vector<16x16xf32>
    %194 = arith.addf %190, %193 : vector<16x16xf32>
    %c30 = arith.constant 30 : index
    %195 = memref.load %arg2[%c30] : memref<144xf32, #tpu.memory_space<smem>>
    %196 = vector.broadcast %195 : f32 to vector<16x16xf32>
    %197 = arith.mulf %196, %63 : vector<16x16xf32>
    %198 = arith.addf %194, %197 : vector<16x16xf32>
    %c31 = arith.constant 31 : index
    %199 = memref.load %arg2[%c31] : memref<144xf32, #tpu.memory_space<smem>>
    %200 = vector.broadcast %199 : f32 to vector<16x16xf32>
    %201 = arith.mulf %200, %65 : vector<16x16xf32>
    %202 = arith.addf %198, %201 : vector<16x16xf32>
    %c32 = arith.constant 32 : index
    %203 = memref.load %arg2[%c32] : memref<144xf32, #tpu.memory_space<smem>>
    %204 = vector.broadcast %203 : f32 to vector<16x16xf32>
    %205 = arith.mulf %204, %67 : vector<16x16xf32>
    %206 = arith.addf %202, %205 : vector<16x16xf32>
    %c33 = arith.constant 33 : index
    %207 = memref.load %arg2[%c33] : memref<144xf32, #tpu.memory_space<smem>>
    %208 = vector.broadcast %207 : f32 to vector<16x16xf32>
    %209 = arith.mulf %208, %69 : vector<16x16xf32>
    %210 = arith.addf %206, %209 : vector<16x16xf32>
    %c34 = arith.constant 34 : index
    %211 = memref.load %arg2[%c34] : memref<144xf32, #tpu.memory_space<smem>>
    %212 = vector.broadcast %211 : f32 to vector<16x16xf32>
    %213 = arith.mulf %212, %71 : vector<16x16xf32>
    %214 = arith.addf %210, %213 : vector<16x16xf32>
    %c35 = arith.constant 35 : index
    %215 = memref.load %arg2[%c35] : memref<144xf32, #tpu.memory_space<smem>>
    %216 = vector.broadcast %215 : f32 to vector<16x16xf32>
    %217 = arith.mulf %216, %73 : vector<16x16xf32>
    %218 = arith.addf %214, %217 : vector<16x16xf32>
    %c0_148 = arith.constant 0 : index
    %219 = memref.load %arg3[%c0_148] : memref<4xf32, #tpu.memory_space<smem>>
    %220 = vector.broadcast %219 : f32 to vector<16x16xf32>
    %221 = arith.mulf %218, %220 : vector<16x16xf32>
    %c0_149 = arith.constant 0 : index
    %222 = memref.load %arg4[%c0_149] : memref<4xf32, #tpu.memory_space<smem>>
    %223 = vector.broadcast %222 : f32 to vector<16x16xf32>
    %224 = arith.addf %221, %223 : vector<16x16xf32>
    %cst_150 = arith.constant 0.000000e+00 : f32
    %225 = vector.broadcast %cst_150 : f32 to vector<16x16xf32>
    %226 = arith.maximumf %224, %225 : vector<16x16xf32>
    %c0_151 = arith.constant 0 : index
    %c1_152 = arith.constant 1 : index
    %c1_153 = arith.constant 1 : index
    %227 = vector.load %arg9[%c0_151, %c1_152, %c1_153] : memref<4x18x18xf32, #tpu.memory_space<vmem>>, vector<1x16x16xf32>
    %228 = vector.shape_cast %227 : vector<1x16x16xf32> to vector<16x16xf32>
    %229 = vector.shape_cast %226 : vector<16x16xf32> to vector<1x16x16xf32>
    tpu.vector_store %arg9[%c0_151, %c1_152, %c1_153], %229 {strides = array<i32>} : memref<4x18x18xf32, #tpu.memory_space<vmem>>, vector<1x16x16xf32>,
    %cst_154 = arith.constant 0.000000e+00 : f32
    %230 = vector.broadcast %cst_154 : f32 to vector<16x16xf32>
    %c36 = arith.constant 36 : index
    %231 = memref.load %arg2[%c36] : memref<144xf32, #tpu.memory_space<smem>>
    %232 = vector.broadcast %231 : f32 to vector<16x16xf32>
    %233 = arith.mulf %232, %3 : vector<16x16xf32>
    %234 = arith.addf %230, %233 : vector<16x16xf32>
    %c37 = arith.constant 37 : index
    %235 = memref.load %arg2[%c37] : memref<144xf32, #tpu.memory_space<smem>>
    %236 = vector.broadcast %235 : f32 to vector<16x16xf32>
    %237 = arith.mulf %236, %5 : vector<16x16xf32>
    %238 = arith.addf %234, %237 : vector<16x16xf32>
    %c38 = arith.constant 38 : index
    %239 = memref.load %arg2[%c38] : memref<144xf32, #tpu.memory_space<smem>>
    %240 = vector.broadcast %239 : f32 to vector<16x16xf32>
    %241 = arith.mulf %240, %7 : vector<16x16xf32>
    %242 = arith.addf %238, %241 : vector<16x16xf32>
    %c39 = arith.constant 39 : index
    %243 = memref.load %arg2[%c39] : memref<144xf32, #tpu.memory_space<smem>>
    %244 = vector.broadcast %243 : f32 to vector<16x16xf32>
    %245 = arith.mulf %244, %9 : vector<16x16xf32>
    %246 = arith.addf %242, %245 : vector<16x16xf32>
    %c40 = arith.constant 40 : index
    %247 = memref.load %arg2[%c40] : memref<144xf32, #tpu.memory_space<smem>>
    %248 = vector.broadcast %247 : f32 to vector<16x16xf32>
    %249 = arith.mulf %248, %11 : vector<16x16xf32>
    %250 = arith.addf %246, %249 : vector<16x16xf32>
    %c41 = arith.constant 41 : index
    %251 = memref.load %arg2[%c41] : memref<144xf32, #tpu.memory_space<smem>>
    %252 = vector.broadcast %251 : f32 to vector<16x16xf32>
    %253 = arith.mulf %252, %13 : vector<16x16xf32>
    %254 = arith.addf %250, %253 : vector<16x16xf32>
    %c42 = arith.constant 42 : index
    %255 = memref.load %arg2[%c42] : memref<144xf32, #tpu.memory_space<smem>>
    %256 = vector.broadcast %255 : f32 to vector<16x16xf32>
    %257 = arith.mulf %256, %15 : vector<16x16xf32>
    %258 = arith.addf %254, %257 : vector<16x16xf32>
    %c43 = arith.constant 43 : index
    %259 = memref.load %arg2[%c43] : memref<144xf32, #tpu.memory_space<smem>>
    %260 = vector.broadcast %259 : f32 to vector<16x16xf32>
    %261 = arith.mulf %260, %17 : vector<16x16xf32>
    %262 = arith.addf %258, %261 : vector<16x16xf32>
    %c44 = arith.constant 44 : index
    %263 = memref.load %arg2[%c44] : memref<144xf32, #tpu.memory_space<smem>>
    %264 = vector.broadcast %263 : f32 to vector<16x16xf32>
    %265 = arith.mulf %264, %19 : vector<16x16xf32>
    %266 = arith.addf %262, %265 : vector<16x16xf32>
    %c45 = arith.constant 45 : index
    %267 = memref.load %arg2[%c45] : memref<144xf32, #tpu.memory_space<smem>>
    %268 = vector.broadcast %267 : f32 to vector<16x16xf32>
    %269 = arith.mulf %268, %21 : vector<16x16xf32>
    %270 = arith.addf %266, %269 : vector<16x16xf32>
    %c46 = arith.constant 46 : index
    %271 = memref.load %arg2[%c46] : memref<144xf32, #tpu.memory_space<smem>>
    %272 = vector.broadcast %271 : f32 to vector<16x16xf32>
    %273 = arith.mulf %272, %23 : vector<16x16xf32>
    %274 = arith.addf %270, %273 : vector<16x16xf32>
    %c47 = arith.constant 47 : index
    %275 = memref.load %arg2[%c47] : memref<144xf32, #tpu.memory_space<smem>>
    %276 = vector.broadcast %275 : f32 to vector<16x16xf32>
    %277 = arith.mulf %276, %25 : vector<16x16xf32>
    %278 = arith.addf %274, %277 : vector<16x16xf32>
    %c48 = arith.constant 48 : index
    %279 = memref.load %arg2[%c48] : memref<144xf32, #tpu.memory_space<smem>>
    %280 = vector.broadcast %279 : f32 to vector<16x16xf32>
    %281 = arith.mulf %280, %27 : vector<16x16xf32>
    %282 = arith.addf %278, %281 : vector<16x16xf32>
    %c49 = arith.constant 49 : index
    %283 = memref.load %arg2[%c49] : memref<144xf32, #tpu.memory_space<smem>>
    %284 = vector.broadcast %283 : f32 to vector<16x16xf32>
    %285 = arith.mulf %284, %29 : vector<16x16xf32>
    %286 = arith.addf %282, %285 : vector<16x16xf32>
    %c50 = arith.constant 50 : index
    %287 = memref.load %arg2[%c50] : memref<144xf32, #tpu.memory_space<smem>>
    %288 = vector.broadcast %287 : f32 to vector<16x16xf32>
    %289 = arith.mulf %288, %31 : vector<16x16xf32>
    %290 = arith.addf %286, %289 : vector<16x16xf32>
    %c51 = arith.constant 51 : index
    %291 = memref.load %arg2[%c51] : memref<144xf32, #tpu.memory_space<smem>>
    %292 = vector.broadcast %291 : f32 to vector<16x16xf32>
    %293 = arith.mulf %292, %33 : vector<16x16xf32>
    %294 = arith.addf %290, %293 : vector<16x16xf32>
    %c52 = arith.constant 52 : index
    %295 = memref.load %arg2[%c52] : memref<144xf32, #tpu.memory_space<smem>>
    %296 = vector.broadcast %295 : f32 to vector<16x16xf32>
    %297 = arith.mulf %296, %35 : vector<16x16xf32>
    %298 = arith.addf %294, %297 : vector<16x16xf32>
    %c53 = arith.constant 53 : index
    %299 = memref.load %arg2[%c53] : memref<144xf32, #tpu.memory_space<smem>>
    %300 = vector.broadcast %299 : f32 to vector<16x16xf32>
    %301 = arith.mulf %300, %37 : vector<16x16xf32>
    %302 = arith.addf %298, %301 : vector<16x16xf32>
    %c54 = arith.constant 54 : index
    %303 = memref.load %arg2[%c54] : memref<144xf32, #tpu.memory_space<smem>>
    %304 = vector.broadcast %303 : f32 to vector<16x16xf32>
    %305 = arith.mulf %304, %39 : vector<16x16xf32>
    %306 = arith.addf %302, %305 : vector<16x16xf32>
    %c55 = arith.constant 55 : index
    %307 = memref.load %arg2[%c55] : memref<144xf32, #tpu.memory_space<smem>>
    %308 = vector.broadcast %307 : f32 to vector<16x16xf32>
    %309 = arith.mulf %308, %41 : vector<16x16xf32>
    %310 = arith.addf %306, %309 : vector<16x16xf32>
    %c56 = arith.constant 56 : index
    %311 = memref.load %arg2[%c56] : memref<144xf32, #tpu.memory_space<smem>>
    %312 = vector.broadcast %311 : f32 to vector<16x16xf32>
    %313 = arith.mulf %312, %43 : vector<16x16xf32>
    %314 = arith.addf %310, %313 : vector<16x16xf32>
    %c57 = arith.constant 57 : index
    %315 = memref.load %arg2[%c57] : memref<144xf32, #tpu.memory_space<smem>>
    %316 = vector.broadcast %315 : f32 to vector<16x16xf32>
    %317 = arith.mulf %316, %45 : vector<16x16xf32>
    %318 = arith.addf %314, %317 : vector<16x16xf32>
    %c58 = arith.constant 58 : index
    %319 = memref.load %arg2[%c58] : memref<144xf32, #tpu.memory_space<smem>>
    %320 = vector.broadcast %319 : f32 to vector<16x16xf32>
    %321 = arith.mulf %320, %47 : vector<16x16xf32>
    %322 = arith.addf %318, %321 : vector<16x16xf32>
    %c59 = arith.constant 59 : index
    %323 = memref.load %arg2[%c59] : memref<144xf32, #tpu.memory_space<smem>>
    %324 = vector.broadcast %323 : f32 to vector<16x16xf32>
    %325 = arith.mulf %324, %49 : vector<16x16xf32>
    %326 = arith.addf %322, %325 : vector<16x16xf32>
    %c60 = arith.constant 60 : index
    %327 = memref.load %arg2[%c60] : memref<144xf32, #tpu.memory_space<smem>>
    %328 = vector.broadcast %327 : f32 to vector<16x16xf32>
    %329 = arith.mulf %328, %51 : vector<16x16xf32>
    %330 = arith.addf %326, %329 : vector<16x16xf32>
    %c61 = arith.constant 61 : index
    %331 = memref.load %arg2[%c61] : memref<144xf32, #tpu.memory_space<smem>>
    %332 = vector.broadcast %331 : f32 to vector<16x16xf32>
    %333 = arith.mulf %332, %53 : vector<16x16xf32>
    %334 = arith.addf %330, %333 : vector<16x16xf32>
    %c62 = arith.constant 62 : index
    %335 = memref.load %arg2[%c62] : memref<144xf32, #tpu.memory_space<smem>>
    %336 = vector.broadcast %335 : f32 to vector<16x16xf32>
    %337 = arith.mulf %336, %55 : vector<16x16xf32>
    %338 = arith.addf %334, %337 : vector<16x16xf32>
    %c63 = arith.constant 63 : index
    %339 = memref.load %arg2[%c63] : memref<144xf32, #tpu.memory_space<smem>>
    %340 = vector.broadcast %339 : f32 to vector<16x16xf32>
    %341 = arith.mulf %340, %57 : vector<16x16xf32>
    %342 = arith.addf %338, %341 : vector<16x16xf32>
    %c64 = arith.constant 64 : index
    %343 = memref.load %arg2[%c64] : memref<144xf32, #tpu.memory_space<smem>>
    %344 = vector.broadcast %343 : f32 to vector<16x16xf32>
    %345 = arith.mulf %344, %59 : vector<16x16xf32>
    %346 = arith.addf %342, %345 : vector<16x16xf32>
    %c65 = arith.constant 65 : index
    %347 = memref.load %arg2[%c65] : memref<144xf32, #tpu.memory_space<smem>>
    %348 = vector.broadcast %347 : f32 to vector<16x16xf32>
    %349 = arith.mulf %348, %61 : vector<16x16xf32>
    %350 = arith.addf %346, %349 : vector<16x16xf32>
    %c66 = arith.constant 66 : index
    %351 = memref.load %arg2[%c66] : memref<144xf32, #tpu.memory_space<smem>>
    %352 = vector.broadcast %351 : f32 to vector<16x16xf32>
    %353 = arith.mulf %352, %63 : vector<16x16xf32>
    %354 = arith.addf %350, %353 : vector<16x16xf32>
    %c67 = arith.constant 67 : index
    %355 = memref.load %arg2[%c67] : memref<144xf32, #tpu.memory_space<smem>>
    %356 = vector.broadcast %355 : f32 to vector<16x16xf32>
    %357 = arith.mulf %356, %65 : vector<16x16xf32>
    %358 = arith.addf %354, %357 : vector<16x16xf32>
    %c68 = arith.constant 68 : index
    %359 = memref.load %arg2[%c68] : memref<144xf32, #tpu.memory_space<smem>>
    %360 = vector.broadcast %359 : f32 to vector<16x16xf32>
    %361 = arith.mulf %360, %67 : vector<16x16xf32>
    %362 = arith.addf %358, %361 : vector<16x16xf32>
    %c69 = arith.constant 69 : index
    %363 = memref.load %arg2[%c69] : memref<144xf32, #tpu.memory_space<smem>>
    %364 = vector.broadcast %363 : f32 to vector<16x16xf32>
    %365 = arith.mulf %364, %69 : vector<16x16xf32>
    %366 = arith.addf %362, %365 : vector<16x16xf32>
    %c70 = arith.constant 70 : index
    %367 = memref.load %arg2[%c70] : memref<144xf32, #tpu.memory_space<smem>>
    %368 = vector.broadcast %367 : f32 to vector<16x16xf32>
    %369 = arith.mulf %368, %71 : vector<16x16xf32>
    %370 = arith.addf %366, %369 : vector<16x16xf32>
    %c71 = arith.constant 71 : index
    %371 = memref.load %arg2[%c71] : memref<144xf32, #tpu.memory_space<smem>>
    %372 = vector.broadcast %371 : f32 to vector<16x16xf32>
    %373 = arith.mulf %372, %73 : vector<16x16xf32>
    %374 = arith.addf %370, %373 : vector<16x16xf32>
    %c1_155 = arith.constant 1 : index
    %375 = memref.load %arg3[%c1_155] : memref<4xf32, #tpu.memory_space<smem>>
    %376 = vector.broadcast %375 : f32 to vector<16x16xf32>
    %377 = arith.mulf %374, %376 : vector<16x16xf32>
    %c1_156 = arith.constant 1 : index
    %378 = memref.load %arg4[%c1_156] : memref<4xf32, #tpu.memory_space<smem>>
    %379 = vector.broadcast %378 : f32 to vector<16x16xf32>
    %380 = arith.addf %377, %379 : vector<16x16xf32>
    %cst_157 = arith.constant 0.000000e+00 : f32
    %381 = vector.broadcast %cst_157 : f32 to vector<16x16xf32>
    %382 = arith.maximumf %380, %381 : vector<16x16xf32>
    %c1_158 = arith.constant 1 : index
    %c1_159 = arith.constant 1 : index
    %c1_160 = arith.constant 1 : index
    %383 = vector.load %arg9[%c1_158, %c1_159, %c1_160] : memref<4x18x18xf32, #tpu.memory_space<vmem>>, vector<1x16x16xf32>
    %384 = vector.shape_cast %383 : vector<1x16x16xf32> to vector<16x16xf32>
    %385 = vector.shape_cast %382 : vector<16x16xf32> to vector<1x16x16xf32>
    tpu.vector_store %arg9[%c1_158, %c1_159, %c1_160], %385 {strides = array<i32>} : memref<4x18x18xf32, #tpu.memory_space<vmem>>, vector<1x16x16xf32>,
    %cst_161 = arith.constant 0.000000e+00 : f32
    %386 = vector.broadcast %cst_161 : f32 to vector<16x16xf32>
    %c72 = arith.constant 72 : index
    %387 = memref.load %arg2[%c72] : memref<144xf32, #tpu.memory_space<smem>>
    %388 = vector.broadcast %387 : f32 to vector<16x16xf32>
    %389 = arith.mulf %388, %3 : vector<16x16xf32>
    %390 = arith.addf %386, %389 : vector<16x16xf32>
    %c73 = arith.constant 73 : index
    %391 = memref.load %arg2[%c73] : memref<144xf32, #tpu.memory_space<smem>>
    %392 = vector.broadcast %391 : f32 to vector<16x16xf32>
    %393 = arith.mulf %392, %5 : vector<16x16xf32>
    %394 = arith.addf %390, %393 : vector<16x16xf32>
    %c74 = arith.constant 74 : index
    %395 = memref.load %arg2[%c74] : memref<144xf32, #tpu.memory_space<smem>>
    %396 = vector.broadcast %395 : f32 to vector<16x16xf32>
    %397 = arith.mulf %396, %7 : vector<16x16xf32>
    %398 = arith.addf %394, %397 : vector<16x16xf32>
    %c75 = arith.constant 75 : index
    %399 = memref.load %arg2[%c75] : memref<144xf32, #tpu.memory_space<smem>>
    %400 = vector.broadcast %399 : f32 to vector<16x16xf32>
    %401 = arith.mulf %400, %9 : vector<16x16xf32>
    %402 = arith.addf %398, %401 : vector<16x16xf32>
    %c76 = arith.constant 76 : index
    %403 = memref.load %arg2[%c76] : memref<144xf32, #tpu.memory_space<smem>>
    %404 = vector.broadcast %403 : f32 to vector<16x16xf32>
    %405 = arith.mulf %404, %11 : vector<16x16xf32>
    %406 = arith.addf %402, %405 : vector<16x16xf32>
    %c77 = arith.constant 77 : index
    %407 = memref.load %arg2[%c77] : memref<144xf32, #tpu.memory_space<smem>>
    %408 = vector.broadcast %407 : f32 to vector<16x16xf32>
    %409 = arith.mulf %408, %13 : vector<16x16xf32>
    %410 = arith.addf %406, %409 : vector<16x16xf32>
    %c78 = arith.constant 78 : index
    %411 = memref.load %arg2[%c78] : memref<144xf32, #tpu.memory_space<smem>>
    %412 = vector.broadcast %411 : f32 to vector<16x16xf32>
    %413 = arith.mulf %412, %15 : vector<16x16xf32>
    %414 = arith.addf %410, %413 : vector<16x16xf32>
    %c79 = arith.constant 79 : index
    %415 = memref.load %arg2[%c79] : memref<144xf32, #tpu.memory_space<smem>>
    %416 = vector.broadcast %415 : f32 to vector<16x16xf32>
    %417 = arith.mulf %416, %17 : vector<16x16xf32>
    %418 = arith.addf %414, %417 : vector<16x16xf32>
    %c80 = arith.constant 80 : index
    %419 = memref.load %arg2[%c80] : memref<144xf32, #tpu.memory_space<smem>>
    %420 = vector.broadcast %419 : f32 to vector<16x16xf32>
    %421 = arith.mulf %420, %19 : vector<16x16xf32>
    %422 = arith.addf %418, %421 : vector<16x16xf32>
    %c81 = arith.constant 81 : index
    %423 = memref.load %arg2[%c81] : memref<144xf32, #tpu.memory_space<smem>>
    %424 = vector.broadcast %423 : f32 to vector<16x16xf32>
    %425 = arith.mulf %424, %21 : vector<16x16xf32>
    %426 = arith.addf %422, %425 : vector<16x16xf32>
    %c82 = arith.constant 82 : index
    %427 = memref.load %arg2[%c82] : memref<144xf32, #tpu.memory_space<smem>>
    %428 = vector.broadcast %427 : f32 to vector<16x16xf32>
    %429 = arith.mulf %428, %23 : vector<16x16xf32>
    %430 = arith.addf %426, %429 : vector<16x16xf32>
    %c83 = arith.constant 83 : index
    %431 = memref.load %arg2[%c83] : memref<144xf32, #tpu.memory_space<smem>>
    %432 = vector.broadcast %431 : f32 to vector<16x16xf32>
    %433 = arith.mulf %432, %25 : vector<16x16xf32>
    %434 = arith.addf %430, %433 : vector<16x16xf32>
    %c84 = arith.constant 84 : index
    %435 = memref.load %arg2[%c84] : memref<144xf32, #tpu.memory_space<smem>>
    %436 = vector.broadcast %435 : f32 to vector<16x16xf32>
    %437 = arith.mulf %436, %27 : vector<16x16xf32>
    %438 = arith.addf %434, %437 : vector<16x16xf32>
    %c85 = arith.constant 85 : index
    %439 = memref.load %arg2[%c85] : memref<144xf32, #tpu.memory_space<smem>>
    %440 = vector.broadcast %439 : f32 to vector<16x16xf32>
    %441 = arith.mulf %440, %29 : vector<16x16xf32>
    %442 = arith.addf %438, %441 : vector<16x16xf32>
    %c86 = arith.constant 86 : index
    %443 = memref.load %arg2[%c86] : memref<144xf32, #tpu.memory_space<smem>>
    %444 = vector.broadcast %443 : f32 to vector<16x16xf32>
    %445 = arith.mulf %444, %31 : vector<16x16xf32>
    %446 = arith.addf %442, %445 : vector<16x16xf32>
    %c87 = arith.constant 87 : index
    %447 = memref.load %arg2[%c87] : memref<144xf32, #tpu.memory_space<smem>>
    %448 = vector.broadcast %447 : f32 to vector<16x16xf32>
    %449 = arith.mulf %448, %33 : vector<16x16xf32>
    %450 = arith.addf %446, %449 : vector<16x16xf32>
    %c88 = arith.constant 88 : index
    %451 = memref.load %arg2[%c88] : memref<144xf32, #tpu.memory_space<smem>>
    %452 = vector.broadcast %451 : f32 to vector<16x16xf32>
    %453 = arith.mulf %452, %35 : vector<16x16xf32>
    %454 = arith.addf %450, %453 : vector<16x16xf32>
    %c89 = arith.constant 89 : index
    %455 = memref.load %arg2[%c89] : memref<144xf32, #tpu.memory_space<smem>>
    %456 = vector.broadcast %455 : f32 to vector<16x16xf32>
    %457 = arith.mulf %456, %37 : vector<16x16xf32>
    %458 = arith.addf %454, %457 : vector<16x16xf32>
    %c90 = arith.constant 90 : index
    %459 = memref.load %arg2[%c90] : memref<144xf32, #tpu.memory_space<smem>>
    %460 = vector.broadcast %459 : f32 to vector<16x16xf32>
    %461 = arith.mulf %460, %39 : vector<16x16xf32>
    %462 = arith.addf %458, %461 : vector<16x16xf32>
    %c91 = arith.constant 91 : index
    %463 = memref.load %arg2[%c91] : memref<144xf32, #tpu.memory_space<smem>>
    %464 = vector.broadcast %463 : f32 to vector<16x16xf32>
    %465 = arith.mulf %464, %41 : vector<16x16xf32>
    %466 = arith.addf %462, %465 : vector<16x16xf32>
    %c92 = arith.constant 92 : index
    %467 = memref.load %arg2[%c92] : memref<144xf32, #tpu.memory_space<smem>>
    %468 = vector.broadcast %467 : f32 to vector<16x16xf32>
    %469 = arith.mulf %468, %43 : vector<16x16xf32>
    %470 = arith.addf %466, %469 : vector<16x16xf32>
    %c93 = arith.constant 93 : index
    %471 = memref.load %arg2[%c93] : memref<144xf32, #tpu.memory_space<smem>>
    %472 = vector.broadcast %471 : f32 to vector<16x16xf32>
    %473 = arith.mulf %472, %45 : vector<16x16xf32>
    %474 = arith.addf %470, %473 : vector<16x16xf32>
    %c94 = arith.constant 94 : index
    %475 = memref.load %arg2[%c94] : memref<144xf32, #tpu.memory_space<smem>>
    %476 = vector.broadcast %475 : f32 to vector<16x16xf32>
    %477 = arith.mulf %476, %47 : vector<16x16xf32>
    %478 = arith.addf %474, %477 : vector<16x16xf32>
    %c95 = arith.constant 95 : index
    %479 = memref.load %arg2[%c95] : memref<144xf32, #tpu.memory_space<smem>>
    %480 = vector.broadcast %479 : f32 to vector<16x16xf32>
    %481 = arith.mulf %480, %49 : vector<16x16xf32>
    %482 = arith.addf %478, %481 : vector<16x16xf32>
    %c96 = arith.constant 96 : index
    %483 = memref.load %arg2[%c96] : memref<144xf32, #tpu.memory_space<smem>>
    %484 = vector.broadcast %483 : f32 to vector<16x16xf32>
    %485 = arith.mulf %484, %51 : vector<16x16xf32>
    %486 = arith.addf %482, %485 : vector<16x16xf32>
    %c97 = arith.constant 97 : index
    %487 = memref.load %arg2[%c97] : memref<144xf32, #tpu.memory_space<smem>>
    %488 = vector.broadcast %487 : f32 to vector<16x16xf32>
    %489 = arith.mulf %488, %53 : vector<16x16xf32>
    %490 = arith.addf %486, %489 : vector<16x16xf32>
    %c98 = arith.constant 98 : index
    %491 = memref.load %arg2[%c98] : memref<144xf32, #tpu.memory_space<smem>>
    %492 = vector.broadcast %491 : f32 to vector<16x16xf32>
    %493 = arith.mulf %492, %55 : vector<16x16xf32>
    %494 = arith.addf %490, %493 : vector<16x16xf32>
    %c99 = arith.constant 99 : index
    %495 = memref.load %arg2[%c99] : memref<144xf32, #tpu.memory_space<smem>>
    %496 = vector.broadcast %495 : f32 to vector<16x16xf32>
    %497 = arith.mulf %496, %57 : vector<16x16xf32>
    %498 = arith.addf %494, %497 : vector<16x16xf32>
    %c100 = arith.constant 100 : index
    %499 = memref.load %arg2[%c100] : memref<144xf32, #tpu.memory_space<smem>>
    %500 = vector.broadcast %499 : f32 to vector<16x16xf32>
    %501 = arith.mulf %500, %59 : vector<16x16xf32>
    %502 = arith.addf %498, %501 : vector<16x16xf32>
    %c101 = arith.constant 101 : index
    %503 = memref.load %arg2[%c101] : memref<144xf32, #tpu.memory_space<smem>>
    %504 = vector.broadcast %503 : f32 to vector<16x16xf32>
    %505 = arith.mulf %504, %61 : vector<16x16xf32>
    %506 = arith.addf %502, %505 : vector<16x16xf32>
    %c102 = arith.constant 102 : index
    %507 = memref.load %arg2[%c102] : memref<144xf32, #tpu.memory_space<smem>>
    %508 = vector.broadcast %507 : f32 to vector<16x16xf32>
    %509 = arith.mulf %508, %63 : vector<16x16xf32>
    %510 = arith.addf %506, %509 : vector<16x16xf32>
    %c103 = arith.constant 103 : index
    %511 = memref.load %arg2[%c103] : memref<144xf32, #tpu.memory_space<smem>>
    %512 = vector.broadcast %511 : f32 to vector<16x16xf32>
    %513 = arith.mulf %512, %65 : vector<16x16xf32>
    %514 = arith.addf %510, %513 : vector<16x16xf32>
    %c104 = arith.constant 104 : index
    %515 = memref.load %arg2[%c104] : memref<144xf32, #tpu.memory_space<smem>>
    %516 = vector.broadcast %515 : f32 to vector<16x16xf32>
    %517 = arith.mulf %516, %67 : vector<16x16xf32>
    %518 = arith.addf %514, %517 : vector<16x16xf32>
    %c105 = arith.constant 105 : index
    %519 = memref.load %arg2[%c105] : memref<144xf32, #tpu.memory_space<smem>>
    %520 = vector.broadcast %519 : f32 to vector<16x16xf32>
    %521 = arith.mulf %520, %69 : vector<16x16xf32>
    %522 = arith.addf %518, %521 : vector<16x16xf32>
    %c106 = arith.constant 106 : index
    %523 = memref.load %arg2[%c106] : memref<144xf32, #tpu.memory_space<smem>>
    %524 = vector.broadcast %523 : f32 to vector<16x16xf32>
    %525 = arith.mulf %524, %71 : vector<16x16xf32>
    %526 = arith.addf %522, %525 : vector<16x16xf32>
    %c107 = arith.constant 107 : index
    %527 = memref.load %arg2[%c107] : memref<144xf32, #tpu.memory_space<smem>>
    %528 = vector.broadcast %527 : f32 to vector<16x16xf32>
    %529 = arith.mulf %528, %73 : vector<16x16xf32>
    %530 = arith.addf %526, %529 : vector<16x16xf32>
    %c2_162 = arith.constant 2 : index
    %531 = memref.load %arg3[%c2_162] : memref<4xf32, #tpu.memory_space<smem>>
    %532 = vector.broadcast %531 : f32 to vector<16x16xf32>
    %533 = arith.mulf %530, %532 : vector<16x16xf32>
    %c2_163 = arith.constant 2 : index
    %534 = memref.load %arg4[%c2_163] : memref<4xf32, #tpu.memory_space<smem>>
    %535 = vector.broadcast %534 : f32 to vector<16x16xf32>
    %536 = arith.addf %533, %535 : vector<16x16xf32>
    %cst_164 = arith.constant 0.000000e+00 : f32
    %537 = vector.broadcast %cst_164 : f32 to vector<16x16xf32>
    %538 = arith.maximumf %536, %537 : vector<16x16xf32>
    %c2_165 = arith.constant 2 : index
    %c1_166 = arith.constant 1 : index
    %c1_167 = arith.constant 1 : index
    %539 = vector.load %arg9[%c2_165, %c1_166, %c1_167] : memref<4x18x18xf32, #tpu.memory_space<vmem>>, vector<1x16x16xf32>
    %540 = vector.shape_cast %539 : vector<1x16x16xf32> to vector<16x16xf32>
    %541 = vector.shape_cast %538 : vector<16x16xf32> to vector<1x16x16xf32>
    tpu.vector_store %arg9[%c2_165, %c1_166, %c1_167], %541 {strides = array<i32>} : memref<4x18x18xf32, #tpu.memory_space<vmem>>, vector<1x16x16xf32>,
    %cst_168 = arith.constant 0.000000e+00 : f32
    %542 = vector.broadcast %cst_168 : f32 to vector<16x16xf32>
    %c108 = arith.constant 108 : index
    %543 = memref.load %arg2[%c108] : memref<144xf32, #tpu.memory_space<smem>>
    %544 = vector.broadcast %543 : f32 to vector<16x16xf32>
    %545 = arith.mulf %544, %3 : vector<16x16xf32>
    %546 = arith.addf %542, %545 : vector<16x16xf32>
    %c109 = arith.constant 109 : index
    %547 = memref.load %arg2[%c109] : memref<144xf32, #tpu.memory_space<smem>>
    %548 = vector.broadcast %547 : f32 to vector<16x16xf32>
    %549 = arith.mulf %548, %5 : vector<16x16xf32>
    %550 = arith.addf %546, %549 : vector<16x16xf32>
    %c110 = arith.constant 110 : index
    %551 = memref.load %arg2[%c110] : memref<144xf32, #tpu.memory_space<smem>>
    %552 = vector.broadcast %551 : f32 to vector<16x16xf32>
    %553 = arith.mulf %552, %7 : vector<16x16xf32>
    %554 = arith.addf %550, %553 : vector<16x16xf32>
    %c111 = arith.constant 111 : index
    %555 = memref.load %arg2[%c111] : memref<144xf32, #tpu.memory_space<smem>>
    %556 = vector.broadcast %555 : f32 to vector<16x16xf32>
    %557 = arith.mulf %556, %9 : vector<16x16xf32>
    %558 = arith.addf %554, %557 : vector<16x16xf32>
    %c112 = arith.constant 112 : index
    %559 = memref.load %arg2[%c112] : memref<144xf32, #tpu.memory_space<smem>>
    %560 = vector.broadcast %559 : f32 to vector<16x16xf32>
    %561 = arith.mulf %560, %11 : vector<16x16xf32>
    %562 = arith.addf %558, %561 : vector<16x16xf32>
    %c113 = arith.constant 113 : index
    %563 = memref.load %arg2[%c113] : memref<144xf32, #tpu.memory_space<smem>>
    %564 = vector.broadcast %563 : f32 to vector<16x16xf32>
    %565 = arith.mulf %564, %13 : vector<16x16xf32>
    %566 = arith.addf %562, %565 : vector<16x16xf32>
    %c114 = arith.constant 114 : index
    %567 = memref.load %arg2[%c114] : memref<144xf32, #tpu.memory_space<smem>>
    %568 = vector.broadcast %567 : f32 to vector<16x16xf32>
    %569 = arith.mulf %568, %15 : vector<16x16xf32>
    %570 = arith.addf %566, %569 : vector<16x16xf32>
    %c115 = arith.constant 115 : index
    %571 = memref.load %arg2[%c115] : memref<144xf32, #tpu.memory_space<smem>>
    %572 = vector.broadcast %571 : f32 to vector<16x16xf32>
    %573 = arith.mulf %572, %17 : vector<16x16xf32>
    %574 = arith.addf %570, %573 : vector<16x16xf32>
    %c116 = arith.constant 116 : index
    %575 = memref.load %arg2[%c116] : memref<144xf32, #tpu.memory_space<smem>>
    %576 = vector.broadcast %575 : f32 to vector<16x16xf32>
    %577 = arith.mulf %576, %19 : vector<16x16xf32>
    %578 = arith.addf %574, %577 : vector<16x16xf32>
    %c117 = arith.constant 117 : index
    %579 = memref.load %arg2[%c117] : memref<144xf32, #tpu.memory_space<smem>>
    %580 = vector.broadcast %579 : f32 to vector<16x16xf32>
    %581 = arith.mulf %580, %21 : vector<16x16xf32>
    %582 = arith.addf %578, %581 : vector<16x16xf32>
    %c118 = arith.constant 118 : index
    %583 = memref.load %arg2[%c118] : memref<144xf32, #tpu.memory_space<smem>>
    %584 = vector.broadcast %583 : f32 to vector<16x16xf32>
    %585 = arith.mulf %584, %23 : vector<16x16xf32>
    %586 = arith.addf %582, %585 : vector<16x16xf32>
    %c119 = arith.constant 119 : index
    %587 = memref.load %arg2[%c119] : memref<144xf32, #tpu.memory_space<smem>>
    %588 = vector.broadcast %587 : f32 to vector<16x16xf32>
    %589 = arith.mulf %588, %25 : vector<16x16xf32>
    %590 = arith.addf %586, %589 : vector<16x16xf32>
    %c120 = arith.constant 120 : index
    %591 = memref.load %arg2[%c120] : memref<144xf32, #tpu.memory_space<smem>>
    %592 = vector.broadcast %591 : f32 to vector<16x16xf32>
    %593 = arith.mulf %592, %27 : vector<16x16xf32>
    %594 = arith.addf %590, %593 : vector<16x16xf32>
    %c121 = arith.constant 121 : index
    %595 = memref.load %arg2[%c121] : memref<144xf32, #tpu.memory_space<smem>>
    %596 = vector.broadcast %595 : f32 to vector<16x16xf32>
    %597 = arith.mulf %596, %29 : vector<16x16xf32>
    %598 = arith.addf %594, %597 : vector<16x16xf32>
    %c122 = arith.constant 122 : index
    %599 = memref.load %arg2[%c122] : memref<144xf32, #tpu.memory_space<smem>>
    %600 = vector.broadcast %599 : f32 to vector<16x16xf32>
    %601 = arith.mulf %600, %31 : vector<16x16xf32>
    %602 = arith.addf %598, %601 : vector<16x16xf32>
    %c123 = arith.constant 123 : index
    %603 = memref.load %arg2[%c123] : memref<144xf32, #tpu.memory_space<smem>>
    %604 = vector.broadcast %603 : f32 to vector<16x16xf32>
    %605 = arith.mulf %604, %33 : vector<16x16xf32>
    %606 = arith.addf %602, %605 : vector<16x16xf32>
    %c124 = arith.constant 124 : index
    %607 = memref.load %arg2[%c124] : memref<144xf32, #tpu.memory_space<smem>>
    %608 = vector.broadcast %607 : f32 to vector<16x16xf32>
    %609 = arith.mulf %608, %35 : vector<16x16xf32>
    %610 = arith.addf %606, %609 : vector<16x16xf32>
    %c125 = arith.constant 125 : index
    %611 = memref.load %arg2[%c125] : memref<144xf32, #tpu.memory_space<smem>>
    %612 = vector.broadcast %611 : f32 to vector<16x16xf32>
    %613 = arith.mulf %612, %37 : vector<16x16xf32>
    %614 = arith.addf %610, %613 : vector<16x16xf32>
    %c126 = arith.constant 126 : index
    %615 = memref.load %arg2[%c126] : memref<144xf32, #tpu.memory_space<smem>>
    %616 = vector.broadcast %615 : f32 to vector<16x16xf32>
    %617 = arith.mulf %616, %39 : vector<16x16xf32>
    %618 = arith.addf %614, %617 : vector<16x16xf32>
    %c127 = arith.constant 127 : index
    %619 = memref.load %arg2[%c127] : memref<144xf32, #tpu.memory_space<smem>>
    %620 = vector.broadcast %619 : f32 to vector<16x16xf32>
    %621 = arith.mulf %620, %41 : vector<16x16xf32>
    %622 = arith.addf %618, %621 : vector<16x16xf32>
    %c128 = arith.constant 128 : index
    %623 = memref.load %arg2[%c128] : memref<144xf32, #tpu.memory_space<smem>>
    %624 = vector.broadcast %623 : f32 to vector<16x16xf32>
    %625 = arith.mulf %624, %43 : vector<16x16xf32>
    %626 = arith.addf %622, %625 : vector<16x16xf32>
    %c129 = arith.constant 129 : index
    %627 = memref.load %arg2[%c129] : memref<144xf32, #tpu.memory_space<smem>>
    %628 = vector.broadcast %627 : f32 to vector<16x16xf32>
    %629 = arith.mulf %628, %45 : vector<16x16xf32>
    %630 = arith.addf %626, %629 : vector<16x16xf32>
    %c130 = arith.constant 130 : index
    %631 = memref.load %arg2[%c130] : memref<144xf32, #tpu.memory_space<smem>>
    %632 = vector.broadcast %631 : f32 to vector<16x16xf32>
    %633 = arith.mulf %632, %47 : vector<16x16xf32>
    %634 = arith.addf %630, %633 : vector<16x16xf32>
    %c131 = arith.constant 131 : index
    %635 = memref.load %arg2[%c131] : memref<144xf32, #tpu.memory_space<smem>>
    %636 = vector.broadcast %635 : f32 to vector<16x16xf32>
    %637 = arith.mulf %636, %49 : vector<16x16xf32>
    %638 = arith.addf %634, %637 : vector<16x16xf32>
    %c132 = arith.constant 132 : index
    %639 = memref.load %arg2[%c132] : memref<144xf32, #tpu.memory_space<smem>>
    %640 = vector.broadcast %639 : f32 to vector<16x16xf32>
    %641 = arith.mulf %640, %51 : vector<16x16xf32>
    %642 = arith.addf %638, %641 : vector<16x16xf32>
    %c133 = arith.constant 133 : index
    %643 = memref.load %arg2[%c133] : memref<144xf32, #tpu.memory_space<smem>>
    %644 = vector.broadcast %643 : f32 to vector<16x16xf32>
    %645 = arith.mulf %644, %53 : vector<16x16xf32>
    %646 = arith.addf %642, %645 : vector<16x16xf32>
    %c134 = arith.constant 134 : index
    %647 = memref.load %arg2[%c134] : memref<144xf32, #tpu.memory_space<smem>>
    %648 = vector.broadcast %647 : f32 to vector<16x16xf32>
    %649 = arith.mulf %648, %55 : vector<16x16xf32>
    %650 = arith.addf %646, %649 : vector<16x16xf32>
    %c135 = arith.constant 135 : index
    %651 = memref.load %arg2[%c135] : memref<144xf32, #tpu.memory_space<smem>>
    %652 = vector.broadcast %651 : f32 to vector<16x16xf32>
    %653 = arith.mulf %652, %57 : vector<16x16xf32>
    %654 = arith.addf %650, %653 : vector<16x16xf32>
    %c136 = arith.constant 136 : index
    %655 = memref.load %arg2[%c136] : memref<144xf32, #tpu.memory_space<smem>>
    %656 = vector.broadcast %655 : f32 to vector<16x16xf32>
    %657 = arith.mulf %656, %59 : vector<16x16xf32>
    %658 = arith.addf %654, %657 : vector<16x16xf32>
    %c137 = arith.constant 137 : index
    %659 = memref.load %arg2[%c137] : memref<144xf32, #tpu.memory_space<smem>>
    %660 = vector.broadcast %659 : f32 to vector<16x16xf32>
    %661 = arith.mulf %660, %61 : vector<16x16xf32>
    %662 = arith.addf %658, %661 : vector<16x16xf32>
    %c138 = arith.constant 138 : index
    %663 = memref.load %arg2[%c138] : memref<144xf32, #tpu.memory_space<smem>>
    %664 = vector.broadcast %663 : f32 to vector<16x16xf32>
    %665 = arith.mulf %664, %63 : vector<16x16xf32>
    %666 = arith.addf %662, %665 : vector<16x16xf32>
    %c139 = arith.constant 139 : index
    %667 = memref.load %arg2[%c139] : memref<144xf32, #tpu.memory_space<smem>>
    %668 = vector.broadcast %667 : f32 to vector<16x16xf32>
    %669 = arith.mulf %668, %65 : vector<16x16xf32>
    %670 = arith.addf %666, %669 : vector<16x16xf32>
    %c140 = arith.constant 140 : index
    %671 = memref.load %arg2[%c140] : memref<144xf32, #tpu.memory_space<smem>>
    %672 = vector.broadcast %671 : f32 to vector<16x16xf32>
    %673 = arith.mulf %672, %67 : vector<16x16xf32>
    %674 = arith.addf %670, %673 : vector<16x16xf32>
    %c141 = arith.constant 141 : index
    %675 = memref.load %arg2[%c141] : memref<144xf32, #tpu.memory_space<smem>>
    %676 = vector.broadcast %675 : f32 to vector<16x16xf32>
    %677 = arith.mulf %676, %69 : vector<16x16xf32>
    %678 = arith.addf %674, %677 : vector<16x16xf32>
    %c142 = arith.constant 142 : index
    %679 = memref.load %arg2[%c142] : memref<144xf32, #tpu.memory_space<smem>>
    %680 = vector.broadcast %679 : f32 to vector<16x16xf32>
    %681 = arith.mulf %680, %71 : vector<16x16xf32>
    %682 = arith.addf %678, %681 : vector<16x16xf32>
    %c143 = arith.constant 143 : index
    %683 = memref.load %arg2[%c143] : memref<144xf32, #tpu.memory_space<smem>>
    %684 = vector.broadcast %683 : f32 to vector<16x16xf32>
    %685 = arith.mulf %684, %73 : vector<16x16xf32>
    %686 = arith.addf %682, %685 : vector<16x16xf32>
    %c3_169 = arith.constant 3 : index
    %687 = memref.load %arg3[%c3_169] : memref<4xf32, #tpu.memory_space<smem>>
    %688 = vector.broadcast %687 : f32 to vector<16x16xf32>
    %689 = arith.mulf %686, %688 : vector<16x16xf32>
    %c3_170 = arith.constant 3 : index
    %690 = memref.load %arg4[%c3_170] : memref<4xf32, #tpu.memory_space<smem>>
    %691 = vector.broadcast %690 : f32 to vector<16x16xf32>
    %692 = arith.addf %689, %691 : vector<16x16xf32>
    %cst_171 = arith.constant 0.000000e+00 : f32
    %693 = vector.broadcast %cst_171 : f32 to vector<16x16xf32>
    %694 = arith.maximumf %692, %693 : vector<16x16xf32>
    %c3_172 = arith.constant 3 : index
    %c1_173 = arith.constant 1 : index
    %c1_174 = arith.constant 1 : index
    %695 = vector.load %arg9[%c3_172, %c1_173, %c1_174] : memref<4x18x18xf32, #tpu.memory_space<vmem>>, vector<1x16x16xf32>
    %696 = vector.shape_cast %695 : vector<1x16x16xf32> to vector<16x16xf32>
    %697 = vector.shape_cast %694 : vector<16x16xf32> to vector<1x16x16xf32>
    tpu.vector_store %arg9[%c3_172, %c1_173, %c1_174], %697 {strides = array<i32>} : memref<4x18x18xf32, #tpu.memory_space<vmem>>, vector<1x16x16xf32>,
    %c0_175 = arith.constant 0 : index
    %c0_176 = arith.constant 0 : index
    %c0_177 = arith.constant 0 : index
    %698 = vector.load %arg9[%c0_175, %c0_176, %c0_177] : memref<4x18x18xf32, #tpu.memory_space<vmem>>, vector<1x16x16xf32>
    %699 = vector.shape_cast %698 : vector<1x16x16xf32> to vector<16x16xf32>
    %c0_178 = arith.constant 0 : index
    %c0_179 = arith.constant 0 : index
    %c1_180 = arith.constant 1 : index
    %700 = vector.load %arg9[%c0_178, %c0_179, %c1_180] : memref<4x18x18xf32, #tpu.memory_space<vmem>>, vector<1x16x16xf32>
    %701 = vector.shape_cast %700 : vector<1x16x16xf32> to vector<16x16xf32>
    %c0_181 = arith.constant 0 : index
    %c0_182 = arith.constant 0 : index
    %c2_183 = arith.constant 2 : index
    %702 = vector.load %arg9[%c0_181, %c0_182, %c2_183] : memref<4x18x18xf32, #tpu.memory_space<vmem>>, vector<1x16x16xf32>
    %703 = vector.shape_cast %702 : vector<1x16x16xf32> to vector<16x16xf32>
    %c0_184 = arith.constant 0 : index
    %c1_185 = arith.constant 1 : index
    %c0_186 = arith.constant 0 : index
    %704 = vector.load %arg9[%c0_184, %c1_185, %c0_186] : memref<4x18x18xf32, #tpu.memory_space<vmem>>, vector<1x16x16xf32>
    %705 = vector.shape_cast %704 : vector<1x16x16xf32> to vector<16x16xf32>
    %c0_187 = arith.constant 0 : index
    %c1_188 = arith.constant 1 : index
    %c1_189 = arith.constant 1 : index
    %706 = vector.load %arg9[%c0_187, %c1_188, %c1_189] : memref<4x18x18xf32, #tpu.memory_space<vmem>>, vector<1x16x16xf32>
    %707 = vector.shape_cast %706 : vector<1x16x16xf32> to vector<16x16xf32>
    %c0_190 = arith.constant 0 : index
    %c1_191 = arith.constant 1 : index
    %c2_192 = arith.constant 2 : index
    %708 = vector.load %arg9[%c0_190, %c1_191, %c2_192] : memref<4x18x18xf32, #tpu.memory_space<vmem>>, vector<1x16x16xf32>
    %709 = vector.shape_cast %708 : vector<1x16x16xf32> to vector<16x16xf32>
    %c0_193 = arith.constant 0 : index
    %c2_194 = arith.constant 2 : index
    %c0_195 = arith.constant 0 : index
    %710 = vector.load %arg9[%c0_193, %c2_194, %c0_195] : memref<4x18x18xf32, #tpu.memory_space<vmem>>, vector<1x16x16xf32>
    %711 = vector.shape_cast %710 : vector<1x16x16xf32> to vector<16x16xf32>
    %c0_196 = arith.constant 0 : index
    %c2_197 = arith.constant 2 : index
    %c1_198 = arith.constant 1 : index
    %712 = vector.load %arg9[%c0_196, %c2_197, %c1_198] : memref<4x18x18xf32, #tpu.memory_space<vmem>>, vector<1x16x16xf32>
    %713 = vector.shape_cast %712 : vector<1x16x16xf32> to vector<16x16xf32>
    %c0_199 = arith.constant 0 : index
    %c2_200 = arith.constant 2 : index
    %c2_201 = arith.constant 2 : index
    %714 = vector.load %arg9[%c0_199, %c2_200, %c2_201] : memref<4x18x18xf32, #tpu.memory_space<vmem>>, vector<1x16x16xf32>
    %715 = vector.shape_cast %714 : vector<1x16x16xf32> to vector<16x16xf32>
    %c1_202 = arith.constant 1 : index
    %c0_203 = arith.constant 0 : index
    %c0_204 = arith.constant 0 : index
    %716 = vector.load %arg9[%c1_202, %c0_203, %c0_204] : memref<4x18x18xf32, #tpu.memory_space<vmem>>, vector<1x16x16xf32>
    %717 = vector.shape_cast %716 : vector<1x16x16xf32> to vector<16x16xf32>
    %c1_205 = arith.constant 1 : index
    %c0_206 = arith.constant 0 : index
    %c1_207 = arith.constant 1 : index
    %718 = vector.load %arg9[%c1_205, %c0_206, %c1_207] : memref<4x18x18xf32, #tpu.memory_space<vmem>>, vector<1x16x16xf32>
    %719 = vector.shape_cast %718 : vector<1x16x16xf32> to vector<16x16xf32>
    %c1_208 = arith.constant 1 : index
    %c0_209 = arith.constant 0 : index
    %c2_210 = arith.constant 2 : index
    %720 = vector.load %arg9[%c1_208, %c0_209, %c2_210] : memref<4x18x18xf32, #tpu.memory_space<vmem>>, vector<1x16x16xf32>
    %721 = vector.shape_cast %720 : vector<1x16x16xf32> to vector<16x16xf32>
    %c1_211 = arith.constant 1 : index
    %c1_212 = arith.constant 1 : index
    %c0_213 = arith.constant 0 : index
    %722 = vector.load %arg9[%c1_211, %c1_212, %c0_213] : memref<4x18x18xf32, #tpu.memory_space<vmem>>, vector<1x16x16xf32>
    %723 = vector.shape_cast %722 : vector<1x16x16xf32> to vector<16x16xf32>
    %c1_214 = arith.constant 1 : index
    %c1_215 = arith.constant 1 : index
    %c1_216 = arith.constant 1 : index
    %724 = vector.load %arg9[%c1_214, %c1_215, %c1_216] : memref<4x18x18xf32, #tpu.memory_space<vmem>>, vector<1x16x16xf32>
    %725 = vector.shape_cast %724 : vector<1x16x16xf32> to vector<16x16xf32>
    %c1_217 = arith.constant 1 : index
    %c1_218 = arith.constant 1 : index
    %c2_219 = arith.constant 2 : index
    %726 = vector.load %arg9[%c1_217, %c1_218, %c2_219] : memref<4x18x18xf32, #tpu.memory_space<vmem>>, vector<1x16x16xf32>
    %727 = vector.shape_cast %726 : vector<1x16x16xf32> to vector<16x16xf32>
    %c1_220 = arith.constant 1 : index
    %c2_221 = arith.constant 2 : index
    %c0_222 = arith.constant 0 : index
    %728 = vector.load %arg9[%c1_220, %c2_221, %c0_222] : memref<4x18x18xf32, #tpu.memory_space<vmem>>, vector<1x16x16xf32>
    %729 = vector.shape_cast %728 : vector<1x16x16xf32> to vector<16x16xf32>
    %c1_223 = arith.constant 1 : index
    %c2_224 = arith.constant 2 : index
    %c1_225 = arith.constant 1 : index
    %730 = vector.load %arg9[%c1_223, %c2_224, %c1_225] : memref<4x18x18xf32, #tpu.memory_space<vmem>>, vector<1x16x16xf32>
    %731 = vector.shape_cast %730 : vector<1x16x16xf32> to vector<16x16xf32>
    %c1_226 = arith.constant 1 : index
    %c2_227 = arith.constant 2 : index
    %c2_228 = arith.constant 2 : index
    %732 = vector.load %arg9[%c1_226, %c2_227, %c2_228] : memref<4x18x18xf32, #tpu.memory_space<vmem>>, vector<1x16x16xf32>
    %733 = vector.shape_cast %732 : vector<1x16x16xf32> to vector<16x16xf32>
    %c2_229 = arith.constant 2 : index
    %c0_230 = arith.constant 0 : index
    %c0_231 = arith.constant 0 : index
    %734 = vector.load %arg9[%c2_229, %c0_230, %c0_231] : memref<4x18x18xf32, #tpu.memory_space<vmem>>, vector<1x16x16xf32>
    %735 = vector.shape_cast %734 : vector<1x16x16xf32> to vector<16x16xf32>
    %c2_232 = arith.constant 2 : index
    %c0_233 = arith.constant 0 : index
    %c1_234 = arith.constant 1 : index
    %736 = vector.load %arg9[%c2_232, %c0_233, %c1_234] : memref<4x18x18xf32, #tpu.memory_space<vmem>>, vector<1x16x16xf32>
    %737 = vector.shape_cast %736 : vector<1x16x16xf32> to vector<16x16xf32>
    %c2_235 = arith.constant 2 : index
    %c0_236 = arith.constant 0 : index
    %c2_237 = arith.constant 2 : index
    %738 = vector.load %arg9[%c2_235, %c0_236, %c2_237] : memref<4x18x18xf32, #tpu.memory_space<vmem>>, vector<1x16x16xf32>
    %739 = vector.shape_cast %738 : vector<1x16x16xf32> to vector<16x16xf32>
    %c2_238 = arith.constant 2 : index
    %c1_239 = arith.constant 1 : index
    %c0_240 = arith.constant 0 : index
    %740 = vector.load %arg9[%c2_238, %c1_239, %c0_240] : memref<4x18x18xf32, #tpu.memory_space<vmem>>, vector<1x16x16xf32>
    %741 = vector.shape_cast %740 : vector<1x16x16xf32> to vector<16x16xf32>
    %c2_241 = arith.constant 2 : index
    %c1_242 = arith.constant 1 : index
    %c1_243 = arith.constant 1 : index
    %742 = vector.load %arg9[%c2_241, %c1_242, %c1_243] : memref<4x18x18xf32, #tpu.memory_space<vmem>>, vector<1x16x16xf32>
    %743 = vector.shape_cast %742 : vector<1x16x16xf32> to vector<16x16xf32>
    %c2_244 = arith.constant 2 : index
    %c1_245 = arith.constant 1 : index
    %c2_246 = arith.constant 2 : index
    %744 = vector.load %arg9[%c2_244, %c1_245, %c2_246] : memref<4x18x18xf32, #tpu.memory_space<vmem>>, vector<1x16x16xf32>
    %745 = vector.shape_cast %744 : vector<1x16x16xf32> to vector<16x16xf32>
    %c2_247 = arith.constant 2 : index
    %c2_248 = arith.constant 2 : index
    %c0_249 = arith.constant 0 : index
    %746 = vector.load %arg9[%c2_247, %c2_248, %c0_249] : memref<4x18x18xf32, #tpu.memory_space<vmem>>, vector<1x16x16xf32>
    %747 = vector.shape_cast %746 : vector<1x16x16xf32> to vector<16x16xf32>
    %c2_250 = arith.constant 2 : index
    %c2_251 = arith.constant 2 : index
    %c1_252 = arith.constant 1 : index
    %748 = vector.load %arg9[%c2_250, %c2_251, %c1_252] : memref<4x18x18xf32, #tpu.memory_space<vmem>>, vector<1x16x16xf32>
    %749 = vector.shape_cast %748 : vector<1x16x16xf32> to vector<16x16xf32>
    %c2_253 = arith.constant 2 : index
    %c2_254 = arith.constant 2 : index
    %c2_255 = arith.constant 2 : index
    %750 = vector.load %arg9[%c2_253, %c2_254, %c2_255] : memref<4x18x18xf32, #tpu.memory_space<vmem>>, vector<1x16x16xf32>
    %751 = vector.shape_cast %750 : vector<1x16x16xf32> to vector<16x16xf32>
    %c3_256 = arith.constant 3 : index
    %c0_257 = arith.constant 0 : index
    %c0_258 = arith.constant 0 : index
    %752 = vector.load %arg9[%c3_256, %c0_257, %c0_258] : memref<4x18x18xf32, #tpu.memory_space<vmem>>, vector<1x16x16xf32>
    %753 = vector.shape_cast %752 : vector<1x16x16xf32> to vector<16x16xf32>
    %c3_259 = arith.constant 3 : index
    %c0_260 = arith.constant 0 : index
    %c1_261 = arith.constant 1 : index
    %754 = vector.load %arg9[%c3_259, %c0_260, %c1_261] : memref<4x18x18xf32, #tpu.memory_space<vmem>>, vector<1x16x16xf32>
    %755 = vector.shape_cast %754 : vector<1x16x16xf32> to vector<16x16xf32>
    %c3_262 = arith.constant 3 : index
    %c0_263 = arith.constant 0 : index
    %c2_264 = arith.constant 2 : index
    %756 = vector.load %arg9[%c3_262, %c0_263, %c2_264] : memref<4x18x18xf32, #tpu.memory_space<vmem>>, vector<1x16x16xf32>
    %757 = vector.shape_cast %756 : vector<1x16x16xf32> to vector<16x16xf32>
    %c3_265 = arith.constant 3 : index
    %c1_266 = arith.constant 1 : index
    %c0_267 = arith.constant 0 : index
    %758 = vector.load %arg9[%c3_265, %c1_266, %c0_267] : memref<4x18x18xf32, #tpu.memory_space<vmem>>, vector<1x16x16xf32>
    %759 = vector.shape_cast %758 : vector<1x16x16xf32> to vector<16x16xf32>
    %c3_268 = arith.constant 3 : index
    %c1_269 = arith.constant 1 : index
    %c1_270 = arith.constant 1 : index
    %760 = vector.load %arg9[%c3_268, %c1_269, %c1_270] : memref<4x18x18xf32, #tpu.memory_space<vmem>>, vector<1x16x16xf32>
    %761 = vector.shape_cast %760 : vector<1x16x16xf32> to vector<16x16xf32>
    %c3_271 = arith.constant 3 : index
    %c1_272 = arith.constant 1 : index
    %c2_273 = arith.constant 2 : index
    %762 = vector.load %arg9[%c3_271, %c1_272, %c2_273] : memref<4x18x18xf32, #tpu.memory_space<vmem>>, vector<1x16x16xf32>
    %763 = vector.shape_cast %762 : vector<1x16x16xf32> to vector<16x16xf32>
    %c3_274 = arith.constant 3 : index
    %c2_275 = arith.constant 2 : index
    %c0_276 = arith.constant 0 : index
    %764 = vector.load %arg9[%c3_274, %c2_275, %c0_276] : memref<4x18x18xf32, #tpu.memory_space<vmem>>, vector<1x16x16xf32>
    %765 = vector.shape_cast %764 : vector<1x16x16xf32> to vector<16x16xf32>
    %c3_277 = arith.constant 3 : index
    %c2_278 = arith.constant 2 : index
    %c1_279 = arith.constant 1 : index
    %766 = vector.load %arg9[%c3_277, %c2_278, %c1_279] : memref<4x18x18xf32, #tpu.memory_space<vmem>>, vector<1x16x16xf32>
    %767 = vector.shape_cast %766 : vector<1x16x16xf32> to vector<16x16xf32>
    %c3_280 = arith.constant 3 : index
    %c2_281 = arith.constant 2 : index
    %c2_282 = arith.constant 2 : index
    %768 = vector.load %arg9[%c3_280, %c2_281, %c2_282] : memref<4x18x18xf32, #tpu.memory_space<vmem>>, vector<1x16x16xf32>
    %769 = vector.shape_cast %768 : vector<1x16x16xf32> to vector<16x16xf32>
    %cst_283 = arith.constant 0.000000e+00 : f32
    %770 = vector.broadcast %cst_283 : f32 to vector<16x16xf32>
    %c0_284 = arith.constant 0 : index
    %771 = memref.load %arg5[%c0_284] : memref<144xf32, #tpu.memory_space<smem>>
    %772 = vector.broadcast %771 : f32 to vector<16x16xf32>
    %773 = arith.mulf %772, %699 : vector<16x16xf32>
    %774 = arith.addf %770, %773 : vector<16x16xf32>
    %c1_285 = arith.constant 1 : index
    %775 = memref.load %arg5[%c1_285] : memref<144xf32, #tpu.memory_space<smem>>
    %776 = vector.broadcast %775 : f32 to vector<16x16xf32>
    %777 = arith.mulf %776, %701 : vector<16x16xf32>
    %778 = arith.addf %774, %777 : vector<16x16xf32>
    %c2_286 = arith.constant 2 : index
    %779 = memref.load %arg5[%c2_286] : memref<144xf32, #tpu.memory_space<smem>>
    %780 = vector.broadcast %779 : f32 to vector<16x16xf32>
    %781 = arith.mulf %780, %703 : vector<16x16xf32>
    %782 = arith.addf %778, %781 : vector<16x16xf32>
    %c3_287 = arith.constant 3 : index
    %783 = memref.load %arg5[%c3_287] : memref<144xf32, #tpu.memory_space<smem>>
    %784 = vector.broadcast %783 : f32 to vector<16x16xf32>
    %785 = arith.mulf %784, %705 : vector<16x16xf32>
    %786 = arith.addf %782, %785 : vector<16x16xf32>
    %c4_288 = arith.constant 4 : index
    %787 = memref.load %arg5[%c4_288] : memref<144xf32, #tpu.memory_space<smem>>
    %788 = vector.broadcast %787 : f32 to vector<16x16xf32>
    %789 = arith.mulf %788, %707 : vector<16x16xf32>
    %790 = arith.addf %786, %789 : vector<16x16xf32>
    %c5_289 = arith.constant 5 : index
    %791 = memref.load %arg5[%c5_289] : memref<144xf32, #tpu.memory_space<smem>>
    %792 = vector.broadcast %791 : f32 to vector<16x16xf32>
    %793 = arith.mulf %792, %709 : vector<16x16xf32>
    %794 = arith.addf %790, %793 : vector<16x16xf32>
    %c6_290 = arith.constant 6 : index
    %795 = memref.load %arg5[%c6_290] : memref<144xf32, #tpu.memory_space<smem>>
    %796 = vector.broadcast %795 : f32 to vector<16x16xf32>
    %797 = arith.mulf %796, %711 : vector<16x16xf32>
    %798 = arith.addf %794, %797 : vector<16x16xf32>
    %c7_291 = arith.constant 7 : index
    %799 = memref.load %arg5[%c7_291] : memref<144xf32, #tpu.memory_space<smem>>
    %800 = vector.broadcast %799 : f32 to vector<16x16xf32>
    %801 = arith.mulf %800, %713 : vector<16x16xf32>
    %802 = arith.addf %798, %801 : vector<16x16xf32>
    %c8_292 = arith.constant 8 : index
    %803 = memref.load %arg5[%c8_292] : memref<144xf32, #tpu.memory_space<smem>>
    %804 = vector.broadcast %803 : f32 to vector<16x16xf32>
    %805 = arith.mulf %804, %715 : vector<16x16xf32>
    %806 = arith.addf %802, %805 : vector<16x16xf32>
    %c9_293 = arith.constant 9 : index
    %807 = memref.load %arg5[%c9_293] : memref<144xf32, #tpu.memory_space<smem>>
    %808 = vector.broadcast %807 : f32 to vector<16x16xf32>
    %809 = arith.mulf %808, %717 : vector<16x16xf32>
    %810 = arith.addf %806, %809 : vector<16x16xf32>
    %c10_294 = arith.constant 10 : index
    %811 = memref.load %arg5[%c10_294] : memref<144xf32, #tpu.memory_space<smem>>
    %812 = vector.broadcast %811 : f32 to vector<16x16xf32>
    %813 = arith.mulf %812, %719 : vector<16x16xf32>
    %814 = arith.addf %810, %813 : vector<16x16xf32>
    %c11_295 = arith.constant 11 : index
    %815 = memref.load %arg5[%c11_295] : memref<144xf32, #tpu.memory_space<smem>>
    %816 = vector.broadcast %815 : f32 to vector<16x16xf32>
    %817 = arith.mulf %816, %721 : vector<16x16xf32>
    %818 = arith.addf %814, %817 : vector<16x16xf32>
    %c12_296 = arith.constant 12 : index
    %819 = memref.load %arg5[%c12_296] : memref<144xf32, #tpu.memory_space<smem>>
    %820 = vector.broadcast %819 : f32 to vector<16x16xf32>
    %821 = arith.mulf %820, %723 : vector<16x16xf32>
    %822 = arith.addf %818, %821 : vector<16x16xf32>
    %c13_297 = arith.constant 13 : index
    %823 = memref.load %arg5[%c13_297] : memref<144xf32, #tpu.memory_space<smem>>
    %824 = vector.broadcast %823 : f32 to vector<16x16xf32>
    %825 = arith.mulf %824, %725 : vector<16x16xf32>
    %826 = arith.addf %822, %825 : vector<16x16xf32>
    %c14_298 = arith.constant 14 : index
    %827 = memref.load %arg5[%c14_298] : memref<144xf32, #tpu.memory_space<smem>>
    %828 = vector.broadcast %827 : f32 to vector<16x16xf32>
    %829 = arith.mulf %828, %727 : vector<16x16xf32>
    %830 = arith.addf %826, %829 : vector<16x16xf32>
    %c15_299 = arith.constant 15 : index
    %831 = memref.load %arg5[%c15_299] : memref<144xf32, #tpu.memory_space<smem>>
    %832 = vector.broadcast %831 : f32 to vector<16x16xf32>
    %833 = arith.mulf %832, %729 : vector<16x16xf32>
    %834 = arith.addf %830, %833 : vector<16x16xf32>
    %c16_300 = arith.constant 16 : index
    %835 = memref.load %arg5[%c16_300] : memref<144xf32, #tpu.memory_space<smem>>
    %836 = vector.broadcast %835 : f32 to vector<16x16xf32>
    %837 = arith.mulf %836, %731 : vector<16x16xf32>
    %838 = arith.addf %834, %837 : vector<16x16xf32>
    %c17_301 = arith.constant 17 : index
    %839 = memref.load %arg5[%c17_301] : memref<144xf32, #tpu.memory_space<smem>>
    %840 = vector.broadcast %839 : f32 to vector<16x16xf32>
    %841 = arith.mulf %840, %733 : vector<16x16xf32>
    %842 = arith.addf %838, %841 : vector<16x16xf32>
    %c18_302 = arith.constant 18 : index
    %843 = memref.load %arg5[%c18_302] : memref<144xf32, #tpu.memory_space<smem>>
    %844 = vector.broadcast %843 : f32 to vector<16x16xf32>
    %845 = arith.mulf %844, %735 : vector<16x16xf32>
    %846 = arith.addf %842, %845 : vector<16x16xf32>
    %c19_303 = arith.constant 19 : index
    %847 = memref.load %arg5[%c19_303] : memref<144xf32, #tpu.memory_space<smem>>
    %848 = vector.broadcast %847 : f32 to vector<16x16xf32>
    %849 = arith.mulf %848, %737 : vector<16x16xf32>
    %850 = arith.addf %846, %849 : vector<16x16xf32>
    %c20_304 = arith.constant 20 : index
    %851 = memref.load %arg5[%c20_304] : memref<144xf32, #tpu.memory_space<smem>>
    %852 = vector.broadcast %851 : f32 to vector<16x16xf32>
    %853 = arith.mulf %852, %739 : vector<16x16xf32>
    %854 = arith.addf %850, %853 : vector<16x16xf32>
    %c21_305 = arith.constant 21 : index
    %855 = memref.load %arg5[%c21_305] : memref<144xf32, #tpu.memory_space<smem>>
    %856 = vector.broadcast %855 : f32 to vector<16x16xf32>
    %857 = arith.mulf %856, %741 : vector<16x16xf32>
    %858 = arith.addf %854, %857 : vector<16x16xf32>
    %c22_306 = arith.constant 22 : index
    %859 = memref.load %arg5[%c22_306] : memref<144xf32, #tpu.memory_space<smem>>
    %860 = vector.broadcast %859 : f32 to vector<16x16xf32>
    %861 = arith.mulf %860, %743 : vector<16x16xf32>
    %862 = arith.addf %858, %861 : vector<16x16xf32>
    %c23_307 = arith.constant 23 : index
    %863 = memref.load %arg5[%c23_307] : memref<144xf32, #tpu.memory_space<smem>>
    %864 = vector.broadcast %863 : f32 to vector<16x16xf32>
    %865 = arith.mulf %864, %745 : vector<16x16xf32>
    %866 = arith.addf %862, %865 : vector<16x16xf32>
    %c24_308 = arith.constant 24 : index
    %867 = memref.load %arg5[%c24_308] : memref<144xf32, #tpu.memory_space<smem>>
    %868 = vector.broadcast %867 : f32 to vector<16x16xf32>
    %869 = arith.mulf %868, %747 : vector<16x16xf32>
    %870 = arith.addf %866, %869 : vector<16x16xf32>
    %c25_309 = arith.constant 25 : index
    %871 = memref.load %arg5[%c25_309] : memref<144xf32, #tpu.memory_space<smem>>
    %872 = vector.broadcast %871 : f32 to vector<16x16xf32>
    %873 = arith.mulf %872, %749 : vector<16x16xf32>
    %874 = arith.addf %870, %873 : vector<16x16xf32>
    %c26_310 = arith.constant 26 : index
    %875 = memref.load %arg5[%c26_310] : memref<144xf32, #tpu.memory_space<smem>>
    %876 = vector.broadcast %875 : f32 to vector<16x16xf32>
    %877 = arith.mulf %876, %751 : vector<16x16xf32>
    %878 = arith.addf %874, %877 : vector<16x16xf32>
    %c27_311 = arith.constant 27 : index
    %879 = memref.load %arg5[%c27_311] : memref<144xf32, #tpu.memory_space<smem>>
    %880 = vector.broadcast %879 : f32 to vector<16x16xf32>
    %881 = arith.mulf %880, %753 : vector<16x16xf32>
    %882 = arith.addf %878, %881 : vector<16x16xf32>
    %c28_312 = arith.constant 28 : index
    %883 = memref.load %arg5[%c28_312] : memref<144xf32, #tpu.memory_space<smem>>
    %884 = vector.broadcast %883 : f32 to vector<16x16xf32>
    %885 = arith.mulf %884, %755 : vector<16x16xf32>
    %886 = arith.addf %882, %885 : vector<16x16xf32>
    %c29_313 = arith.constant 29 : index
    %887 = memref.load %arg5[%c29_313] : memref<144xf32, #tpu.memory_space<smem>>
    %888 = vector.broadcast %887 : f32 to vector<16x16xf32>
    %889 = arith.mulf %888, %757 : vector<16x16xf32>
    %890 = arith.addf %886, %889 : vector<16x16xf32>
    %c30_314 = arith.constant 30 : index
    %891 = memref.load %arg5[%c30_314] : memref<144xf32, #tpu.memory_space<smem>>
    %892 = vector.broadcast %891 : f32 to vector<16x16xf32>
    %893 = arith.mulf %892, %759 : vector<16x16xf32>
    %894 = arith.addf %890, %893 : vector<16x16xf32>
    %c31_315 = arith.constant 31 : index
    %895 = memref.load %arg5[%c31_315] : memref<144xf32, #tpu.memory_space<smem>>
    %896 = vector.broadcast %895 : f32 to vector<16x16xf32>
    %897 = arith.mulf %896, %761 : vector<16x16xf32>
    %898 = arith.addf %894, %897 : vector<16x16xf32>
    %c32_316 = arith.constant 32 : index
    %899 = memref.load %arg5[%c32_316] : memref<144xf32, #tpu.memory_space<smem>>
    %900 = vector.broadcast %899 : f32 to vector<16x16xf32>
    %901 = arith.mulf %900, %763 : vector<16x16xf32>
    %902 = arith.addf %898, %901 : vector<16x16xf32>
    %c33_317 = arith.constant 33 : index
    %903 = memref.load %arg5[%c33_317] : memref<144xf32, #tpu.memory_space<smem>>
    %904 = vector.broadcast %903 : f32 to vector<16x16xf32>
    %905 = arith.mulf %904, %765 : vector<16x16xf32>
    %906 = arith.addf %902, %905 : vector<16x16xf32>
    %c34_318 = arith.constant 34 : index
    %907 = memref.load %arg5[%c34_318] : memref<144xf32, #tpu.memory_space<smem>>
    %908 = vector.broadcast %907 : f32 to vector<16x16xf32>
    %909 = arith.mulf %908, %767 : vector<16x16xf32>
    %910 = arith.addf %906, %909 : vector<16x16xf32>
    %c35_319 = arith.constant 35 : index
    %911 = memref.load %arg5[%c35_319] : memref<144xf32, #tpu.memory_space<smem>>
    %912 = vector.broadcast %911 : f32 to vector<16x16xf32>
    %913 = arith.mulf %912, %769 : vector<16x16xf32>
    %914 = arith.addf %910, %913 : vector<16x16xf32>
    %c0_320 = arith.constant 0 : index
    %915 = memref.load %arg6[%c0_320] : memref<4xf32, #tpu.memory_space<smem>>
    %916 = vector.broadcast %915 : f32 to vector<16x16xf32>
    %917 = arith.mulf %914, %916 : vector<16x16xf32>
    %c0_321 = arith.constant 0 : index
    %918 = memref.load %arg7[%c0_321] : memref<4xf32, #tpu.memory_space<smem>>
    %919 = vector.broadcast %918 : f32 to vector<16x16xf32>
    %920 = arith.addf %917, %919 : vector<16x16xf32>
    %cst_322 = arith.constant 0.000000e+00 : f32
    %921 = vector.broadcast %cst_322 : f32 to vector<16x16xf32>
    %922 = arith.maximumf %920, %921 : vector<16x16xf32>
    %c0_323 = arith.constant 0 : index
    %c0_324 = arith.constant 0 : index
    %c0_325 = arith.constant 0 : index
    %c0_326 = arith.constant 0 : index
    %923 = vector.load %arg8[%c0_323, %c0_324, %c0_325, %c0_326] : memref<1x4x16x16xf32, #tpu.memory_space<vmem>>, vector<1x1x16x16xf32>
    %924 = vector.shape_cast %923 : vector<1x1x16x16xf32> to vector<16x16xf32>
    %925 = vector.shape_cast %922 : vector<16x16xf32> to vector<1x1x16x16xf32>
    tpu.vector_store %arg8[%c0_323, %c0_324, %c0_325, %c0_326], %925 {strides = array<i32>} : memref<1x4x16x16xf32, #tpu.memory_space<vmem>>, vector<1x1x16x16xf32>,
    %cst_327 = arith.constant 0.000000e+00 : f32
    %926 = vector.broadcast %cst_327 : f32 to vector<16x16xf32>
    %c36_328 = arith.constant 36 : index
    %927 = memref.load %arg5[%c36_328] : memref<144xf32, #tpu.memory_space<smem>>
    %928 = vector.broadcast %927 : f32 to vector<16x16xf32>
    %929 = arith.mulf %928, %699 : vector<16x16xf32>
    %930 = arith.addf %926, %929 : vector<16x16xf32>
    %c37_329 = arith.constant 37 : index
    %931 = memref.load %arg5[%c37_329] : memref<144xf32, #tpu.memory_space<smem>>
    %932 = vector.broadcast %931 : f32 to vector<16x16xf32>
    %933 = arith.mulf %932, %701 : vector<16x16xf32>
    %934 = arith.addf %930, %933 : vector<16x16xf32>
    %c38_330 = arith.constant 38 : index
    %935 = memref.load %arg5[%c38_330] : memref<144xf32, #tpu.memory_space<smem>>
    %936 = vector.broadcast %935 : f32 to vector<16x16xf32>
    %937 = arith.mulf %936, %703 : vector<16x16xf32>
    %938 = arith.addf %934, %937 : vector<16x16xf32>
    %c39_331 = arith.constant 39 : index
    %939 = memref.load %arg5[%c39_331] : memref<144xf32, #tpu.memory_space<smem>>
    %940 = vector.broadcast %939 : f32 to vector<16x16xf32>
    %941 = arith.mulf %940, %705 : vector<16x16xf32>
    %942 = arith.addf %938, %941 : vector<16x16xf32>
    %c40_332 = arith.constant 40 : index
    %943 = memref.load %arg5[%c40_332] : memref<144xf32, #tpu.memory_space<smem>>
    %944 = vector.broadcast %943 : f32 to vector<16x16xf32>
    %945 = arith.mulf %944, %707 : vector<16x16xf32>
    %946 = arith.addf %942, %945 : vector<16x16xf32>
    %c41_333 = arith.constant 41 : index
    %947 = memref.load %arg5[%c41_333] : memref<144xf32, #tpu.memory_space<smem>>
    %948 = vector.broadcast %947 : f32 to vector<16x16xf32>
    %949 = arith.mulf %948, %709 : vector<16x16xf32>
    %950 = arith.addf %946, %949 : vector<16x16xf32>
    %c42_334 = arith.constant 42 : index
    %951 = memref.load %arg5[%c42_334] : memref<144xf32, #tpu.memory_space<smem>>
    %952 = vector.broadcast %951 : f32 to vector<16x16xf32>
    %953 = arith.mulf %952, %711 : vector<16x16xf32>
    %954 = arith.addf %950, %953 : vector<16x16xf32>
    %c43_335 = arith.constant 43 : index
    %955 = memref.load %arg5[%c43_335] : memref<144xf32, #tpu.memory_space<smem>>
    %956 = vector.broadcast %955 : f32 to vector<16x16xf32>
    %957 = arith.mulf %956, %713 : vector<16x16xf32>
    %958 = arith.addf %954, %957 : vector<16x16xf32>
    %c44_336 = arith.constant 44 : index
    %959 = memref.load %arg5[%c44_336] : memref<144xf32, #tpu.memory_space<smem>>
    %960 = vector.broadcast %959 : f32 to vector<16x16xf32>
    %961 = arith.mulf %960, %715 : vector<16x16xf32>
    %962 = arith.addf %958, %961 : vector<16x16xf32>
    %c45_337 = arith.constant 45 : index
    %963 = memref.load %arg5[%c45_337] : memref<144xf32, #tpu.memory_space<smem>>
    %964 = vector.broadcast %963 : f32 to vector<16x16xf32>
    %965 = arith.mulf %964, %717 : vector<16x16xf32>
    %966 = arith.addf %962, %965 : vector<16x16xf32>
    %c46_338 = arith.constant 46 : index
    %967 = memref.load %arg5[%c46_338] : memref<144xf32, #tpu.memory_space<smem>>
    %968 = vector.broadcast %967 : f32 to vector<16x16xf32>
    %969 = arith.mulf %968, %719 : vector<16x16xf32>
    %970 = arith.addf %966, %969 : vector<16x16xf32>
    %c47_339 = arith.constant 47 : index
    %971 = memref.load %arg5[%c47_339] : memref<144xf32, #tpu.memory_space<smem>>
    %972 = vector.broadcast %971 : f32 to vector<16x16xf32>
    %973 = arith.mulf %972, %721 : vector<16x16xf32>
    %974 = arith.addf %970, %973 : vector<16x16xf32>
    %c48_340 = arith.constant 48 : index
    %975 = memref.load %arg5[%c48_340] : memref<144xf32, #tpu.memory_space<smem>>
    %976 = vector.broadcast %975 : f32 to vector<16x16xf32>
    %977 = arith.mulf %976, %723 : vector<16x16xf32>
    %978 = arith.addf %974, %977 : vector<16x16xf32>
    %c49_341 = arith.constant 49 : index
    %979 = memref.load %arg5[%c49_341] : memref<144xf32, #tpu.memory_space<smem>>
    %980 = vector.broadcast %979 : f32 to vector<16x16xf32>
    %981 = arith.mulf %980, %725 : vector<16x16xf32>
    %982 = arith.addf %978, %981 : vector<16x16xf32>
    %c50_342 = arith.constant 50 : index
    %983 = memref.load %arg5[%c50_342] : memref<144xf32, #tpu.memory_space<smem>>
    %984 = vector.broadcast %983 : f32 to vector<16x16xf32>
    %985 = arith.mulf %984, %727 : vector<16x16xf32>
    %986 = arith.addf %982, %985 : vector<16x16xf32>
    %c51_343 = arith.constant 51 : index
    %987 = memref.load %arg5[%c51_343] : memref<144xf32, #tpu.memory_space<smem>>
    %988 = vector.broadcast %987 : f32 to vector<16x16xf32>
    %989 = arith.mulf %988, %729 : vector<16x16xf32>
    %990 = arith.addf %986, %989 : vector<16x16xf32>
    %c52_344 = arith.constant 52 : index
    %991 = memref.load %arg5[%c52_344] : memref<144xf32, #tpu.memory_space<smem>>
    %992 = vector.broadcast %991 : f32 to vector<16x16xf32>
    %993 = arith.mulf %992, %731 : vector<16x16xf32>
    %994 = arith.addf %990, %993 : vector<16x16xf32>
    %c53_345 = arith.constant 53 : index
    %995 = memref.load %arg5[%c53_345] : memref<144xf32, #tpu.memory_space<smem>>
    %996 = vector.broadcast %995 : f32 to vector<16x16xf32>
    %997 = arith.mulf %996, %733 : vector<16x16xf32>
    %998 = arith.addf %994, %997 : vector<16x16xf32>
    %c54_346 = arith.constant 54 : index
    %999 = memref.load %arg5[%c54_346] : memref<144xf32, #tpu.memory_space<smem>>
    %1000 = vector.broadcast %999 : f32 to vector<16x16xf32>
    %1001 = arith.mulf %1000, %735 : vector<16x16xf32>
    %1002 = arith.addf %998, %1001 : vector<16x16xf32>
    %c55_347 = arith.constant 55 : index
    %1003 = memref.load %arg5[%c55_347] : memref<144xf32, #tpu.memory_space<smem>>
    %1004 = vector.broadcast %1003 : f32 to vector<16x16xf32>
    %1005 = arith.mulf %1004, %737 : vector<16x16xf32>
    %1006 = arith.addf %1002, %1005 : vector<16x16xf32>
    %c56_348 = arith.constant 56 : index
    %1007 = memref.load %arg5[%c56_348] : memref<144xf32, #tpu.memory_space<smem>>
    %1008 = vector.broadcast %1007 : f32 to vector<16x16xf32>
    %1009 = arith.mulf %1008, %739 : vector<16x16xf32>
    %1010 = arith.addf %1006, %1009 : vector<16x16xf32>
    %c57_349 = arith.constant 57 : index
    %1011 = memref.load %arg5[%c57_349] : memref<144xf32, #tpu.memory_space<smem>>
    %1012 = vector.broadcast %1011 : f32 to vector<16x16xf32>
    %1013 = arith.mulf %1012, %741 : vector<16x16xf32>
    %1014 = arith.addf %1010, %1013 : vector<16x16xf32>
    %c58_350 = arith.constant 58 : index
    %1015 = memref.load %arg5[%c58_350] : memref<144xf32, #tpu.memory_space<smem>>
    %1016 = vector.broadcast %1015 : f32 to vector<16x16xf32>
    %1017 = arith.mulf %1016, %743 : vector<16x16xf32>
    %1018 = arith.addf %1014, %1017 : vector<16x16xf32>
    %c59_351 = arith.constant 59 : index
    %1019 = memref.load %arg5[%c59_351] : memref<144xf32, #tpu.memory_space<smem>>
    %1020 = vector.broadcast %1019 : f32 to vector<16x16xf32>
    %1021 = arith.mulf %1020, %745 : vector<16x16xf32>
    %1022 = arith.addf %1018, %1021 : vector<16x16xf32>
    %c60_352 = arith.constant 60 : index
    %1023 = memref.load %arg5[%c60_352] : memref<144xf32, #tpu.memory_space<smem>>
    %1024 = vector.broadcast %1023 : f32 to vector<16x16xf32>
    %1025 = arith.mulf %1024, %747 : vector<16x16xf32>
    %1026 = arith.addf %1022, %1025 : vector<16x16xf32>
    %c61_353 = arith.constant 61 : index
    %1027 = memref.load %arg5[%c61_353] : memref<144xf32, #tpu.memory_space<smem>>
    %1028 = vector.broadcast %1027 : f32 to vector<16x16xf32>
    %1029 = arith.mulf %1028, %749 : vector<16x16xf32>
    %1030 = arith.addf %1026, %1029 : vector<16x16xf32>
    %c62_354 = arith.constant 62 : index
    %1031 = memref.load %arg5[%c62_354] : memref<144xf32, #tpu.memory_space<smem>>
    %1032 = vector.broadcast %1031 : f32 to vector<16x16xf32>
    %1033 = arith.mulf %1032, %751 : vector<16x16xf32>
    %1034 = arith.addf %1030, %1033 : vector<16x16xf32>
    %c63_355 = arith.constant 63 : index
    %1035 = memref.load %arg5[%c63_355] : memref<144xf32, #tpu.memory_space<smem>>
    %1036 = vector.broadcast %1035 : f32 to vector<16x16xf32>
    %1037 = arith.mulf %1036, %753 : vector<16x16xf32>
    %1038 = arith.addf %1034, %1037 : vector<16x16xf32>
    %c64_356 = arith.constant 64 : index
    %1039 = memref.load %arg5[%c64_356] : memref<144xf32, #tpu.memory_space<smem>>
    %1040 = vector.broadcast %1039 : f32 to vector<16x16xf32>
    %1041 = arith.mulf %1040, %755 : vector<16x16xf32>
    %1042 = arith.addf %1038, %1041 : vector<16x16xf32>
    %c65_357 = arith.constant 65 : index
    %1043 = memref.load %arg5[%c65_357] : memref<144xf32, #tpu.memory_space<smem>>
    %1044 = vector.broadcast %1043 : f32 to vector<16x16xf32>
    %1045 = arith.mulf %1044, %757 : vector<16x16xf32>
    %1046 = arith.addf %1042, %1045 : vector<16x16xf32>
    %c66_358 = arith.constant 66 : index
    %1047 = memref.load %arg5[%c66_358] : memref<144xf32, #tpu.memory_space<smem>>
    %1048 = vector.broadcast %1047 : f32 to vector<16x16xf32>
    %1049 = arith.mulf %1048, %759 : vector<16x16xf32>
    %1050 = arith.addf %1046, %1049 : vector<16x16xf32>
    %c67_359 = arith.constant 67 : index
    %1051 = memref.load %arg5[%c67_359] : memref<144xf32, #tpu.memory_space<smem>>
    %1052 = vector.broadcast %1051 : f32 to vector<16x16xf32>
    %1053 = arith.mulf %1052, %761 : vector<16x16xf32>
    %1054 = arith.addf %1050, %1053 : vector<16x16xf32>
    %c68_360 = arith.constant 68 : index
    %1055 = memref.load %arg5[%c68_360] : memref<144xf32, #tpu.memory_space<smem>>
    %1056 = vector.broadcast %1055 : f32 to vector<16x16xf32>
    %1057 = arith.mulf %1056, %763 : vector<16x16xf32>
    %1058 = arith.addf %1054, %1057 : vector<16x16xf32>
    %c69_361 = arith.constant 69 : index
    %1059 = memref.load %arg5[%c69_361] : memref<144xf32, #tpu.memory_space<smem>>
    %1060 = vector.broadcast %1059 : f32 to vector<16x16xf32>
    %1061 = arith.mulf %1060, %765 : vector<16x16xf32>
    %1062 = arith.addf %1058, %1061 : vector<16x16xf32>
    %c70_362 = arith.constant 70 : index
    %1063 = memref.load %arg5[%c70_362] : memref<144xf32, #tpu.memory_space<smem>>
    %1064 = vector.broadcast %1063 : f32 to vector<16x16xf32>
    %1065 = arith.mulf %1064, %767 : vector<16x16xf32>
    %1066 = arith.addf %1062, %1065 : vector<16x16xf32>
    %c71_363 = arith.constant 71 : index
    %1067 = memref.load %arg5[%c71_363] : memref<144xf32, #tpu.memory_space<smem>>
    %1068 = vector.broadcast %1067 : f32 to vector<16x16xf32>
    %1069 = arith.mulf %1068, %769 : vector<16x16xf32>
    %1070 = arith.addf %1066, %1069 : vector<16x16xf32>
    %c1_364 = arith.constant 1 : index
    %1071 = memref.load %arg6[%c1_364] : memref<4xf32, #tpu.memory_space<smem>>
    %1072 = vector.broadcast %1071 : f32 to vector<16x16xf32>
    %1073 = arith.mulf %1070, %1072 : vector<16x16xf32>
    %c1_365 = arith.constant 1 : index
    %1074 = memref.load %arg7[%c1_365] : memref<4xf32, #tpu.memory_space<smem>>
    %1075 = vector.broadcast %1074 : f32 to vector<16x16xf32>
    %1076 = arith.addf %1073, %1075 : vector<16x16xf32>
    %cst_366 = arith.constant 0.000000e+00 : f32
    %1077 = vector.broadcast %cst_366 : f32 to vector<16x16xf32>
    %1078 = arith.maximumf %1076, %1077 : vector<16x16xf32>
    %c0_367 = arith.constant 0 : index
    %c1_368 = arith.constant 1 : index
    %c0_369 = arith.constant 0 : index
    %c0_370 = arith.constant 0 : index
    %1079 = vector.load %arg8[%c0_367, %c1_368, %c0_369, %c0_370] : memref<1x4x16x16xf32, #tpu.memory_space<vmem>>, vector<1x1x16x16xf32>
    %1080 = vector.shape_cast %1079 : vector<1x1x16x16xf32> to vector<16x16xf32>
    %1081 = vector.shape_cast %1078 : vector<16x16xf32> to vector<1x1x16x16xf32>
    tpu.vector_store %arg8[%c0_367, %c1_368, %c0_369, %c0_370], %1081 {strides = array<i32>} : memref<1x4x16x16xf32, #tpu.memory_space<vmem>>, vector<1x1x16x16xf32>,
    %cst_371 = arith.constant 0.000000e+00 : f32
    %1082 = vector.broadcast %cst_371 : f32 to vector<16x16xf32>
    %c72_372 = arith.constant 72 : index
    %1083 = memref.load %arg5[%c72_372] : memref<144xf32, #tpu.memory_space<smem>>
    %1084 = vector.broadcast %1083 : f32 to vector<16x16xf32>
    %1085 = arith.mulf %1084, %699 : vector<16x16xf32>
    %1086 = arith.addf %1082, %1085 : vector<16x16xf32>
    %c73_373 = arith.constant 73 : index
    %1087 = memref.load %arg5[%c73_373] : memref<144xf32, #tpu.memory_space<smem>>
    %1088 = vector.broadcast %1087 : f32 to vector<16x16xf32>
    %1089 = arith.mulf %1088, %701 : vector<16x16xf32>
    %1090 = arith.addf %1086, %1089 : vector<16x16xf32>
    %c74_374 = arith.constant 74 : index
    %1091 = memref.load %arg5[%c74_374] : memref<144xf32, #tpu.memory_space<smem>>
    %1092 = vector.broadcast %1091 : f32 to vector<16x16xf32>
    %1093 = arith.mulf %1092, %703 : vector<16x16xf32>
    %1094 = arith.addf %1090, %1093 : vector<16x16xf32>
    %c75_375 = arith.constant 75 : index
    %1095 = memref.load %arg5[%c75_375] : memref<144xf32, #tpu.memory_space<smem>>
    %1096 = vector.broadcast %1095 : f32 to vector<16x16xf32>
    %1097 = arith.mulf %1096, %705 : vector<16x16xf32>
    %1098 = arith.addf %1094, %1097 : vector<16x16xf32>
    %c76_376 = arith.constant 76 : index
    %1099 = memref.load %arg5[%c76_376] : memref<144xf32, #tpu.memory_space<smem>>
    %1100 = vector.broadcast %1099 : f32 to vector<16x16xf32>
    %1101 = arith.mulf %1100, %707 : vector<16x16xf32>
    %1102 = arith.addf %1098, %1101 : vector<16x16xf32>
    %c77_377 = arith.constant 77 : index
    %1103 = memref.load %arg5[%c77_377] : memref<144xf32, #tpu.memory_space<smem>>
    %1104 = vector.broadcast %1103 : f32 to vector<16x16xf32>
    %1105 = arith.mulf %1104, %709 : vector<16x16xf32>
    %1106 = arith.addf %1102, %1105 : vector<16x16xf32>
    %c78_378 = arith.constant 78 : index
    %1107 = memref.load %arg5[%c78_378] : memref<144xf32, #tpu.memory_space<smem>>
    %1108 = vector.broadcast %1107 : f32 to vector<16x16xf32>
    %1109 = arith.mulf %1108, %711 : vector<16x16xf32>
    %1110 = arith.addf %1106, %1109 : vector<16x16xf32>
    %c79_379 = arith.constant 79 : index
    %1111 = memref.load %arg5[%c79_379] : memref<144xf32, #tpu.memory_space<smem>>
    %1112 = vector.broadcast %1111 : f32 to vector<16x16xf32>
    %1113 = arith.mulf %1112, %713 : vector<16x16xf32>
    %1114 = arith.addf %1110, %1113 : vector<16x16xf32>
    %c80_380 = arith.constant 80 : index
    %1115 = memref.load %arg5[%c80_380] : memref<144xf32, #tpu.memory_space<smem>>
    %1116 = vector.broadcast %1115 : f32 to vector<16x16xf32>
    %1117 = arith.mulf %1116, %715 : vector<16x16xf32>
    %1118 = arith.addf %1114, %1117 : vector<16x16xf32>
    %c81_381 = arith.constant 81 : index
    %1119 = memref.load %arg5[%c81_381] : memref<144xf32, #tpu.memory_space<smem>>
    %1120 = vector.broadcast %1119 : f32 to vector<16x16xf32>
    %1121 = arith.mulf %1120, %717 : vector<16x16xf32>
    %1122 = arith.addf %1118, %1121 : vector<16x16xf32>
    %c82_382 = arith.constant 82 : index
    %1123 = memref.load %arg5[%c82_382] : memref<144xf32, #tpu.memory_space<smem>>
    %1124 = vector.broadcast %1123 : f32 to vector<16x16xf32>
    %1125 = arith.mulf %1124, %719 : vector<16x16xf32>
    %1126 = arith.addf %1122, %1125 : vector<16x16xf32>
    %c83_383 = arith.constant 83 : index
    %1127 = memref.load %arg5[%c83_383] : memref<144xf32, #tpu.memory_space<smem>>
    %1128 = vector.broadcast %1127 : f32 to vector<16x16xf32>
    %1129 = arith.mulf %1128, %721 : vector<16x16xf32>
    %1130 = arith.addf %1126, %1129 : vector<16x16xf32>
    %c84_384 = arith.constant 84 : index
    %1131 = memref.load %arg5[%c84_384] : memref<144xf32, #tpu.memory_space<smem>>
    %1132 = vector.broadcast %1131 : f32 to vector<16x16xf32>
    %1133 = arith.mulf %1132, %723 : vector<16x16xf32>
    %1134 = arith.addf %1130, %1133 : vector<16x16xf32>
    %c85_385 = arith.constant 85 : index
    %1135 = memref.load %arg5[%c85_385] : memref<144xf32, #tpu.memory_space<smem>>
    %1136 = vector.broadcast %1135 : f32 to vector<16x16xf32>
    %1137 = arith.mulf %1136, %725 : vector<16x16xf32>
    %1138 = arith.addf %1134, %1137 : vector<16x16xf32>
    %c86_386 = arith.constant 86 : index
    %1139 = memref.load %arg5[%c86_386] : memref<144xf32, #tpu.memory_space<smem>>
    %1140 = vector.broadcast %1139 : f32 to vector<16x16xf32>
    %1141 = arith.mulf %1140, %727 : vector<16x16xf32>
    %1142 = arith.addf %1138, %1141 : vector<16x16xf32>
    %c87_387 = arith.constant 87 : index
    %1143 = memref.load %arg5[%c87_387] : memref<144xf32, #tpu.memory_space<smem>>
    %1144 = vector.broadcast %1143 : f32 to vector<16x16xf32>
    %1145 = arith.mulf %1144, %729 : vector<16x16xf32>
    %1146 = arith.addf %1142, %1145 : vector<16x16xf32>
    %c88_388 = arith.constant 88 : index
    %1147 = memref.load %arg5[%c88_388] : memref<144xf32, #tpu.memory_space<smem>>
    %1148 = vector.broadcast %1147 : f32 to vector<16x16xf32>
    %1149 = arith.mulf %1148, %731 : vector<16x16xf32>
    %1150 = arith.addf %1146, %1149 : vector<16x16xf32>
    %c89_389 = arith.constant 89 : index
    %1151 = memref.load %arg5[%c89_389] : memref<144xf32, #tpu.memory_space<smem>>
    %1152 = vector.broadcast %1151 : f32 to vector<16x16xf32>
    %1153 = arith.mulf %1152, %733 : vector<16x16xf32>
    %1154 = arith.addf %1150, %1153 : vector<16x16xf32>
    %c90_390 = arith.constant 90 : index
    %1155 = memref.load %arg5[%c90_390] : memref<144xf32, #tpu.memory_space<smem>>
    %1156 = vector.broadcast %1155 : f32 to vector<16x16xf32>
    %1157 = arith.mulf %1156, %735 : vector<16x16xf32>
    %1158 = arith.addf %1154, %1157 : vector<16x16xf32>
    %c91_391 = arith.constant 91 : index
    %1159 = memref.load %arg5[%c91_391] : memref<144xf32, #tpu.memory_space<smem>>
    %1160 = vector.broadcast %1159 : f32 to vector<16x16xf32>
    %1161 = arith.mulf %1160, %737 : vector<16x16xf32>
    %1162 = arith.addf %1158, %1161 : vector<16x16xf32>
    %c92_392 = arith.constant 92 : index
    %1163 = memref.load %arg5[%c92_392] : memref<144xf32, #tpu.memory_space<smem>>
    %1164 = vector.broadcast %1163 : f32 to vector<16x16xf32>
    %1165 = arith.mulf %1164, %739 : vector<16x16xf32>
    %1166 = arith.addf %1162, %1165 : vector<16x16xf32>
    %c93_393 = arith.constant 93 : index
    %1167 = memref.load %arg5[%c93_393] : memref<144xf32, #tpu.memory_space<smem>>
    %1168 = vector.broadcast %1167 : f32 to vector<16x16xf32>
    %1169 = arith.mulf %1168, %741 : vector<16x16xf32>
    %1170 = arith.addf %1166, %1169 : vector<16x16xf32>
    %c94_394 = arith.constant 94 : index
    %1171 = memref.load %arg5[%c94_394] : memref<144xf32, #tpu.memory_space<smem>>
    %1172 = vector.broadcast %1171 : f32 to vector<16x16xf32>
    %1173 = arith.mulf %1172, %743 : vector<16x16xf32>
    %1174 = arith.addf %1170, %1173 : vector<16x16xf32>
    %c95_395 = arith.constant 95 : index
    %1175 = memref.load %arg5[%c95_395] : memref<144xf32, #tpu.memory_space<smem>>
    %1176 = vector.broadcast %1175 : f32 to vector<16x16xf32>
    %1177 = arith.mulf %1176, %745 : vector<16x16xf32>
    %1178 = arith.addf %1174, %1177 : vector<16x16xf32>
    %c96_396 = arith.constant 96 : index
    %1179 = memref.load %arg5[%c96_396] : memref<144xf32, #tpu.memory_space<smem>>
    %1180 = vector.broadcast %1179 : f32 to vector<16x16xf32>
    %1181 = arith.mulf %1180, %747 : vector<16x16xf32>
    %1182 = arith.addf %1178, %1181 : vector<16x16xf32>
    %c97_397 = arith.constant 97 : index
    %1183 = memref.load %arg5[%c97_397] : memref<144xf32, #tpu.memory_space<smem>>
    %1184 = vector.broadcast %1183 : f32 to vector<16x16xf32>
    %1185 = arith.mulf %1184, %749 : vector<16x16xf32>
    %1186 = arith.addf %1182, %1185 : vector<16x16xf32>
    %c98_398 = arith.constant 98 : index
    %1187 = memref.load %arg5[%c98_398] : memref<144xf32, #tpu.memory_space<smem>>
    %1188 = vector.broadcast %1187 : f32 to vector<16x16xf32>
    %1189 = arith.mulf %1188, %751 : vector<16x16xf32>
    %1190 = arith.addf %1186, %1189 : vector<16x16xf32>
    %c99_399 = arith.constant 99 : index
    %1191 = memref.load %arg5[%c99_399] : memref<144xf32, #tpu.memory_space<smem>>
    %1192 = vector.broadcast %1191 : f32 to vector<16x16xf32>
    %1193 = arith.mulf %1192, %753 : vector<16x16xf32>
    %1194 = arith.addf %1190, %1193 : vector<16x16xf32>
    %c100_400 = arith.constant 100 : index
    %1195 = memref.load %arg5[%c100_400] : memref<144xf32, #tpu.memory_space<smem>>
    %1196 = vector.broadcast %1195 : f32 to vector<16x16xf32>
    %1197 = arith.mulf %1196, %755 : vector<16x16xf32>
    %1198 = arith.addf %1194, %1197 : vector<16x16xf32>
    %c101_401 = arith.constant 101 : index
    %1199 = memref.load %arg5[%c101_401] : memref<144xf32, #tpu.memory_space<smem>>
    %1200 = vector.broadcast %1199 : f32 to vector<16x16xf32>
    %1201 = arith.mulf %1200, %757 : vector<16x16xf32>
    %1202 = arith.addf %1198, %1201 : vector<16x16xf32>
    %c102_402 = arith.constant 102 : index
    %1203 = memref.load %arg5[%c102_402] : memref<144xf32, #tpu.memory_space<smem>>
    %1204 = vector.broadcast %1203 : f32 to vector<16x16xf32>
    %1205 = arith.mulf %1204, %759 : vector<16x16xf32>
    %1206 = arith.addf %1202, %1205 : vector<16x16xf32>
    %c103_403 = arith.constant 103 : index
    %1207 = memref.load %arg5[%c103_403] : memref<144xf32, #tpu.memory_space<smem>>
    %1208 = vector.broadcast %1207 : f32 to vector<16x16xf32>
    %1209 = arith.mulf %1208, %761 : vector<16x16xf32>
    %1210 = arith.addf %1206, %1209 : vector<16x16xf32>
    %c104_404 = arith.constant 104 : index
    %1211 = memref.load %arg5[%c104_404] : memref<144xf32, #tpu.memory_space<smem>>
    %1212 = vector.broadcast %1211 : f32 to vector<16x16xf32>
    %1213 = arith.mulf %1212, %763 : vector<16x16xf32>
    %1214 = arith.addf %1210, %1213 : vector<16x16xf32>
    %c105_405 = arith.constant 105 : index
    %1215 = memref.load %arg5[%c105_405] : memref<144xf32, #tpu.memory_space<smem>>
    %1216 = vector.broadcast %1215 : f32 to vector<16x16xf32>
    %1217 = arith.mulf %1216, %765 : vector<16x16xf32>
    %1218 = arith.addf %1214, %1217 : vector<16x16xf32>
    %c106_406 = arith.constant 106 : index
    %1219 = memref.load %arg5[%c106_406] : memref<144xf32, #tpu.memory_space<smem>>
    %1220 = vector.broadcast %1219 : f32 to vector<16x16xf32>
    %1221 = arith.mulf %1220, %767 : vector<16x16xf32>
    %1222 = arith.addf %1218, %1221 : vector<16x16xf32>
    %c107_407 = arith.constant 107 : index
    %1223 = memref.load %arg5[%c107_407] : memref<144xf32, #tpu.memory_space<smem>>
    %1224 = vector.broadcast %1223 : f32 to vector<16x16xf32>
    %1225 = arith.mulf %1224, %769 : vector<16x16xf32>
    %1226 = arith.addf %1222, %1225 : vector<16x16xf32>
    %c2_408 = arith.constant 2 : index
    %1227 = memref.load %arg6[%c2_408] : memref<4xf32, #tpu.memory_space<smem>>
    %1228 = vector.broadcast %1227 : f32 to vector<16x16xf32>
    %1229 = arith.mulf %1226, %1228 : vector<16x16xf32>
    %c2_409 = arith.constant 2 : index
    %1230 = memref.load %arg7[%c2_409] : memref<4xf32, #tpu.memory_space<smem>>
    %1231 = vector.broadcast %1230 : f32 to vector<16x16xf32>
    %1232 = arith.addf %1229, %1231 : vector<16x16xf32>
    %cst_410 = arith.constant 0.000000e+00 : f32
    %1233 = vector.broadcast %cst_410 : f32 to vector<16x16xf32>
    %1234 = arith.maximumf %1232, %1233 : vector<16x16xf32>
    %c0_411 = arith.constant 0 : index
    %c2_412 = arith.constant 2 : index
    %c0_413 = arith.constant 0 : index
    %c0_414 = arith.constant 0 : index
    %1235 = vector.load %arg8[%c0_411, %c2_412, %c0_413, %c0_414] : memref<1x4x16x16xf32, #tpu.memory_space<vmem>>, vector<1x1x16x16xf32>
    %1236 = vector.shape_cast %1235 : vector<1x1x16x16xf32> to vector<16x16xf32>
    %1237 = vector.shape_cast %1234 : vector<16x16xf32> to vector<1x1x16x16xf32>
    tpu.vector_store %arg8[%c0_411, %c2_412, %c0_413, %c0_414], %1237 {strides = array<i32>} : memref<1x4x16x16xf32, #tpu.memory_space<vmem>>, vector<1x1x16x16xf32>,
    %cst_415 = arith.constant 0.000000e+00 : f32
    %1238 = vector.broadcast %cst_415 : f32 to vector<16x16xf32>
    %c108_416 = arith.constant 108 : index
    %1239 = memref.load %arg5[%c108_416] : memref<144xf32, #tpu.memory_space<smem>>
    %1240 = vector.broadcast %1239 : f32 to vector<16x16xf32>
    %1241 = arith.mulf %1240, %699 : vector<16x16xf32>
    %1242 = arith.addf %1238, %1241 : vector<16x16xf32>
    %c109_417 = arith.constant 109 : index
    %1243 = memref.load %arg5[%c109_417] : memref<144xf32, #tpu.memory_space<smem>>
    %1244 = vector.broadcast %1243 : f32 to vector<16x16xf32>
    %1245 = arith.mulf %1244, %701 : vector<16x16xf32>
    %1246 = arith.addf %1242, %1245 : vector<16x16xf32>
    %c110_418 = arith.constant 110 : index
    %1247 = memref.load %arg5[%c110_418] : memref<144xf32, #tpu.memory_space<smem>>
    %1248 = vector.broadcast %1247 : f32 to vector<16x16xf32>
    %1249 = arith.mulf %1248, %703 : vector<16x16xf32>
    %1250 = arith.addf %1246, %1249 : vector<16x16xf32>
    %c111_419 = arith.constant 111 : index
    %1251 = memref.load %arg5[%c111_419] : memref<144xf32, #tpu.memory_space<smem>>
    %1252 = vector.broadcast %1251 : f32 to vector<16x16xf32>
    %1253 = arith.mulf %1252, %705 : vector<16x16xf32>
    %1254 = arith.addf %1250, %1253 : vector<16x16xf32>
    %c112_420 = arith.constant 112 : index
    %1255 = memref.load %arg5[%c112_420] : memref<144xf32, #tpu.memory_space<smem>>
    %1256 = vector.broadcast %1255 : f32 to vector<16x16xf32>
    %1257 = arith.mulf %1256, %707 : vector<16x16xf32>
    %1258 = arith.addf %1254, %1257 : vector<16x16xf32>
    %c113_421 = arith.constant 113 : index
    %1259 = memref.load %arg5[%c113_421] : memref<144xf32, #tpu.memory_space<smem>>
    %1260 = vector.broadcast %1259 : f32 to vector<16x16xf32>
    %1261 = arith.mulf %1260, %709 : vector<16x16xf32>
    %1262 = arith.addf %1258, %1261 : vector<16x16xf32>
    %c114_422 = arith.constant 114 : index
    %1263 = memref.load %arg5[%c114_422] : memref<144xf32, #tpu.memory_space<smem>>
    %1264 = vector.broadcast %1263 : f32 to vector<16x16xf32>
    %1265 = arith.mulf %1264, %711 : vector<16x16xf32>
    %1266 = arith.addf %1262, %1265 : vector<16x16xf32>
    %c115_423 = arith.constant 115 : index
    %1267 = memref.load %arg5[%c115_423] : memref<144xf32, #tpu.memory_space<smem>>
    %1268 = vector.broadcast %1267 : f32 to vector<16x16xf32>
    %1269 = arith.mulf %1268, %713 : vector<16x16xf32>
    %1270 = arith.addf %1266, %1269 : vector<16x16xf32>
    %c116_424 = arith.constant 116 : index
    %1271 = memref.load %arg5[%c116_424] : memref<144xf32, #tpu.memory_space<smem>>
    %1272 = vector.broadcast %1271 : f32 to vector<16x16xf32>
    %1273 = arith.mulf %1272, %715 : vector<16x16xf32>
    %1274 = arith.addf %1270, %1273 : vector<16x16xf32>
    %c117_425 = arith.constant 117 : index
    %1275 = memref.load %arg5[%c117_425] : memref<144xf32, #tpu.memory_space<smem>>
    %1276 = vector.broadcast %1275 : f32 to vector<16x16xf32>
    %1277 = arith.mulf %1276, %717 : vector<16x16xf32>
    %1278 = arith.addf %1274, %1277 : vector<16x16xf32>
    %c118_426 = arith.constant 118 : index
    %1279 = memref.load %arg5[%c118_426] : memref<144xf32, #tpu.memory_space<smem>>
    %1280 = vector.broadcast %1279 : f32 to vector<16x16xf32>
    %1281 = arith.mulf %1280, %719 : vector<16x16xf32>
    %1282 = arith.addf %1278, %1281 : vector<16x16xf32>
    %c119_427 = arith.constant 119 : index
    %1283 = memref.load %arg5[%c119_427] : memref<144xf32, #tpu.memory_space<smem>>
    %1284 = vector.broadcast %1283 : f32 to vector<16x16xf32>
    %1285 = arith.mulf %1284, %721 : vector<16x16xf32>
    %1286 = arith.addf %1282, %1285 : vector<16x16xf32>
    %c120_428 = arith.constant 120 : index
    %1287 = memref.load %arg5[%c120_428] : memref<144xf32, #tpu.memory_space<smem>>
    %1288 = vector.broadcast %1287 : f32 to vector<16x16xf32>
    %1289 = arith.mulf %1288, %723 : vector<16x16xf32>
    %1290 = arith.addf %1286, %1289 : vector<16x16xf32>
    %c121_429 = arith.constant 121 : index
    %1291 = memref.load %arg5[%c121_429] : memref<144xf32, #tpu.memory_space<smem>>
    %1292 = vector.broadcast %1291 : f32 to vector<16x16xf32>
    %1293 = arith.mulf %1292, %725 : vector<16x16xf32>
    %1294 = arith.addf %1290, %1293 : vector<16x16xf32>
    %c122_430 = arith.constant 122 : index
    %1295 = memref.load %arg5[%c122_430] : memref<144xf32, #tpu.memory_space<smem>>
    %1296 = vector.broadcast %1295 : f32 to vector<16x16xf32>
    %1297 = arith.mulf %1296, %727 : vector<16x16xf32>
    %1298 = arith.addf %1294, %1297 : vector<16x16xf32>
    %c123_431 = arith.constant 123 : index
    %1299 = memref.load %arg5[%c123_431] : memref<144xf32, #tpu.memory_space<smem>>
    %1300 = vector.broadcast %1299 : f32 to vector<16x16xf32>
    %1301 = arith.mulf %1300, %729 : vector<16x16xf32>
    %1302 = arith.addf %1298, %1301 : vector<16x16xf32>
    %c124_432 = arith.constant 124 : index
    %1303 = memref.load %arg5[%c124_432] : memref<144xf32, #tpu.memory_space<smem>>
    %1304 = vector.broadcast %1303 : f32 to vector<16x16xf32>
    %1305 = arith.mulf %1304, %731 : vector<16x16xf32>
    %1306 = arith.addf %1302, %1305 : vector<16x16xf32>
    %c125_433 = arith.constant 125 : index
    %1307 = memref.load %arg5[%c125_433] : memref<144xf32, #tpu.memory_space<smem>>
    %1308 = vector.broadcast %1307 : f32 to vector<16x16xf32>
    %1309 = arith.mulf %1308, %733 : vector<16x16xf32>
    %1310 = arith.addf %1306, %1309 : vector<16x16xf32>
    %c126_434 = arith.constant 126 : index
    %1311 = memref.load %arg5[%c126_434] : memref<144xf32, #tpu.memory_space<smem>>
    %1312 = vector.broadcast %1311 : f32 to vector<16x16xf32>
    %1313 = arith.mulf %1312, %735 : vector<16x16xf32>
    %1314 = arith.addf %1310, %1313 : vector<16x16xf32>
    %c127_435 = arith.constant 127 : index
    %1315 = memref.load %arg5[%c127_435] : memref<144xf32, #tpu.memory_space<smem>>
    %1316 = vector.broadcast %1315 : f32 to vector<16x16xf32>
    %1317 = arith.mulf %1316, %737 : vector<16x16xf32>
    %1318 = arith.addf %1314, %1317 : vector<16x16xf32>
    %c128_436 = arith.constant 128 : index
    %1319 = memref.load %arg5[%c128_436] : memref<144xf32, #tpu.memory_space<smem>>
    %1320 = vector.broadcast %1319 : f32 to vector<16x16xf32>
    %1321 = arith.mulf %1320, %739 : vector<16x16xf32>
    %1322 = arith.addf %1318, %1321 : vector<16x16xf32>
    %c129_437 = arith.constant 129 : index
    %1323 = memref.load %arg5[%c129_437] : memref<144xf32, #tpu.memory_space<smem>>
    %1324 = vector.broadcast %1323 : f32 to vector<16x16xf32>
    %1325 = arith.mulf %1324, %741 : vector<16x16xf32>
    %1326 = arith.addf %1322, %1325 : vector<16x16xf32>
    %c130_438 = arith.constant 130 : index
    %1327 = memref.load %arg5[%c130_438] : memref<144xf32, #tpu.memory_space<smem>>
    %1328 = vector.broadcast %1327 : f32 to vector<16x16xf32>
    %1329 = arith.mulf %1328, %743 : vector<16x16xf32>
    %1330 = arith.addf %1326, %1329 : vector<16x16xf32>
    %c131_439 = arith.constant 131 : index
    %1331 = memref.load %arg5[%c131_439] : memref<144xf32, #tpu.memory_space<smem>>
    %1332 = vector.broadcast %1331 : f32 to vector<16x16xf32>
    %1333 = arith.mulf %1332, %745 : vector<16x16xf32>
    %1334 = arith.addf %1330, %1333 : vector<16x16xf32>
    %c132_440 = arith.constant 132 : index
    %1335 = memref.load %arg5[%c132_440] : memref<144xf32, #tpu.memory_space<smem>>
    %1336 = vector.broadcast %1335 : f32 to vector<16x16xf32>
    %1337 = arith.mulf %1336, %747 : vector<16x16xf32>
    %1338 = arith.addf %1334, %1337 : vector<16x16xf32>
    %c133_441 = arith.constant 133 : index
    %1339 = memref.load %arg5[%c133_441] : memref<144xf32, #tpu.memory_space<smem>>
    %1340 = vector.broadcast %1339 : f32 to vector<16x16xf32>
    %1341 = arith.mulf %1340, %749 : vector<16x16xf32>
    %1342 = arith.addf %1338, %1341 : vector<16x16xf32>
    %c134_442 = arith.constant 134 : index
    %1343 = memref.load %arg5[%c134_442] : memref<144xf32, #tpu.memory_space<smem>>
    %1344 = vector.broadcast %1343 : f32 to vector<16x16xf32>
    %1345 = arith.mulf %1344, %751 : vector<16x16xf32>
    %1346 = arith.addf %1342, %1345 : vector<16x16xf32>
    %c135_443 = arith.constant 135 : index
    %1347 = memref.load %arg5[%c135_443] : memref<144xf32, #tpu.memory_space<smem>>
    %1348 = vector.broadcast %1347 : f32 to vector<16x16xf32>
    %1349 = arith.mulf %1348, %753 : vector<16x16xf32>
    %1350 = arith.addf %1346, %1349 : vector<16x16xf32>
    %c136_444 = arith.constant 136 : index
    %1351 = memref.load %arg5[%c136_444] : memref<144xf32, #tpu.memory_space<smem>>
    %1352 = vector.broadcast %1351 : f32 to vector<16x16xf32>
    %1353 = arith.mulf %1352, %755 : vector<16x16xf32>
    %1354 = arith.addf %1350, %1353 : vector<16x16xf32>
    %c137_445 = arith.constant 137 : index
    %1355 = memref.load %arg5[%c137_445] : memref<144xf32, #tpu.memory_space<smem>>
    %1356 = vector.broadcast %1355 : f32 to vector<16x16xf32>
    %1357 = arith.mulf %1356, %757 : vector<16x16xf32>
    %1358 = arith.addf %1354, %1357 : vector<16x16xf32>
    %c138_446 = arith.constant 138 : index
    %1359 = memref.load %arg5[%c138_446] : memref<144xf32, #tpu.memory_space<smem>>
    %1360 = vector.broadcast %1359 : f32 to vector<16x16xf32>
    %1361 = arith.mulf %1360, %759 : vector<16x16xf32>
    %1362 = arith.addf %1358, %1361 : vector<16x16xf32>
    %c139_447 = arith.constant 139 : index
    %1363 = memref.load %arg5[%c139_447] : memref<144xf32, #tpu.memory_space<smem>>
    %1364 = vector.broadcast %1363 : f32 to vector<16x16xf32>
    %1365 = arith.mulf %1364, %761 : vector<16x16xf32>
    %1366 = arith.addf %1362, %1365 : vector<16x16xf32>
    %c140_448 = arith.constant 140 : index
    %1367 = memref.load %arg5[%c140_448] : memref<144xf32, #tpu.memory_space<smem>>
    %1368 = vector.broadcast %1367 : f32 to vector<16x16xf32>
    %1369 = arith.mulf %1368, %763 : vector<16x16xf32>
    %1370 = arith.addf %1366, %1369 : vector<16x16xf32>
    %c141_449 = arith.constant 141 : index
    %1371 = memref.load %arg5[%c141_449] : memref<144xf32, #tpu.memory_space<smem>>
    %1372 = vector.broadcast %1371 : f32 to vector<16x16xf32>
    %1373 = arith.mulf %1372, %765 : vector<16x16xf32>
    %1374 = arith.addf %1370, %1373 : vector<16x16xf32>
    %c142_450 = arith.constant 142 : index
    %1375 = memref.load %arg5[%c142_450] : memref<144xf32, #tpu.memory_space<smem>>
    %1376 = vector.broadcast %1375 : f32 to vector<16x16xf32>
    %1377 = arith.mulf %1376, %767 : vector<16x16xf32>
    %1378 = arith.addf %1374, %1377 : vector<16x16xf32>
    %c143_451 = arith.constant 143 : index
    %1379 = memref.load %arg5[%c143_451] : memref<144xf32, #tpu.memory_space<smem>>
    %1380 = vector.broadcast %1379 : f32 to vector<16x16xf32>
    %1381 = arith.mulf %1380, %769 : vector<16x16xf32>
    %1382 = arith.addf %1378, %1381 : vector<16x16xf32>
    %c3_452 = arith.constant 3 : index
    %1383 = memref.load %arg6[%c3_452] : memref<4xf32, #tpu.memory_space<smem>>
    %1384 = vector.broadcast %1383 : f32 to vector<16x16xf32>
    %1385 = arith.mulf %1382, %1384 : vector<16x16xf32>
    %c3_453 = arith.constant 3 : index
    %1386 = memref.load %arg7[%c3_453] : memref<4xf32, #tpu.memory_space<smem>>
    %1387 = vector.broadcast %1386 : f32 to vector<16x16xf32>
    %1388 = arith.addf %1385, %1387 : vector<16x16xf32>
    %cst_454 = arith.constant 0.000000e+00 : f32
    %1389 = vector.broadcast %cst_454 : f32 to vector<16x16xf32>
    %1390 = arith.maximumf %1388, %1389 : vector<16x16xf32>
    %c0_455 = arith.constant 0 : index
    %c3_456 = arith.constant 3 : index
    %c0_457 = arith.constant 0 : index
    %c0_458 = arith.constant 0 : index
    %1391 = vector.load %arg8[%c0_455, %c3_456, %c0_457, %c0_458] : memref<1x4x16x16xf32, #tpu.memory_space<vmem>>, vector<1x1x16x16xf32>
    %1392 = vector.shape_cast %1391 : vector<1x1x16x16xf32> to vector<16x16xf32>
    %1393 = vector.shape_cast %1390 : vector<16x16xf32> to vector<1x1x16x16xf32>
    tpu.vector_store %arg8[%c0_455, %c3_456, %c0_457, %c0_458], %1393 {strides = array<i32>} : memref<1x4x16x16xf32, #tpu.memory_space<vmem>>, vector<1x1x16x16xf32>,
    return
  }
  func.func @transform_0(%arg0: i32) -> (i32, i32, i32, i32) {
    %c0_i32 = arith.constant 0 : i32
    %c0_i32_0 = arith.constant 0 : i32
    %c0_i32_1 = arith.constant 0 : i32
    %c0_i32_2 = arith.constant 0 : i32
    return %arg0, %c0_i32, %c0_i32_0, %c0_i32_1 : i32, i32, i32, i32
  }
  func.func @transform_1(%arg0: i32) -> i32 {
    %c0_i32 = arith.constant 0 : i32
    %c0_i32_0 = arith.constant 0 : i32
    return %c0_i32 : i32
  }
  func.func @transform_2(%arg0: i32) -> i32 {
    %c0_i32 = arith.constant 0 : i32
    %c0_i32_0 = arith.constant 0 : i32
    return %c0_i32 : i32
  }
  func.func @transform_3(%arg0: i32) -> i32 {
    %c0_i32 = arith.constant 0 : i32
    %c0_i32_0 = arith.constant 0 : i32
    return %c0_i32 : i32
  }
  func.func @transform_4(%arg0: i32) -> i32 {
    %c0_i32 = arith.constant 0 : i32
    %c0_i32_0 = arith.constant 0 : i32
    return %c0_i32 : i32
  }
  func.func @transform_5(%arg0: i32) -> i32 {
    %c0_i32 = arith.constant 0 : i32
    %c0_i32_0 = arith.constant 0 : i32
    return %c0_i32 : i32
  }
  func.func @transform_6(%arg0: i32) -> i32 {
    %c0_i32 = arith.constant 0 : i32
    %c0_i32_0 = arith.constant 0 : i32
    return %c0_i32 : i32
  }
  func.func @transform_7(%arg0: i32) -> (i32, i32, i32, i32) {
    %c0_i32 = arith.constant 0 : i32
    %c0_i32_0 = arith.constant 0 : i32
    %c0_i32_1 = arith.constant 0 : i32
    %c0_i32_2 = arith.constant 0 : i32
    return %arg0, %c0_i32, %c0_i32_0, %c0_i32_1 : i32, i32, i32, i32
  }
}

</mosaic_0001>

<llo_original>
// kernel: tpu_custom_call.1
$region0: #{tpu_custom_call.1}
  #allocation0 [shape = 'u32[]', space=smem, size = 0x4, offset = 0x4, fixed_abs, tag = 'smem constant byte address 0x4 - core index']
  #allocation1 [shape = 'u32[144,128]{1,0:T(1,128)}', space=vmem, size = 0x12000, scoped, tag = 'internal scratch']
  #allocation2 [shape = 'f32[4,18,18]{2,1,0:T(8,128)}', space=vmem, size = 0xc000, scoped, tag = 'scratch operand']
  %s0 = inlined_call_operand.vmem [shape: f32[2,4,18,18], index: 0, kind: input, shape index: {}]
  %s1 = inlined_call_operand.vmem [shape: f32[144], index: 1, kind: input, shape index: {}]
  %s2 = inlined_call_operand.vmem [shape: f32[4], index: 2, kind: input, shape index: {}]
  %s3 = inlined_call_operand.vmem [shape: f32[4], index: 3, kind: input, shape index: {}]
  %s4 = inlined_call_operand.vmem [shape: f32[144], index: 4, kind: input, shape index: {}]
  %s5 = inlined_call_operand.vmem [shape: f32[4], index: 5, kind: input, shape index: {}]
  %s6 = inlined_call_operand.vmem [shape: f32[4], index: 6, kind: input, shape index: {}]
  %s7 = inlined_call_operand.hbm [shape: f32[2,4,16,16], index: 7, kind: output, shape index: {}]
  %s8 = sld [smem:[#allocation0]]
  $region85: #{tpu_custom_call.1} parent=0
    _
  %s10 = ssub.s32 1, %s8
  %s11 = scalar_select 0, %s10, %s8
  $region1: #{tpu_custom_call.1} parent=0
    #allocation3 [shape = 'u8[1024]{0}', space=smem, size = 0x400, scoped, tag = 'input window, operand 1, single buffered']
    #allocation4 [shape = 's32[2]{0}', space=sflag, size = 0x8, scoped, tag = 'scoped memory for tpu_custom_call.1']
    #allocation5 [shape = 's32[2]{0}', space=sflag, size = 0x8, scoped, tag = 'scoped memory for tpu_custom_call.1']
    #allocation6 [shape = 'u8[512]{0}', space=smem, size = 0x200, scoped, tag = 'input window, operand 2, single buffered']
    #allocation7 [shape = 's32[1]{0}', space=sflag, size = 0x4, scoped, tag = 'scoped memory for tpu_custom_call.1']
    #allocation8 [shape = 'u8[512]{0}', space=smem, size = 0x200, scoped, tag = 'input window, operand 3, single buffered']
    #allocation9 [shape = 'u8[1024]{0}', space=smem, size = 0x400, scoped, tag = 'input window, operand 4, single buffered']
    #allocation10 [shape = 's32[1]{0}', space=sflag, size = 0x4, scoped, tag = 'scoped memory for tpu_custom_call.1']
    #allocation11 [shape = 'u8[512]{0}', space=smem, size = 0x200, scoped, tag = 'input window, operand 5, single buffered']
    #allocation12 [shape = 'u8[512]{0}', space=smem, size = 0x200, scoped, tag = 'input window, operand 6, single buffered']
    #allocation13 [shape = 's32[1]{0}', space=sflag, size = 0x4, scoped, tag = 'scoped memory for tpu_custom_call.1']
    #allocation14 [shape = 'u8[65536]{0}', space=vmem, size = 0x10000, scoped, tag = 'output window, operand 0']
    %12 = vsyncpa [#allocation5], 0
    %13 = vsyncpa [#allocation7], 0
    %14 = vsyncpa [#allocation10], 0
    %15 = vsyncpa [#allocation13], 0
    %16 = vsyncpa [#allocation4], 0
    %s17 = scalar_lea.sflag [#allocation4], 1
    %18 = vsyncpa %s17, 0
    loop: start=0, step=1, limit=4
    $region2: #{tpu_custom_call.1} parent=1 // loop_pre_header
      _
    $region3: #{tpu_custom_call.1} parent=1 // loop_header
      %s20 = sphi 0, %s24
      %p21 = scmp.ge.s32.totalorder %s20, 4
      %s30 = sphi 0, %s32
      %s33 = sphi 0, %s30
      %s34 = sphi 0, %s33
      %s50 = sphi 0, %s34
      %s54 = sphi 0, %s54
      %s56 = sphi 0, %s54
      %s57 = sphi 0, %s56
      %s71 = sphi 0, %s57
      %s75 = sphi 0, %s75
      %s77 = sphi 0, %s75
      %s78 = sphi 0, %s77
      %s92 = sphi 0, %s78
      %s96 = sphi 0, %s96
      %s98 = sphi 0, %s96
      %s99 = sphi 0, %s98
      %s113 = sphi 0, %s99
      %s117 = sphi 0, %s117
      %s119 = sphi 0, %s117
      %s120 = sphi 0, %s119
      %s134 = sphi 0, %s120
      %s138 = sphi 0, %s138
      %s140 = sphi 0, %s138
      %s141 = sphi 0, %s140
      %s155 = sphi 0, %s141
      %s159 = sphi 0, %s159
      %s161 = sphi 0, %s159
      %s162 = sphi 0, %s161
      %s176 = sphi 0, %s162
      %s182 = sphi 0, %s184
      %s185 = sphi 0, %s182
      %s186 = sphi 0, %s185
      %s202 = sphi 0, %s186
    $region4: #{tpu_custom_call.1} parent=1 // loop_header_branch
      %23 = sbr.rel (%p21) target = $region8
    $region5: #{tpu_custom_call.1} parent=1 // loop_body
      %s25 = ssub.s32 %s20, 1
      %s26 = ssub.s32 %s20, 2
      %s27 = sadd.s32 %s20, 1
      %s28 = ssub.s32 %s20, %s27
      %p29 = scmp.eq.s32.totalorder %s28, 0
      %s31 = sadd.s32 %s30, 1
      %s32 = scalar_select %p29, %s30, %s31
      %p35 = pneg %p29
      %p36 = scmp.eq.s32.totalorder %s20, 1
      %p37 = por %p35, %p36
      %p38 = scmp.ne.s32.totalorder %s30, %s33
      %p39 = scmp.eq.s32.totalorder %s20, 0
      %p40 = por %p38, %p39
      %p41 = scmp.ne.s32.totalorder %s30, %s33
      %p42 = scmp.eq.s32.totalorder %s25, 1
      %p43 = por %p41, %p42
      %p44 = scmp.ne.s32.totalorder %s33, %s34
      %p45 = scmp.eq.s32.totalorder %s25, 0
      %p46 = por %p44, %p45
      %p47 = scmp.ne.s32.totalorder %s33, %s34
      %p48 = scmp.eq.s32.totalorder %s26, 1
      %p49 = por %p47, %p48
      %p51 = scmp.ne.s32.totalorder %s34, %s50
      %p52 = scmp.eq.s32.totalorder %s26, 0
      %p53 = por %p51, %p52
      %s55 = sadd.s32 %s54, 1
      %p58 = scmp.eq.s32.totalorder %s20, 1
      %p59 = scmp.ne.s32.totalorder %s54, %s56
      %p60 = scmp.eq.s32.totalorder %s20, 0
      %p61 = por %p59, %p60
      %p62 = scmp.ne.s32.totalorder %s54, %s56
      %p63 = scmp.eq.s32.totalorder %s25, 1
      %p64 = por %p62, %p63
      %p65 = scmp.ne.s32.totalorder %s56, %s57
      %p66 = scmp.eq.s32.totalorder %s25, 0
      %p67 = por %p65, %p66
      %p68 = scmp.ne.s32.totalorder %s56, %s57
      %p69 = scmp.eq.s32.totalorder %s26, 1
      %p70 = por %p68, %p69
      %p72 = scmp.ne.s32.totalorder %s57, %s71
      %p73 = scmp.eq.s32.totalorder %s26, 0
      %p74 = por %p72, %p73
      %s76 = sadd.s32 %s75, 1
      %p79 = scmp.eq.s32.totalorder %s20, 1
      %p80 = scmp.ne.s32.totalorder %s75, %s77
      %p81 = scmp.eq.s32.totalorder %s20, 0
      %p82 = por %p80, %p81
      %p83 = scmp.ne.s32.totalorder %s75, %s77
      %p84 = scmp.eq.s32.totalorder %s25, 1
      %p85 = por %p83, %p84
      %p86 = scmp.ne.s32.totalorder %s77, %s78
      %p87 = scmp.eq.s32.totalorder %s25, 0
      %p88 = por %p86, %p87
      %p89 = scmp.ne.s32.totalorder %s77, %s78
      %p90 = scmp.eq.s32.totalorder %s26, 1
      %p91 = por %p89, %p90
      %p93 = scmp.ne.s32.totalorder %s78, %s92
      %p94 = scmp.eq.s32.totalorder %s26, 0
      %p95 = por %p93, %p94
      %s97 = sadd.s32 %s96, 1
      %p100 = scmp.eq.s32.totalorder %s20, 1
      %p101 = scmp.ne.s32.totalorder %s96, %s98
      %p102 = scmp.eq.s32.totalorder %s20, 0
      %p103 = por %p101, %p102
      %p104 = scmp.ne.s32.totalorder %s96, %s98
      %p105 = scmp.eq.s32.totalorder %s25, 1
      %p106 = por %p104, %p105
      %p107 = scmp.ne.s32.totalorder %s98, %s99
      %p108 = scmp.eq.s32.totalorder %s25, 0
      %p109 = por %p107, %p108
      %p110 = scmp.ne.s32.totalorder %s98, %s99
      %p111 = scmp.eq.s32.totalorder %s26, 1
      %p112 = por %p110, %p111
      %p114 = scmp.ne.s32.totalorder %s99, %s113
      %p115 = scmp.eq.s32.totalorder %s26, 0
      %p116 = por %p114, %p115
      %s118 = sadd.s32 %s117, 1
      %p121 = scmp.eq.s32.totalorder %s20, 1
      %p122 = scmp.ne.s32.totalorder %s117, %s119
      %p123 = scmp.eq.s32.totalorder %s20, 0
      %p124 = por %p122, %p123
      %p125 = scmp.ne.s32.totalorder %s117, %s119
      %p126 = scmp.eq.s32.totalorder %s25, 1
      %p127 = por %p125, %p126
      %p128 = scmp.ne.s32.totalorder %s119, %s120
      %p129 = scmp.eq.s32.totalorder %s25, 0
      %p130 = por %p128, %p129
      %p131 = scmp.ne.s32.totalorder %s119, %s120
      %p132 = scmp.eq.s32.totalorder %s26, 1
      %p133 = por %p131, %p132
      %p135 = scmp.ne.s32.totalorder %s120, %s134
      %p136 = scmp.eq.s32.totalorder %s26, 0
      %p137 = por %p135, %p136
      %s139 = sadd.s32 %s138, 1
      %p142 = scmp.eq.s32.totalorder %s20, 1
      %p143 = scmp.ne.s32.totalorder %s138, %s140
      %p144 = scmp.eq.s32.totalorder %s20, 0
      %p145 = por %p143, %p144
      %p146 = scmp.ne.s32.totalorder %s138, %s140
      %p147 = scmp.eq.s32.totalorder %s25, 1
      %p148 = por %p146, %p147
      %p149 = scmp.ne.s32.totalorder %s140, %s141
      %p150 = scmp.eq.s32.totalorder %s25, 0
      %p151 = por %p149, %p150
      %p152 = scmp.ne.s32.totalorder %s140, %s141
      %p153 = scmp.eq.s32.totalorder %s26, 1
      %p154 = por %p152, %p153
      %p156 = scmp.ne.s32.totalorder %s141, %s155
      %p157 = scmp.eq.s32.totalorder %s26, 0
      %p158 = por %p156, %p157
      %s160 = sadd.s32 %s159, 1
      %p163 = scmp.eq.s32.totalorder %s20, 1
      %p164 = scmp.ne.s32.totalorder %s159, %s161
      %p165 = scmp.eq.s32.totalorder %s20, 0
      %p166 = por %p164, %p165
      %p167 = scmp.ne.s32.totalorder %s159, %s161
      %p168 = scmp.eq.s32.totalorder %s25, 1
      %p169 = por %p167, %p168
      %p170 = scmp.ne.s32.totalorder %s161, %s162
      %p171 = scmp.eq.s32.totalorder %s25, 0
      %p172 = por %p170, %p171
      %p173 = scmp.ne.s32.totalorder %s161, %s162
      %p174 = scmp.eq.s32.totalorder %s26, 1
      %p175 = por %p173, %p174
      %p177 = scmp.ne.s32.totalorder %s162, %s176
      %p178 = scmp.eq.s32.totalorder %s26, 0
      %p179 = por %p177, %p178
      %s180 = ssub.s32 %s20, %s27
      %p181 = scmp.eq.s32.totalorder %s180, 0
      %s183 = sadd.s32 %s182, 1
      %s184 = scalar_select %p181, %s182, %s183
      %p187 = pneg %p181
      %p188 = scmp.eq.s32.totalorder %s20, 1
      %p189 = por %p187, %p188
      %p190 = scmp.ne.s32.totalorder %s182, %s185
      %p191 = scmp.eq.s32.totalorder %s20, 0
      %p192 = por %p190, %p191
      %p193 = scmp.ne.s32.totalorder %s182, %s185
      %p194 = scmp.eq.s32.totalorder %s25, 1
      %p195 = por %p193, %p194
      %p196 = scmp.ne.s32.totalorder %s185, %s186
      %p197 = scmp.eq.s32.totalorder %s25, 0
      %p198 = por %p196, %p197
      %p199 = scmp.ne.s32.totalorder %s185, %s186
      %p200 = scmp.eq.s32.totalorder %s26, 1
      %p201 = por %p199, %p200
      %p203 = scmp.ne.s32.totalorder %s186, %s202
      %p204 = scmp.eq.s32.totalorder %s26, 0
      %p205 = por %p203, %p204
      %p206 = scmp.le.s32.totalorder 1, %s20
      %p207 = scmp.lt.s32.totalorder %s20, 3
      %p208 = pnand %p206, %p207
      %p209 = pneg %p208
      // Predicated region
      $region9: #{tpu_custom_call.1} parent=5 // pred_check
        _
      $region10: #{tpu_custom_call.1} parent=5 // pred_check_branch
        %211 = sbr.rel (%p208) target = $region12
      $region11: #{tpu_custom_call.1} parent=5 // pred_region
        %s212 = ssub.s32 %s20, 1
        // Predicated region
        $region13: #{tpu_custom_call.1} parent=11 // pred_check
          %p213 = pneg %p67
        $region14: #{tpu_custom_call.1} parent=11 // pred_check_branch
          %215 = sbr.rel (%p213) target = $region16
        $region15: #{tpu_custom_call.1} parent=11 // pred_region
          %s217 = ssub.s32 32, 32
          %218 = vsyncadd [#allocation5], %s217
          %s220 = sshll.u32 %s1, 4
          %s221 = int_to_ptr.vmem [resolvable:$true] %s220
          %223 = dma.vmem_to_smem %s221, 32, [#allocation3], [#allocation5]
        $region16: #{tpu_custom_call.1} parent=11 // pred_fallthru
          _
        // Predicated region
        $region17: #{tpu_custom_call.1} parent=11 // pred_check
          %p224 = pneg %p88
        $region18: #{tpu_custom_call.1} parent=11 // pred_check_branch
          %226 = sbr.rel (%p224) target = $region20
        $region19: #{tpu_custom_call.1} parent=11 // pred_region
          %s228 = ssub.s32 16, 16
          %229 = vsyncadd [#allocation7], %s228
          %s231 = sshll.u32 %s2, 4
          %s232 = int_to_ptr.vmem [resolvable:$true] %s231
          %234 = dma.vmem_to_smem %s232, 16, [#allocation6], [#allocation7]
        $region20: #{tpu_custom_call.1} parent=11 // pred_fallthru
          _
        // Predicated region
        $region21: #{tpu_custom_call.1} parent=11 // pred_check
          %p235 = pneg %p109
        $region22: #{tpu_custom_call.1} parent=11 // pred_check_branch
          %237 = sbr.rel (%p235) target = $region24
        $region23: #{tpu_custom_call.1} parent=11 // pred_region
          %s239 = ssub.s32 16, 16
          %240 = vsyncadd [#allocation7], %s239
          %s242 = sshll.u32 %s3, 4
          %s243 = int_to_ptr.vmem [resolvable:$true] %s242
          %245 = dma.vmem_to_smem %s243, 16, [#allocation8], [#allocation7]
        $region24: #{tpu_custom_call.1} parent=11 // pred_fallthru
          _
        // Predicated region
        $region25: #{tpu_custom_call.1} parent=11 // pred_check
          %p246 = pneg %p130
        $region26: #{tpu_custom_call.1} parent=11 // pred_check_branch
          %248 = sbr.rel (%p246) target = $region28
        $region27: #{tpu_custom_call.1} parent=11 // pred_region
          %s250 = ssub.s32 32, 32
          %251 = vsyncadd [#allocation10], %s250
          %s253 = sshll.u32 %s4, 4
          %s254 = int_to_ptr.vmem [resolvable:$true] %s253
          %256 = dma.vmem_to_smem %s254, 32, [#allocation9], [#allocation10]
        $region28: #{tpu_custom_call.1} parent=11 // pred_fallthru
          _
        // Predicated region
        $region29: #{tpu_custom_call.1} parent=11 // pred_check
          %p257 = pneg %p151
        $region30: #{tpu_custom_call.1} parent=11 // pred_check_branch
          %259 = sbr.rel (%p257) target = $region32
        $region31: #{tpu_custom_call.1} parent=11 // pred_region
          %s261 = ssub.s32 16, 16
          %262 = vsyncadd [#allocation10], %s261
          %s264 = sshll.u32 %s5, 4
          %s265 = int_to_ptr.vmem [resolvable:$true] %s264
          %267 = dma.vmem_to_smem %s265, 16, [#allocation11], [#allocation10]
        $region32: #{tpu_custom_call.1} parent=11 // pred_fallthru
          _
        // Predicated region
        $region33: #{tpu_custom_call.1} parent=11 // pred_check
          %p268 = pneg %p172
        $region34: #{tpu_custom_call.1} parent=11 // pred_check_branch
          %270 = sbr.rel (%p268) target = $region36
        $region35: #{tpu_custom_call.1} parent=11 // pred_region
          %s272 = ssub.s32 16, 16
          %273 = vsyncadd [#allocation13], %s272
          %s275 = sshll.u32 %s6, 4
          %s276 = int_to_ptr.vmem [resolvable:$true] %s275
          %278 = dma.vmem_to_smem %s276, 16, [#allocation12], [#allocation13]
        $region36: #{tpu_custom_call.1} parent=11 // pred_fallthru
          _
      $region12: #{tpu_custom_call.1} parent=5 // pred_fallthru
        _
      %p279 = scmp.lt.s32.totalorder %s20, 2
      // Predicated region
      $region37: #{tpu_custom_call.1} parent=5 // pred_check
        %p280 = pneg %p279
      $region38: #{tpu_custom_call.1} parent=5 // pred_check_branch
        %282 = sbr.rel (%p280) target = $region40
      $region39: #{tpu_custom_call.1} parent=5 // pred_region
        // Predicated region
        $region41: #{tpu_custom_call.1} parent=39 // pred_check
          %p283 = pneg %p40
        $region42: #{tpu_custom_call.1} parent=39 // pred_check_branch
          %285 = sbr.rel (%p283) target = $region44
        $region43: #{tpu_custom_call.1} parent=39 // pred_region
          %p286 = scmp.lt.s32.totalorder %s20, 1
          %s287 = scalar_select %p286, %s20, 1
          %s288 = smul.addr %s287, 12
          %s289 = smul.addr %s288, 8
          %s290 = scalar_lea.vmem %s0, %s289
        $region44: #{tpu_custom_call.1} parent=39 // pred_fallthru
          _
      $region40: #{tpu_custom_call.1} parent=5 // pred_fallthru
        _
      %p291 = scmp.le.s32.totalorder 1, %s20
      %p292 = scmp.lt.s32.totalorder %s20, 3
      %p293 = pnand %p291, %p292
      %p294 = pneg %p293
      // Predicated region
      $region45: #{tpu_custom_call.1} parent=5 // pred_check
        _
      $region46: #{tpu_custom_call.1} parent=5 // pred_check_branch
        %296 = sbr.rel (%p293) target = $region48
      $region47: #{tpu_custom_call.1} parent=5 // pred_region
        %s297 = ssub.s32 %s20, 1
        // Predicated region
        $region49: #{tpu_custom_call.1} parent=47 // pred_check
          %p298 = pneg %p67
        $region50: #{tpu_custom_call.1} parent=47 // pred_check_branch
          %300 = sbr.rel (%p298) target = $region52
        $region51: #{tpu_custom_call.1} parent=47 // pred_region
          %301 = dma.done [#allocation5], 32
        $region52: #{tpu_custom_call.1} parent=47 // pred_fallthru
          _
        // Predicated region
        $region53: #{tpu_custom_call.1} parent=47 // pred_check
          %p302 = pneg %p88
        $region54: #{tpu_custom_call.1} parent=47 // pred_check_branch
          %304 = sbr.rel (%p302) target = $region56
        $region55: #{tpu_custom_call.1} parent=47 // pred_region
          %305 = dma.done [#allocation7], 16
        $region56: #{tpu_custom_call.1} parent=47 // pred_fallthru
          _
        // Predicated region
        $region57: #{tpu_custom_call.1} parent=47 // pred_check
          %p306 = pneg %p109
        $region58: #{tpu_custom_call.1} parent=47 // pred_check_branch
          %308 = sbr.rel (%p306) target = $region60
        $region59: #{tpu_custom_call.1} parent=47 // pred_region
          %309 = dma.done [#allocation7], 16
        $region60: #{tpu_custom_call.1} parent=47 // pred_fallthru
          _
        // Predicated region
        $region61: #{tpu_custom_call.1} parent=47 // pred_check
          %p310 = pneg %p130
        $region62: #{tpu_custom_call.1} parent=47 // pred_check_branch
          %312 = sbr.rel (%p310) target = $region64
        $region63: #{tpu_custom_call.1} parent=47 // pred_region
          %313 = dma.done [#allocation10], 32
        $region64: #{tpu_custom_call.1} parent=47 // pred_fallthru
          _
        // Predicated region
        $region65: #{tpu_custom_call.1} parent=47 // pred_check
          %p314 = pneg %p151
        $region66: #{tpu_custom_call.1} parent=47 // pred_check_branch
          %316 = sbr.rel (%p314) target = $region68
        $region67: #{tpu_custom_call.1} parent=47 // pred_region
          %317 = dma.done [#allocation10], 16
        $region68: #{tpu_custom_call.1} parent=47 // pred_fallthru
          _
        // Predicated region
        $region69: #{tpu_custom_call.1} parent=47 // pred_check
          %p318 = pneg %p172
        $region70: #{tpu_custom_call.1} parent=47 // pred_check_branch
          %320 = sbr.rel (%p318) target = $region72
        $region71: #{tpu_custom_call.1} parent=47 // pred_region
          %321 = dma.done [#allocation13], 16
        $region72: #{tpu_custom_call.1} parent=47 // pred_fallthru
          _
        %322 = sfence
        %p323 = scmp.lt.s32.totalorder %s25, 1
        %s324 = scalar_select %p323, %s25, 1
        %s325 = smul.addr %s324, 12
        %s326 = smul.addr %s325, 8
        %s327 = scalar_lea.vmem %s0, %s326
        %p328 = pneg %p46
        %p329 = pneg %p43
        %p330 = pneg %p67
        %p331 = pneg %p64
        %p332 = pneg %p88
        %p333 = pneg %p85
        %p334 = pneg %p109
        %p335 = pneg %p106
        %p336 = pneg %p130
        %p337 = pneg %p127
        %p338 = pneg %p151
        %p339 = pneg %p148
        %p340 = pneg %p172
        %p341 = pneg %p169
        %p342 = pneg %p198
        %p343 = pneg %p195
        %s344 = sand.u32 %s185, 1
        %s345 = scalar_lea.sflag [#allocation4], %s344
        %s346 = sand.u32 %s185, 1
        %s347 = smul.addr %s346, 64
        %s348 = scalar_lea.vmem [#allocation14], %s347
        %p349 = scmp.lt.s32.totalorder %s25, 1
        %s350 = scalar_select %p349, %s25, 1
        %s351 = smul.addr %s350, 12
        %s352 = smul.addr %s351, 8
        %s353 = scalar_lea.vmem %s0, %s352
        %vm354 = vcmask 146432
        %355 = vst.msk [vmem:[#allocation2] sm:$0xff] %vm354, 0.0
        %356 = vst.msk [vmem:[#allocation2 + $0x8] sm:$0xff] %vm354, 0.0
        %vm357 = vcmask 140288
        %358 = vst.msk [vmem:[#allocation2 + $0x10] sm:$0x3] %vm357, 0.0
        %359 = vst.msk [vmem:[#allocation2 + $0x18] sm:$0xff] %vm354, 0.0
        %360 = vst.msk [vmem:[#allocation2 + $0x20] sm:$0xff] %vm354, 0.0
        %361 = vst.msk [vmem:[#allocation2 + $0x28] sm:$0x3] %vm357, 0.0
        %362 = vst.msk [vmem:[#allocation2 + $0x30] sm:$0xff] %vm354, 0.0
        %363 = vst.msk [vmem:[#allocation2 + $0x38] sm:$0xff] %vm354, 0.0
        %364 = vst.msk [vmem:[#allocation2 + $0x40] sm:$0x3] %vm357, 0.0
        %365 = vst.msk [vmem:[#allocation2 + $0x48] sm:$0xff] %vm354, 0.0
        %366 = vst.msk [vmem:[#allocation2 + $0x50] sm:$0xff] %vm354, 0.0
        %367 = vst.msk [vmem:[#allocation2 + $0x58] sm:$0x3] %vm357, 0.0
        %v368 = vld [vmem:[%s353] sm:$0xff]
        %v369 = vld [vmem:[%s353 + $0x8] sm:$0xff]
        %v370 = vld [vmem:[%s353 + $0x1] sm:$0xff]
        %v371 = vld [vmem:[%s353 + $0x9] sm:$0xff]
        %v372 = vld [vmem:[%s353 + $0x2] sm:$0xff]
        %v373 = vld [vmem:[%s353 + $0xa] sm:$0xff]
        %s374 = scalar_lea.vmem %s353, 24
        %v375 = vld [vmem:[%s374] sm:$0xff]
        %v376 = vld [vmem:[%s374 + $0x8] sm:$0xff]
        %v377 = vld [vmem:[%s374 + $0x1] sm:$0xff]
        %v378 = vld [vmem:[%s374 + $0x9] sm:$0xff]
        %v379 = vld [vmem:[%s374 + $0x2] sm:$0xff]
        %v380 = vld [vmem:[%s374 + $0xa] sm:$0xff]
        %s381 = scalar_lea.vmem %s353, 48
        %v382 = vld [vmem:[%s381] sm:$0xff]
        %v383 = vld [vmem:[%s381 + $0x8] sm:$0xff]
        %v384 = vld [vmem:[%s381 + $0x1] sm:$0xff]
        %v385 = vld [vmem:[%s381 + $0x9] sm:$0xff]
        %v386 = vld [vmem:[%s381 + $0x2] sm:$0xff]
        %v387 = vld [vmem:[%s381 + $0xa] sm:$0xff]
        %s388 = scalar_lea.vmem %s353, 72
        %v389 = vld [vmem:[%s388] sm:$0xff]
        %v390 = vld [vmem:[%s388 + $0x8] sm:$0xff]
        %v391 = vld [vmem:[%s388 + $0x1] sm:$0xff]
        %v392 = vld [vmem:[%s388 + $0x9] sm:$0xff]
        %v393 = vld [vmem:[%s388 + $0x2] sm:$0xff]
        %v394 = vld [vmem:[%s388 + $0xa] sm:$0xff]
        %s395 = sld [smem:[#allocation3]]
        %v396 = vstv %s395
        %v397 = vmul.f32 %v396, %v368
        %v398 = vmul.f32 %v396, %v369
        %v399 = vadd.f32 %v397, 0.0
        %v400 = vadd.f32 %v398, 0.0
        %s401 = sld [smem:[#allocation3 + $0x1]]
        %v402 = vstv %s401
        %v403 = vmul.f32 %v402, %v368
        %v404 = vmul.f32 %v402, %v369
        %407 = vrot.lane.b32.xlu0 %v403, 127
        %v408 = vpop.permute.xlu0 %407
        %409 = vrot.lane.b32.xlu0 %v404, 127
        %v410 = vpop.permute.xlu0 %409
        %v413 = vadd.f32 %v399, %v408
        %v414 = vadd.f32 %v400, %v410
        %s415 = sld [smem:[#allocation3 + $0x2]]
        %v416 = vstv %s415
        %v417 = vmul.f32 %v416, %v368
        %v418 = vmul.f32 %v416, %v369
        %421 = vrot.lane.b32.xlu0 %v417, 126
        %v422 = vpop.permute.xlu0 %421
        %423 = vrot.lane.b32.xlu0 %v418, 126
        %v424 = vpop.permute.xlu0 %423
        %v427 = vadd.f32 %v413, %v422
        %v428 = vadd.f32 %v414, %v424
        %s429 = sld [smem:[#allocation3 + $0x3]]
        %v430 = vstv %s429
        %v431 = vmul.f32 %v430, %v370
        %v432 = vmul.f32 %v430, %v371
        %v433 = vadd.f32 %v427, %v431
        %v434 = vadd.f32 %v428, %v432
        %s435 = sld [smem:[#allocation3 + $0x4]]
        %v436 = vstv %s435
        %v437 = vmul.f32 %v436, %v370
        %v438 = vmul.f32 %v436, %v371
        %441 = vrot.lane.b32.xlu0 %v437, 127
        %v442 = vpop.permute.xlu0 %441
        %443 = vrot.lane.b32.xlu0 %v438, 127
        %v444 = vpop.permute.xlu0 %443
        %v447 = vadd.f32 %v433, %v442
        %v448 = vadd.f32 %v434, %v444
        %s449 = sld [smem:[#allocation3 + $0x5]]
        %v450 = vstv %s449
        %v451 = vmul.f32 %v450, %v370
        %v452 = vmul.f32 %v450, %v371
        %455 = vrot.lane.b32.xlu0 %v451, 126
        %v456 = vpop.permute.xlu0 %455
        %457 = vrot.lane.b32.xlu0 %v452, 126
        %v458 = vpop.permute.xlu0 %457
        %v461 = vadd.f32 %v447, %v456
        %v462 = vadd.f32 %v448, %v458
        %s463 = sld [smem:[#allocation3 + $0x6]]
        %v464 = vstv %s463
        %v465 = vmul.f32 %v464, %v372
        %v466 = vmul.f32 %v464, %v373
        %v467 = vadd.f32 %v461, %v465
        %v468 = vadd.f32 %v462, %v466
        %s469 = sld [smem:[#allocation3 + $0x7]]
        %v470 = vstv %s469
        %v471 = vmul.f32 %v470, %v372
        %v472 = vmul.f32 %v470, %v373
        %475 = vrot.lane.b32.xlu0 %v471, 127
        %v476 = vpop.permute.xlu0 %475
        %477 = vrot.lane.b32.xlu0 %v472, 127
        %v478 = vpop.permute.xlu0 %477
        %v481 = vadd.f32 %v467, %v476
        %v482 = vadd.f32 %v468, %v478
        %s483 = sld [smem:[#allocation3 + $0x8]]
        %v484 = vstv %s483
        %v485 = vmul.f32 %v484, %v372
        %v486 = vmul.f32 %v484, %v373
        %489 = vrot.lane.b32.xlu0 %v485, 126
        %v490 = vpop.permute.xlu0 %489
        %491 = vrot.lane.b32.xlu0 %v486, 126
        %v492 = vpop.permute.xlu0 %491
        %v495 = vadd.f32 %v481, %v490
        %v496 = vadd.f32 %v482, %v492
        %s497 = sld [smem:[#allocation3 + $0x9]]
        %v498 = vstv %s497
        %v499 = vmul.f32 %v498, %v375
        %v500 = vmul.f32 %v498, %v376
        %v501 = vadd.f32 %v495, %v499
        %v502 = vadd.f32 %v496, %v500
        %s503 = sld [smem:[#allocation3 + $0xa]]
        %v504 = vstv %s503
        %v505 = vmul.f32 %v504, %v375
        %v506 = vmul.f32 %v504, %v376
        %509 = vrot.lane.b32.xlu0 %v505, 127
        %v510 = vpop.permute.xlu0 %509
        %511 = vrot.lane.b32.xlu0 %v506, 127
        %v512 = vpop.permute.xlu0 %511
        %v515 = vadd.f32 %v501, %v510
        %v516 = vadd.f32 %v502, %v512
        %s517 = sld [smem:[#allocation3 + $0xb]]
        %v518 = vstv %s517
        %v519 = vmul.f32 %v518, %v375
        %v520 = vmul.f32 %v518, %v376
        %523 = vrot.lane.b32.xlu0 %v519, 126
        %v524 = vpop.permute.xlu0 %523
        %525 = vrot.lane.b32.xlu0 %v520, 126
        %v526 = vpop.permute.xlu0 %525
        %v529 = vadd.f32 %v515, %v524
        %v530 = vadd.f32 %v516, %v526
        %s531 = sld [smem:[#allocation3 + $0xc]]
        %v532 = vstv %s531
        %v533 = vmul.f32 %v532, %v377
        %v534 = vmul.f32 %v532, %v378
        %v535 = vadd.f32 %v529, %v533
        %v536 = vadd.f32 %v530, %v534
        %s537 = sld [smem:[#allocation3 + $0xd]]
        %v538 = vstv %s537
        %v539 = vmul.f32 %v538, %v377
        %v540 = vmul.f32 %v538, %v378
        %543 = vrot.lane.b32.xlu0 %v539, 127
        %v544 = vpop.permute.xlu0 %543
        %545 = vrot.lane.b32.xlu0 %v540, 127
        %v546 = vpop.permute.xlu0 %545
        %v549 = vadd.f32 %v535, %v544
        %v550 = vadd.f32 %v536, %v546
        %s551 = sld [smem:[#allocation3 + $0xe]]
        %v552 = vstv %s551
        %v553 = vmul.f32 %v552, %v377
        %v554 = vmul.f32 %v552, %v378
        %557 = vrot.lane.b32.xlu0 %v553, 126
        %v558 = vpop.permute.xlu0 %557
        %559 = vrot.lane.b32.xlu0 %v554, 126
        %v560 = vpop.permute.xlu0 %559
        %v563 = vadd.f32 %v549, %v558
        %v564 = vadd.f32 %v550, %v560
        %s565 = sld [smem:[#allocation3 + $0xf]]
        %v566 = vstv %s565
        %v567 = vmul.f32 %v566, %v379
        %v568 = vmul.f32 %v566, %v380
        %v569 = vadd.f32 %v563, %v567
        %v570 = vadd.f32 %v564, %v568
        %s571 = sld [smem:[#allocation3 + $0x10]]
        %v572 = vstv %s571
        %v573 = vmul.f32 %v572, %v379
        %v574 = vmul.f32 %v572, %v380
        %577 = vrot.lane.b32.xlu0 %v573, 127
        %v578 = vpop.permute.xlu0 %577
        %579 = vrot.lane.b32.xlu0 %v574, 127
        %v580 = vpop.permute.xlu0 %579
        %v583 = vadd.f32 %v569, %v578
        %v584 = vadd.f32 %v570, %v580
        %s585 = sld [smem:[#allocation3 + $0x11]]
        %v586 = vstv %s585
        %v587 = vmul.f32 %v586, %v379
        %v588 = vmul.f32 %v586, %v380
        %591 = vrot.lane.b32.xlu0 %v587, 126
        %v592 = vpop.permute.xlu0 %591
        %593 = vrot.lane.b32.xlu0 %v588, 126
        %v594 = vpop.permute.xlu0 %593
        %v597 = vadd.f32 %v583, %v592
        %v598 = vadd.f32 %v584, %v594
        %s599 = sld [smem:[#allocation3 + $0x12]]
        %v600 = vstv %s599
        %v601 = vmul.f32 %v600, %v382
        %v602 = vmul.f32 %v600, %v383
        %v603 = vadd.f32 %v597, %v601
        %v604 = vadd.f32 %v598, %v602
        %s605 = sld [smem:[#allocation3 + $0x13]]
        %v606 = vstv %s605
        %v607 = vmul.f32 %v606, %v382
        %v608 = vmul.f32 %v606, %v383
        %611 = vrot.lane.b32.xlu0 %v607, 127
        %v612 = vpop.permute.xlu0 %611
        %613 = vrot.lane.b32.xlu0 %v608, 127
        %v614 = vpop.permute.xlu0 %613
        %v617 = vadd.f32 %v603, %v612
        %v618 = vadd.f32 %v604, %v614
        %s619 = sld [smem:[#allocation3 + $0x14]]
        %v620 = vstv %s619
        %v621 = vmul.f32 %v620, %v382
        %v622 = vmul.f32 %v620, %v383
        %625 = vrot.lane.b32.xlu0 %v621, 126
        %v626 = vpop.permute.xlu0 %625
        %627 = vrot.lane.b32.xlu0 %v622, 126
        %v628 = vpop.permute.xlu0 %627
        %v631 = vadd.f32 %v617, %v626
        %v632 = vadd.f32 %v618, %v628
        %s633 = sld [smem:[#allocation3 + $0x15]]
        %v634 = vstv %s633
        %v635 = vmul.f32 %v634, %v384
        %v636 = vmul.f32 %v634, %v385
        %v637 = vadd.f32 %v631, %v635
        %v638 = vadd.f32 %v632, %v636
        %s639 = sld [smem:[#allocation3 + $0x16]]
        %v640 = vstv %s639
        %v641 = vmul.f32 %v640, %v384
        %v642 = vmul.f32 %v640, %v385
        %645 = vrot.lane.b32.xlu0 %v641, 127
        %v646 = vpop.permute.xlu0 %645
        %647 = vrot.lane.b32.xlu0 %v642, 127
        %v648 = vpop.permute.xlu0 %647
        %v651 = vadd.f32 %v637, %v646
        %v652 = vadd.f32 %v638, %v648
        %s653 = sld [smem:[#allocation3 + $0x17]]
        %v654 = vstv %s653
        %v655 = vmul.f32 %v654, %v384
        %v656 = vmul.f32 %v654, %v385
        %659 = vrot.lane.b32.xlu0 %v655, 126
        %v660 = vpop.permute.xlu0 %659
        %661 = vrot.lane.b32.xlu0 %v656, 126
        %v662 = vpop.permute.xlu0 %661
        %v665 = vadd.f32 %v651, %v660
        %v666 = vadd.f32 %v652, %v662
        %s667 = sld [smem:[#allocation3 + $0x18]]
        %v668 = vstv %s667
        %v669 = vmul.f32 %v668, %v386
        %v670 = vmul.f32 %v668, %v387
        %v671 = vadd.f32 %v665, %v669
        %v672 = vadd.f32 %v666, %v670
        %s673 = sld [smem:[#allocation3 + $0x19]]
        %v674 = vstv %s673
        %v675 = vmul.f32 %v674, %v386
        %v676 = vmul.f32 %v674, %v387
        %679 = vrot.lane.b32.xlu0 %v675, 127
        %v680 = vpop.permute.xlu0 %679
        %681 = vrot.lane.b32.xlu0 %v676, 127
        %v682 = vpop.permute.xlu0 %681
        %v685 = vadd.f32 %v671, %v680
        %v686 = vadd.f32 %v672, %v682
        %s687 = sld [smem:[#allocation3 + $0x1a]]
        %v688 = vstv %s687
        %v689 = vmul.f32 %v688, %v386
        %v690 = vmul.f32 %v688, %v387
        %693 = vrot.lane.b32.xlu0 %v689, 126
        %v694 = vpop.permute.xlu0 %693
        %695 = vrot.lane.b32.xlu0 %v690, 126
        %v696 = vpop.permute.xlu0 %695
        %v699 = vadd.f32 %v685, %v694
        %v700 = vadd.f32 %v686, %v696
        %s701 = sld [smem:[#allocation3 + $0x1b]]
        %v702 = vstv %s701
        %v703 = vmul.f32 %v702, %v389
        %v704 = vmul.f32 %v702, %v390
        %v705 = vadd.f32 %v699, %v703
        %v706 = vadd.f32 %v700, %v704
        %s707 = sld [smem:[#allocation3 + $0x1c]]
        %v708 = vstv %s707
        %v709 = vmul.f32 %v708, %v389
        %v710 = vmul.f32 %v708, %v390
        %713 = vrot.lane.b32.xlu0 %v709, 127
        %v714 = vpop.permute.xlu0 %713
        %715 = vrot.lane.b32.xlu0 %v710, 127
        %v716 = vpop.permute.xlu0 %715
        %v719 = vadd.f32 %v705, %v714
        %v720 = vadd.f32 %v706, %v716
        %s721 = sld [smem:[#allocation3 + $0x1d]]
        %v722 = vstv %s721
        %v723 = vmul.f32 %v722, %v389
        %v724 = vmul.f32 %v722, %v390
        %727 = vrot.lane.b32.xlu0 %v723, 126
        %v728 = vpop.permute.xlu0 %727
        %729 = vrot.lane.b32.xlu0 %v724, 126
        %v730 = vpop.permute.xlu0 %729
        %v733 = vadd.f32 %v719, %v728
        %v734 = vadd.f32 %v720, %v730
        %s735 = sld [smem:[#allocation3 + $0x1e]]
        %v736 = vstv %s735
        %v737 = vmul.f32 %v736, %v391
        %v738 = vmul.f32 %v736, %v392
        %v739 = vadd.f32 %v733, %v737
        %v740 = vadd.f32 %v734, %v738
        %s741 = sld [smem:[#allocation3 + $0x1f]]
        %v742 = vstv %s741
        %v743 = vmul.f32 %v742, %v391
        %v744 = vmul.f32 %v742, %v392
        %747 = vrot.lane.b32.xlu0 %v743, 127
        %v748 = vpop.permute.xlu0 %747
        %749 = vrot.lane.b32.xlu0 %v744, 127
        %v750 = vpop.permute.xlu0 %749
        %v753 = vadd.f32 %v739, %v748
        %v754 = vadd.f32 %v740, %v750
        %s755 = sld [smem:[#allocation3 + $0x20]]
        %v756 = vstv %s755
        %v757 = vmul.f32 %v756, %v391
        %v758 = vmul.f32 %v756, %v392
        %761 = vrot.lane.b32.xlu0 %v757, 126
        %v762 = vpop.permute.xlu0 %761
        %763 = vrot.lane.b32.xlu0 %v758, 126
        %v764 = vpop.permute.xlu0 %763
        %v767 = vadd.f32 %v753, %v762
        %v768 = vadd.f32 %v754, %v764
        %s769 = sld [smem:[#allocation3 + $0x21]]
        %v770 = vstv %s769
        %v771 = vmul.f32 %v770, %v393
        %v772 = vmul.f32 %v770, %v394
        %v773 = vadd.f32 %v767, %v771
        %v774 = vadd.f32 %v768, %v772
        %s775 = sld [smem:[#allocation3 + $0x22]]
        %v776 = vstv %s775
        %v777 = vmul.f32 %v776, %v393
        %v778 = vmul.f32 %v776, %v394
        %781 = vrot.lane.b32.xlu0 %v777, 127
        %v782 = vpop.permute.xlu0 %781
        %783 = vrot.lane.b32.xlu0 %v778, 127
        %v784 = vpop.permute.xlu0 %783
        %v787 = vadd.f32 %v773, %v782
        %v788 = vadd.f32 %v774, %v784
        %s789 = sld [smem:[#allocation3 + $0x23]]
        %v790 = vstv %s789
        %v791 = vmul.f32 %v790, %v393
        %v792 = vmul.f32 %v790, %v394
        %795 = vrot.lane.b32.xlu0 %v791, 126
        %v796 = vpop.permute.xlu0 %795
        %797 = vrot.lane.b32.xlu0 %v792, 126
        %v798 = vpop.permute.xlu0 %797
        %v801 = vadd.f32 %v787, %v796
        %v802 = vadd.f32 %v788, %v798
        %s803 = sld [smem:[#allocation6]]
        %v804 = vstv %s803
        %v805 = vmul.f32 %v801, %v804
        %v806 = vmul.f32 %v802, %v804
        %s807 = sld [smem:[#allocation8]]
        %v808 = vstv %s807
        %v809 = vadd.f32 %v805, %v808
        %v810 = vadd.f32 %v806, %v808
        %v811 = vmax.f32 %v809, 0.0
        %v812 = vmax.f32 %v810, 0.0
        %815 = vrot.lane.b32.xlu0 %v811, 1
        %v816 = vpop.permute.xlu0 %815
        %817 = vrot.lane.b32.xlu0 %v812, 1
        %v818 = vpop.permute.xlu0 %817
        %vm821 = vcmask 138248
        %822 = vst.msk [vmem:[#allocation2 + $0x1] sm:$0xff] %vm821, %v816
        %823 = vst.msk [vmem:[#allocation2 + $0x9] sm:$0xff] %vm821, %v818
        %s824 = sld [smem:[#allocation3 + $0x24]]
        %v825 = vstv %s824
        %v826 = vmul.f32 %v825, %v368
        %v827 = vmul.f32 %v825, %v369
        %v828 = vadd.f32 %v826, 0.0
        %v829 = vadd.f32 %v827, 0.0
        %s830 = sld [smem:[#allocation3 + $0x25]]
        %v831 = vstv %s830
        %v832 = vmul.f32 %v831, %v368
        %v833 = vmul.f32 %v831, %v369
        %836 = vrot.lane.b32.xlu0 %v832, 127
        %v837 = vpop.permute.xlu0 %836
        %838 = vrot.lane.b32.xlu0 %v833, 127
        %v839 = vpop.permute.xlu0 %838
        %v842 = vadd.f32 %v828, %v837
        %v843 = vadd.f32 %v829, %v839
        %s844 = sld [smem:[#allocation3 + $0x26]]
        %v845 = vstv %s844
        %v846 = vmul.f32 %v845, %v368
        %v847 = vmul.f32 %v845, %v369
        %850 = vrot.lane.b32.xlu0 %v846, 126
        %v851 = vpop.permute.xlu0 %850
        %852 = vrot.lane.b32.xlu0 %v847, 126
        %v853 = vpop.permute.xlu0 %852
        %v856 = vadd.f32 %v842, %v851
        %v857 = vadd.f32 %v843, %v853
        %s858 = sld [smem:[#allocation3 + $0x27]]
        %v859 = vstv %s858
        %v860 = vmul.f32 %v859, %v370
        %v861 = vmul.f32 %v859, %v371
        %v862 = vadd.f32 %v856, %v860
        %v863 = vadd.f32 %v857, %v861
        %s864 = sld [smem:[#allocation3 + $0x28]]
        %v865 = vstv %s864
        %v866 = vmul.f32 %v865, %v370
        %v867 = vmul.f32 %v865, %v371
        %870 = vrot.lane.b32.xlu0 %v866, 127
        %v871 = vpop.permute.xlu0 %870
        %872 = vrot.lane.b32.xlu0 %v867, 127
        %v873 = vpop.permute.xlu0 %872
        %v876 = vadd.f32 %v862, %v871
        %v877 = vadd.f32 %v863, %v873
        %s878 = sld [smem:[#allocation3 + $0x29]]
        %v879 = vstv %s878
        %v880 = vmul.f32 %v879, %v370
        %v881 = vmul.f32 %v879, %v371
        %884 = vrot.lane.b32.xlu0 %v880, 126
        %v885 = vpop.permute.xlu0 %884
        %886 = vrot.lane.b32.xlu0 %v881, 126
        %v887 = vpop.permute.xlu0 %886
        %v890 = vadd.f32 %v876, %v885
        %v891 = vadd.f32 %v877, %v887
        %s892 = sld [smem:[#allocation3 + $0x2a]]
        %v893 = vstv %s892
        %v894 = vmul.f32 %v893, %v372
        %v895 = vmul.f32 %v893, %v373
        %v896 = vadd.f32 %v890, %v894
        %v897 = vadd.f32 %v891, %v895
        %s898 = sld [smem:[#allocation3 + $0x2b]]
        %v899 = vstv %s898
        %v900 = vmul.f32 %v899, %v372
        %v901 = vmul.f32 %v899, %v373
        %904 = vrot.lane.b32.xlu0 %v900, 127
        %v905 = vpop.permute.xlu0 %904
        %906 = vrot.lane.b32.xlu0 %v901, 127
        %v907 = vpop.permute.xlu0 %906
        %v910 = vadd.f32 %v896, %v905
        %v911 = vadd.f32 %v897, %v907
        %s912 = sld [smem:[#allocation3 + $0x2c]]
        %v913 = vstv %s912
        %v914 = vmul.f32 %v913, %v372
        %v915 = vmul.f32 %v913, %v373
        %918 = vrot.lane.b32.xlu0 %v914, 126
        %v919 = vpop.permute.xlu0 %918
        %920 = vrot.lane.b32.xlu0 %v915, 126
        %v921 = vpop.permute.xlu0 %920
        %v924 = vadd.f32 %v910, %v919
        %v925 = vadd.f32 %v911, %v921
        %s926 = sld [smem:[#allocation3 + $0x2d]]
        %v927 = vstv %s926
        %v928 = vmul.f32 %v927, %v375
        %v929 = vmul.f32 %v927, %v376
        %v930 = vadd.f32 %v924, %v928
        %v931 = vadd.f32 %v925, %v929
        %s932 = sld [smem:[#allocation3 + $0x2e]]
        %v933 = vstv %s932
        %v934 = vmul.f32 %v933, %v375
        %v935 = vmul.f32 %v933, %v376
        %938 = vrot.lane.b32.xlu0 %v934, 127
        %v939 = vpop.permute.xlu0 %938
        %940 = vrot.lane.b32.xlu0 %v935, 127
        %v941 = vpop.permute.xlu0 %940
        %v944 = vadd.f32 %v930, %v939
        %v945 = vadd.f32 %v931, %v941
        %s946 = sld [smem:[#allocation3 + $0x2f]]
        %v947 = vstv %s946
        %v948 = vmul.f32 %v947, %v375
        %v949 = vmul.f32 %v947, %v376
        %952 = vrot.lane.b32.xlu0 %v948, 126
        %v953 = vpop.permute.xlu0 %952
        %954 = vrot.lane.b32.xlu0 %v949, 126
        %v955 = vpop.permute.xlu0 %954
        %v958 = vadd.f32 %v944, %v953
        %v959 = vadd.f32 %v945, %v955
        %s960 = sld [smem:[#allocation3 + $0x30]]
        %v961 = vstv %s960
        %v962 = vmul.f32 %v961, %v377
        %v963 = vmul.f32 %v961, %v378
        %v964 = vadd.f32 %v958, %v962
        %v965 = vadd.f32 %v959, %v963
        %s966 = sld [smem:[#allocation3 + $0x31]]
        %v967 = vstv %s966
        %v968 = vmul.f32 %v967, %v377
        %v969 = vmul.f32 %v967, %v378
        %972 = vrot.lane.b32.xlu0 %v968, 127
        %v973 = vpop.permute.xlu0 %972
        %974 = vrot.lane.b32.xlu0 %v969, 127
        %v975 = vpop.permute.xlu0 %974
        %v978 = vadd.f32 %v964, %v973
        %v979 = vadd.f32 %v965, %v975
        %s980 = sld [smem:[#allocation3 + $0x32]]
        %v981 = vstv %s980
        %v982 = vmul.f32 %v981, %v377
        %v983 = vmul.f32 %v981, %v378
        %986 = vrot.lane.b32.xlu0 %v982, 126
        %v987 = vpop.permute.xlu0 %986
        %988 = vrot.lane.b32.xlu0 %v983, 126
        %v989 = vpop.permute.xlu0 %988
        %v992 = vadd.f32 %v978, %v987
        %v993 = vadd.f32 %v979, %v989
        %s994 = sld [smem:[#allocation3 + $0x33]]
        %v995 = vstv %s994
        %v996 = vmul.f32 %v995, %v379
        %v997 = vmul.f32 %v995, %v380
        %v998 = vadd.f32 %v992, %v996
        %v999 = vadd.f32 %v993, %v997
        %s1000 = sld [smem:[#allocation3 + $0x34]]
        %v1001 = vstv %s1000
        %v1002 = vmul.f32 %v1001, %v379
        %v1003 = vmul.f32 %v1001, %v380
        %1006 = vrot.lane.b32.xlu0 %v1002, 127
        %v1007 = vpop.permute.xlu0 %1006
        %1008 = vrot.lane.b32.xlu0 %v1003, 127
        %v1009 = vpop.permute.xlu0 %1008
        %v1012 = vadd.f32 %v998, %v1007
        %v1013 = vadd.f32 %v999, %v1009
        %s1014 = sld [smem:[#allocation3 + $0x35]]
        %v1015 = vstv %s1014
        %v1016 = vmul.f32 %v1015, %v379
        %v1017 = vmul.f32 %v1015, %v380
        %1020 = vrot.lane.b32.xlu0 %v1016, 126
        %v1021 = vpop.permute.xlu0 %1020
        %1022 = vrot.lane.b32.xlu0 %v1017, 126
        %v1023 = vpop.permute.xlu0 %1022
        %v1026 = vadd.f32 %v1012, %v1021
        %v1027 = vadd.f32 %v1013, %v1023
        %s1028 = sld [smem:[#allocation3 + $0x36]]
        %v1029 = vstv %s1028
        %v1030 = vmul.f32 %v1029, %v382
        %v1031 = vmul.f32 %v1029, %v383
        %v1032 = vadd.f32 %v1026, %v1030
        %v1033 = vadd.f32 %v1027, %v1031
        %s1034 = sld [smem:[#allocation3 + $0x37]]
        %v1035 = vstv %s1034
        %v1036 = vmul.f32 %v1035, %v382
        %v1037 = vmul.f32 %v1035, %v383
        %1040 = vrot.lane.b32.xlu0 %v1036, 127
        %v1041 = vpop.permute.xlu0 %1040
        %1042 = vrot.lane.b32.xlu0 %v1037, 127
        %v1043 = vpop.permute.xlu0 %1042
        %v1046 = vadd.f32 %v1032, %v1041
        %v1047 = vadd.f32 %v1033, %v1043
        %s1048 = sld [smem:[#allocation3 + $0x38]]
        %v1049 = vstv %s1048
        %v1050 = vmul.f32 %v1049, %v382
        %v1051 = vmul.f32 %v1049, %v383
        %1054 = vrot.lane.b32.xlu0 %v1050, 126
        %v1055 = vpop.permute.xlu0 %1054
        %1056 = vrot.lane.b32.xlu0 %v1051, 126
        %v1057 = vpop.permute.xlu0 %1056
        %v1060 = vadd.f32 %v1046, %v1055
        %v1061 = vadd.f32 %v1047, %v1057
        %s1062 = sld [smem:[#allocation3 + $0x39]]
        %v1063 = vstv %s1062
        %v1064 = vmul.f32 %v1063, %v384
        %v1065 = vmul.f32 %v1063, %v385
        %v1066 = vadd.f32 %v1060, %v1064
        %v1067 = vadd.f32 %v1061, %v1065
        %s1068 = sld [smem:[#allocation3 + $0x3a]]
        %v1069 = vstv %s1068
        %v1070 = vmul.f32 %v1069, %v384
        %v1071 = vmul.f32 %v1069, %v385
        %1074 = vrot.lane.b32.xlu0 %v1070, 127
        %v1075 = vpop.permute.xlu0 %1074
        %1076 = vrot.lane.b32.xlu0 %v1071, 127
        %v1077 = vpop.permute.xlu0 %1076
        %v1080 = vadd.f32 %v1066, %v1075
        %v1081 = vadd.f32 %v1067, %v1077
        %s1082 = sld [smem:[#allocation3 + $0x3b]]
        %v1083 = vstv %s1082
        %v1084 = vmul.f32 %v1083, %v384
        %v1085 = vmul.f32 %v1083, %v385
        %1088 = vrot.lane.b32.xlu0 %v1084, 126
        %v1089 = vpop.permute.xlu0 %1088
        %1090 = vrot.lane.b32.xlu0 %v1085, 126
        %v1091 = vpop.permute.xlu0 %1090
        %v1094 = vadd.f32 %v1080, %v1089
        %v1095 = vadd.f32 %v1081, %v1091
        %s1096 = sld [smem:[#allocation3 + $0x3c]]
        %v1097 = vstv %s1096
        %v1098 = vmul.f32 %v1097, %v386
        %v1099 = vmul.f32 %v1097, %v387
        %v1100 = vadd.f32 %v1094, %v1098
        %v1101 = vadd.f32 %v1095, %v1099
        %s1102 = sld [smem:[#allocation3 + $0x3d]]
        %v1103 = vstv %s1102
        %v1104 = vmul.f32 %v1103, %v386
        %v1105 = vmul.f32 %v1103, %v387
        %1108 = vrot.lane.b32.xlu0 %v1104, 127
        %v1109 = vpop.permute.xlu0 %1108
        %1110 = vrot.lane.b32.xlu0 %v1105, 127
        %v1111 = vpop.permute.xlu0 %1110
        %v1114 = vadd.f32 %v1100, %v1109
        %v1115 = vadd.f32 %v1101, %v1111
        %s1116 = sld [smem:[#allocation3 + $0x3e]]
        %v1117 = vstv %s1116
        %v1118 = vmul.f32 %v1117, %v386
        %v1119 = vmul.f32 %v1117, %v387
        %1122 = vrot.lane.b32.xlu0 %v1118, 126
        %v1123 = vpop.permute.xlu0 %1122
        %1124 = vrot.lane.b32.xlu0 %v1119, 126
        %v1125 = vpop.permute.xlu0 %1124
        %v1128 = vadd.f32 %v1114, %v1123
        %v1129 = vadd.f32 %v1115, %v1125
        %s1130 = sld [smem:[#allocation3 + $0x3f]]
        %v1131 = vstv %s1130
        %v1132 = vmul.f32 %v1131, %v389
        %v1133 = vmul.f32 %v1131, %v390
        %v1134 = vadd.f32 %v1128, %v1132
        %v1135 = vadd.f32 %v1129, %v1133
        %s1136 = sld [smem:[#allocation3 + $0x40]]
        %v1137 = vstv %s1136
        %v1138 = vmul.f32 %v1137, %v389
        %v1139 = vmul.f32 %v1137, %v390
        %1142 = vrot.lane.b32.xlu0 %v1138, 127
        %v1143 = vpop.permute.xlu0 %1142
        %1144 = vrot.lane.b32.xlu0 %v1139, 127
        %v1145 = vpop.permute.xlu0 %1144
        %v1148 = vadd.f32 %v1134, %v1143
        %v1149 = vadd.f32 %v1135, %v1145
        %s1150 = sld [smem:[#allocation3 + $0x41]]
        %v1151 = vstv %s1150
        %v1152 = vmul.f32 %v1151, %v389
        %v1153 = vmul.f32 %v1151, %v390
        %1156 = vrot.lane.b32.xlu0 %v1152, 126
        %v1157 = vpop.permute.xlu0 %1156
        %1158 = vrot.lane.b32.xlu0 %v1153, 126
        %v1159 = vpop.permute.xlu0 %1158
        %v1162 = vadd.f32 %v1148, %v1157
        %v1163 = vadd.f32 %v1149, %v1159
        %s1164 = sld [smem:[#allocation3 + $0x42]]
        %v1165 = vstv %s1164
        %v1166 = vmul.f32 %v1165, %v391
        %v1167 = vmul.f32 %v1165, %v392
        %v1168 = vadd.f32 %v1162, %v1166
        %v1169 = vadd.f32 %v1163, %v1167
        %s1170 = sld [smem:[#allocation3 + $0x43]]
        %v1171 = vstv %s1170
        %v1172 = vmul.f32 %v1171, %v391
        %v1173 = vmul.f32 %v1171, %v392
        %1176 = vrot.lane.b32.xlu0 %v1172, 127
        %v1177 = vpop.permute.xlu0 %1176
        %1178 = vrot.lane.b32.xlu0 %v1173, 127
        %v1179 = vpop.permute.xlu0 %1178
        %v1182 = vadd.f32 %v1168, %v1177
        %v1183 = vadd.f32 %v1169, %v1179
        %s1184 = sld [smem:[#allocation3 + $0x44]]
        %v1185 = vstv %s1184
        %v1186 = vmul.f32 %v1185, %v391
        %v1187 = vmul.f32 %v1185, %v392
        %1190 = vrot.lane.b32.xlu0 %v1186, 126
        %v1191 = vpop.permute.xlu0 %1190
        %1192 = vrot.lane.b32.xlu0 %v1187, 126
        %v1193 = vpop.permute.xlu0 %1192
        %v1196 = vadd.f32 %v1182, %v1191
        %v1197 = vadd.f32 %v1183, %v1193
        %s1198 = sld [smem:[#allocation3 + $0x45]]
        %v1199 = vstv %s1198
        %v1200 = vmul.f32 %v1199, %v393
        %v1201 = vmul.f32 %v1199, %v394
        %v1202 = vadd.f32 %v1196, %v1200
        %v1203 = vadd.f32 %v1197, %v1201
        %s1204 = sld [smem:[#allocation3 + $0x46]]
        %v1205 = vstv %s1204
        %v1206 = vmul.f32 %v1205, %v393
        %v1207 = vmul.f32 %v1205, %v394
        %1210 = vrot.lane.b32.xlu0 %v1206, 127
        %v1211 = vpop.permute.xlu0 %1210
        %1212 = vrot.lane.b32.xlu0 %v1207, 127
        %v1213 = vpop.permute.xlu0 %1212
        %v1216 = vadd.f32 %v1202, %v1211
        %v1217 = vadd.f32 %v1203, %v1213
        %s1218 = sld [smem:[#allocation3 + $0x47]]
        %v1219 = vstv %s1218
        %v1220 = vmul.f32 %v1219, %v393
        %v1221 = vmul.f32 %v1219, %v394
        %1224 = vrot.lane.b32.xlu0 %v1220, 126
        %v1225 = vpop.permute.xlu0 %1224
        %1226 = vrot.lane.b32.xlu0 %v1221, 126
        %v1227 = vpop.permute.xlu0 %1226
        %v1230 = vadd.f32 %v1216, %v1225
        %v1231 = vadd.f32 %v1217, %v1227
        %s1232 = sld [smem:[#allocation6 + $0x1]]
        %v1233 = vstv %s1232
        %v1234 = vmul.f32 %v1230, %v1233
        %v1235 = vmul.f32 %v1231, %v1233
        %s1236 = sld [smem:[#allocation8 + $0x1]]
        %v1237 = vstv %s1236
        %v1238 = vadd.f32 %v1234, %v1237
        %v1239 = vadd.f32 %v1235, %v1237
        %v1240 = vmax.f32 %v1238, 0.0
        %v1241 = vmax.f32 %v1239, 0.0
        %1244 = vrot.lane.b32.xlu0 %v1240, 1
        %v1245 = vpop.permute.xlu0 %1244
        %1246 = vrot.lane.b32.xlu0 %v1241, 1
        %v1247 = vpop.permute.xlu0 %1246
        %s1250 = scalar_lea.vmem [#allocation2], 24
        %1251 = vst.msk [vmem:[%s1250 + $0x1] sm:$0xff] %vm821, %v1245
        %1252 = vst.msk [vmem:[%s1250 + $0x9] sm:$0xff] %vm821, %v1247
        %s1253 = sld [smem:[#allocation3 + $0x48]]
        %v1254 = vstv %s1253
        %v1255 = vmul.f32 %v1254, %v368
        %v1256 = vmul.f32 %v1254, %v369
        %v1257 = vadd.f32 %v1255, 0.0
        %v1258 = vadd.f32 %v1256, 0.0
        %s1259 = sld [smem:[#allocation3 + $0x49]]
        %v1260 = vstv %s1259
        %v1261 = vmul.f32 %v1260, %v368
        %v1262 = vmul.f32 %v1260, %v369
        %1265 = vrot.lane.b32.xlu0 %v1261, 127
        %v1266 = vpop.permute.xlu0 %1265
        %1267 = vrot.lane.b32.xlu0 %v1262, 127
        %v1268 = vpop.permute.xlu0 %1267
        %v1271 = vadd.f32 %v1257, %v1266
        %v1272 = vadd.f32 %v1258, %v1268
        %s1273 = sld [smem:[#allocation3 + $0x4a]]
        %v1274 = vstv %s1273
        %v1275 = vmul.f32 %v1274, %v368
        %v1276 = vmul.f32 %v1274, %v369
        %1279 = vrot.lane.b32.xlu0 %v1275, 126
        %v1280 = vpop.permute.xlu0 %1279
        %1281 = vrot.lane.b32.xlu0 %v1276, 126
        %v1282 = vpop.permute.xlu0 %1281
        %v1285 = vadd.f32 %v1271, %v1280
        %v1286 = vadd.f32 %v1272, %v1282
        %s1287 = sld [smem:[#allocation3 + $0x4b]]
        %v1288 = vstv %s1287
        %v1289 = vmul.f32 %v1288, %v370
        %v1290 = vmul.f32 %v1288, %v371
        %v1291 = vadd.f32 %v1285, %v1289
        %v1292 = vadd.f32 %v1286, %v1290
        %s1293 = sld [smem:[#allocation3 + $0x4c]]
        %v1294 = vstv %s1293
        %v1295 = vmul.f32 %v1294, %v370
        %v1296 = vmul.f32 %v1294, %v371
        %1299 = vrot.lane.b32.xlu0 %v1295, 127
        %v1300 = vpop.permute.xlu0 %1299
        %1301 = vrot.lane.b32.xlu0 %v1296, 127
        %v1302 = vpop.permute.xlu0 %1301
        %v1305 = vadd.f32 %v1291, %v1300
        %v1306 = vadd.f32 %v1292, %v1302
        %s1307 = sld [smem:[#allocation3 + $0x4d]]
        %v1308 = vstv %s1307
        %v1309 = vmul.f32 %v1308, %v370
        %v1310 = vmul.f32 %v1308, %v371
        %1313 = vrot.lane.b32.xlu0 %v1309, 126
        %v1314 = vpop.permute.xlu0 %1313
        %1315 = vrot.lane.b32.xlu0 %v1310, 126
        %v1316 = vpop.permute.xlu0 %1315
        %v1319 = vadd.f32 %v1305, %v1314
        %v1320 = vadd.f32 %v1306, %v1316
        %s1321 = sld [smem:[#allocation3 + $0x4e]]
        %v1322 = vstv %s1321
        %v1323 = vmul.f32 %v1322, %v372
        %v1324 = vmul.f32 %v1322, %v373
        %v1325 = vadd.f32 %v1319, %v1323
        %v1326 = vadd.f32 %v1320, %v1324
        %s1327 = sld [smem:[#allocation3 + $0x4f]]
        %v1328 = vstv %s1327
        %v1329 = vmul.f32 %v1328, %v372
        %v1330 = vmul.f32 %v1328, %v373
        %1333 = vrot.lane.b32.xlu0 %v1329, 127
        %v1334 = vpop.permute.xlu0 %1333
        %1335 = vrot.lane.b32.xlu0 %v1330, 127
        %v1336 = vpop.permute.xlu0 %1335
        %v1339 = vadd.f32 %v1325, %v1334
        %v1340 = vadd.f32 %v1326, %v1336
        %s1341 = sld [smem:[#allocation3 + $0x50]]
        %v1342 = vstv %s1341
        %v1343 = vmul.f32 %v1342, %v372
        %v1344 = vmul.f32 %v1342, %v373
        %1347 = vrot.lane.b32.xlu0 %v1343, 126
        %v1348 = vpop.permute.xlu0 %1347
        %1349 = vrot.lane.b32.xlu0 %v1344, 126
        %v1350 = vpop.permute.xlu0 %1349
        %v1353 = vadd.f32 %v1339, %v1348
        %v1354 = vadd.f32 %v1340, %v1350
        %s1355 = sld [smem:[#allocation3 + $0x51]]
        %v1356 = vstv %s1355
        %v1357 = vmul.f32 %v1356, %v375
        %v1358 = vmul.f32 %v1356, %v376
        %v1359 = vadd.f32 %v1353, %v1357
        %v1360 = vadd.f32 %v1354, %v1358
        %s1361 = sld [smem:[#allocation3 + $0x52]]
        %v1362 = vstv %s1361
        %v1363 = vmul.f32 %v1362, %v375
        %v1364 = vmul.f32 %v1362, %v376
        %1367 = vrot.lane.b32.xlu0 %v1363, 127
        %v1368 = vpop.permute.xlu0 %1367
        %1369 = vrot.lane.b32.xlu0 %v1364, 127
        %v1370 = vpop.permute.xlu0 %1369
        %v1373 = vadd.f32 %v1359, %v1368
        %v1374 = vadd.f32 %v1360, %v1370
        %s1375 = sld [smem:[#allocation3 + $0x53]]
        %v1376 = vstv %s1375
        %v1377 = vmul.f32 %v1376, %v375
        %v1378 = vmul.f32 %v1376, %v376
        %1381 = vrot.lane.b32.xlu0 %v1377, 126
        %v1382 = vpop.permute.xlu0 %1381
        %1383 = vrot.lane.b32.xlu0 %v1378, 126
        %v1384 = vpop.permute.xlu0 %1383
        %v1387 = vadd.f32 %v1373, %v1382
        %v1388 = vadd.f32 %v1374, %v1384
        %s1389 = sld [smem:[#allocation3 + $0x54]]
        %v1390 = vstv %s1389
        %v1391 = vmul.f32 %v1390, %v377
        %v1392 = vmul.f32 %v1390, %v378
        %v1393 = vadd.f32 %v1387, %v1391
        %v1394 = vadd.f32 %v1388, %v1392
        %s1395 = sld [smem:[#allocation3 + $0x55]]
        %v1396 = vstv %s1395
        %v1397 = vmul.f32 %v1396, %v377
        %v1398 = vmul.f32 %v1396, %v378
        %1401 = vrot.lane.b32.xlu0 %v1397, 127
        %v1402 = vpop.permute.xlu0 %1401
        %1403 = vrot.lane.b32.xlu0 %v1398, 127
        %v1404 = vpop.permute.xlu0 %1403
        %v1407 = vadd.f32 %v1393, %v1402
        %v1408 = vadd.f32 %v1394, %v1404
        %s1409 = sld [smem:[#allocation3 + $0x56]]
        %v1410 = vstv %s1409
        %v1411 = vmul.f32 %v1410, %v377
        %v1412 = vmul.f32 %v1410, %v378
        %1415 = vrot.lane.b32.xlu0 %v1411, 126
        %v1416 = vpop.permute.xlu0 %1415
        %1417 = vrot.lane.b32.xlu0 %v1412, 126
        %v1418 = vpop.permute.xlu0 %1417
        %v1421 = vadd.f32 %v1407, %v1416
        %v1422 = vadd.f32 %v1408, %v1418
        %s1423 = sld [smem:[#allocation3 + $0x57]]
        %v1424 = vstv %s1423
        %v1425 = vmul.f32 %v1424, %v379
        %v1426 = vmul.f32 %v1424, %v380
        %v1427 = vadd.f32 %v1421, %v1425
        %v1428 = vadd.f32 %v1422, %v1426
        %s1429 = sld [smem:[#allocation3 + $0x58]]
        %v1430 = vstv %s1429
        %v1431 = vmul.f32 %v1430, %v379
        %v1432 = vmul.f32 %v1430, %v380
        %1435 = vrot.lane.b32.xlu0 %v1431, 127
        %v1436 = vpop.permute.xlu0 %1435
        %1437 = vrot.lane.b32.xlu0 %v1432, 127
        %v1438 = vpop.permute.xlu0 %1437
        %v1441 = vadd.f32 %v1427, %v1436
        %v1442 = vadd.f32 %v1428, %v1438
        %s1443 = sld [smem:[#allocation3 + $0x59]]
        %v1444 = vstv %s1443
        %v1445 = vmul.f32 %v1444, %v379
        %v1446 = vmul.f32 %v1444, %v380
        %1449 = vrot.lane.b32.xlu0 %v1445, 126
        %v1450 = vpop.permute.xlu0 %1449
        %1451 = vrot.lane.b32.xlu0 %v1446, 126
        %v1452 = vpop.permute.xlu0 %1451
        %v1455 = vadd.f32 %v1441, %v1450
        %v1456 = vadd.f32 %v1442, %v1452
        %s1457 = sld [smem:[#allocation3 + $0x5a]]
        %v1458 = vstv %s1457
        %v1459 = vmul.f32 %v1458, %v382
        %v1460 = vmul.f32 %v1458, %v383
        %v1461 = vadd.f32 %v1455, %v1459
        %v1462 = vadd.f32 %v1456, %v1460
        %s1463 = sld [smem:[#allocation3 + $0x5b]]
        %v1464 = vstv %s1463
        %v1465 = vmul.f32 %v1464, %v382
        %v1466 = vmul.f32 %v1464, %v383
        %1469 = vrot.lane.b32.xlu0 %v1465, 127
        %v1470 = vpop.permute.xlu0 %1469
        %1471 = vrot.lane.b32.xlu0 %v1466, 127
        %v1472 = vpop.permute.xlu0 %1471
        %v1475 = vadd.f32 %v1461, %v1470
        %v1476 = vadd.f32 %v1462, %v1472
        %s1477 = sld [smem:[#allocation3 + $0x5c]]
        %v1478 = vstv %s1477
        %v1479 = vmul.f32 %v1478, %v382
        %v1480 = vmul.f32 %v1478, %v383
        %1483 = vrot.lane.b32.xlu0 %v1479, 126
        %v1484 = vpop.permute.xlu0 %1483
        %1485 = vrot.lane.b32.xlu0 %v1480, 126
        %v1486 = vpop.permute.xlu0 %1485
        %v1489 = vadd.f32 %v1475, %v1484
        %v1490 = vadd.f32 %v1476, %v1486
        %s1491 = sld [smem:[#allocation3 + $0x5d]]
        %v1492 = vstv %s1491
        %v1493 = vmul.f32 %v1492, %v384
        %v1494 = vmul.f32 %v1492, %v385
        %v1495 = vadd.f32 %v1489, %v1493
        %v1496 = vadd.f32 %v1490, %v1494
        %s1497 = sld [smem:[#allocation3 + $0x5e]]
        %v1498 = vstv %s1497
        %v1499 = vmul.f32 %v1498, %v384
        %v1500 = vmul.f32 %v1498, %v385
        %1503 = vrot.lane.b32.xlu0 %v1499, 127
        %v1504 = vpop.permute.xlu0 %1503
        %1505 = vrot.lane.b32.xlu0 %v1500, 127
        %v1506 = vpop.permute.xlu0 %1505
        %v1509 = vadd.f32 %v1495, %v1504
        %v1510 = vadd.f32 %v1496, %v1506
        %s1511 = sld [smem:[#allocation3 + $0x5f]]
        %v1512 = vstv %s1511
        %v1513 = vmul.f32 %v1512, %v384
        %v1514 = vmul.f32 %v1512, %v385
        %1517 = vrot.lane.b32.xlu0 %v1513, 126
        %v1518 = vpop.permute.xlu0 %1517
        %1519 = vrot.lane.b32.xlu0 %v1514, 126
        %v1520 = vpop.permute.xlu0 %1519
        %v1523 = vadd.f32 %v1509, %v1518
        %v1524 = vadd.f32 %v1510, %v1520
        %s1525 = sld [smem:[#allocation3 + $0x60]]
        %v1526 = vstv %s1525
        %v1527 = vmul.f32 %v1526, %v386
        %v1528 = vmul.f32 %v1526, %v387
        %v1529 = vadd.f32 %v1523, %v1527
        %v1530 = vadd.f32 %v1524, %v1528
        %s1531 = sld [smem:[#allocation3 + $0x61]]
        %v1532 = vstv %s1531
        %v1533 = vmul.f32 %v1532, %v386
        %v1534 = vmul.f32 %v1532, %v387
        %1537 = vrot.lane.b32.xlu0 %v1533, 127
        %v1538 = vpop.permute.xlu0 %1537
        %1539 = vrot.lane.b32.xlu0 %v1534, 127
        %v1540 = vpop.permute.xlu0 %1539
        %v1543 = vadd.f32 %v1529, %v1538
        %v1544 = vadd.f32 %v1530, %v1540
        %s1545 = sld [smem:[#allocation3 + $0x62]]
        %v1546 = vstv %s1545
        %v1547 = vmul.f32 %v1546, %v386
        %v1548 = vmul.f32 %v1546, %v387
        %1551 = vrot.lane.b32.xlu0 %v1547, 126
        %v1552 = vpop.permute.xlu0 %1551
        %1553 = vrot.lane.b32.xlu0 %v1548, 126
        %v1554 = vpop.permute.xlu0 %1553
        %v1557 = vadd.f32 %v1543, %v1552
        %v1558 = vadd.f32 %v1544, %v1554
        %s1559 = sld [smem:[#allocation3 + $0x63]]
        %v1560 = vstv %s1559
        %v1561 = vmul.f32 %v1560, %v389
        %v1562 = vmul.f32 %v1560, %v390
        %v1563 = vadd.f32 %v1557, %v1561
        %v1564 = vadd.f32 %v1558, %v1562
        %s1565 = sld [smem:[#allocation3 + $0x64]]
        %v1566 = vstv %s1565
        %v1567 = vmul.f32 %v1566, %v389
        %v1568 = vmul.f32 %v1566, %v390
        %1571 = vrot.lane.b32.xlu0 %v1567, 127
        %v1572 = vpop.permute.xlu0 %1571
        %1573 = vrot.lane.b32.xlu0 %v1568, 127
        %v1574 = vpop.permute.xlu0 %1573
        %v1577 = vadd.f32 %v1563, %v1572
        %v1578 = vadd.f32 %v1564, %v1574
        %s1579 = sld [smem:[#allocation3 + $0x65]]
        %v1580 = vstv %s1579
        %v1581 = vmul.f32 %v1580, %v389
        %v1582 = vmul.f32 %v1580, %v390
        %1585 = vrot.lane.b32.xlu0 %v1581, 126
        %v1586 = vpop.permute.xlu0 %1585
        %1587 = vrot.lane.b32.xlu0 %v1582, 126
        %v1588 = vpop.permute.xlu0 %1587
        %v1591 = vadd.f32 %v1577, %v1586
        %v1592 = vadd.f32 %v1578, %v1588
        %s1593 = sld [smem:[#allocation3 + $0x66]]
        %v1594 = vstv %s1593
        %v1595 = vmul.f32 %v1594, %v391
        %v1596 = vmul.f32 %v1594, %v392
        %v1597 = vadd.f32 %v1591, %v1595
        %v1598 = vadd.f32 %v1592, %v1596
        %s1599 = sld [smem:[#allocation3 + $0x67]]
        %v1600 = vstv %s1599
        %v1601 = vmul.f32 %v1600, %v391
        %v1602 = vmul.f32 %v1600, %v392
        %1605 = vrot.lane.b32.xlu0 %v1601, 127
        %v1606 = vpop.permute.xlu0 %1605
        %1607 = vrot.lane.b32.xlu0 %v1602, 127
        %v1608 = vpop.permute.xlu0 %1607
        %v1611 = vadd.f32 %v1597, %v1606
        %v1612 = vadd.f32 %v1598, %v1608
        %s1613 = sld [smem:[#allocation3 + $0x68]]
        %v1614 = vstv %s1613
        %v1615 = vmul.f32 %v1614, %v391
        %v1616 = vmul.f32 %v1614, %v392
        %1619 = vrot.lane.b32.xlu0 %v1615, 126
        %v1620 = vpop.permute.xlu0 %1619
        %1621 = vrot.lane.b32.xlu0 %v1616, 126
        %v1622 = vpop.permute.xlu0 %1621
        %v1625 = vadd.f32 %v1611, %v1620
        %v1626 = vadd.f32 %v1612, %v1622
        %s1627 = sld [smem:[#allocation3 + $0x69]]
        %v1628 = vstv %s1627
        %v1629 = vmul.f32 %v1628, %v393
        %v1630 = vmul.f32 %v1628, %v394
        %v1631 = vadd.f32 %v1625, %v1629
        %v1632 = vadd.f32 %v1626, %v1630
        %s1633 = sld [smem:[#allocation3 + $0x6a]]
        %v1634 = vstv %s1633
        %v1635 = vmul.f32 %v1634, %v393
        %v1636 = vmul.f32 %v1634, %v394
        %1639 = vrot.lane.b32.xlu0 %v1635, 127
        %v1640 = vpop.permute.xlu0 %1639
        %1641 = vrot.lane.b32.xlu0 %v1636, 127
        %v1642 = vpop.permute.xlu0 %1641
        %v1645 = vadd.f32 %v1631, %v1640
        %v1646 = vadd.f32 %v1632, %v1642
        %s1647 = sld [smem:[#allocation3 + $0x6b]]
        %v1648 = vstv %s1647
        %v1649 = vmul.f32 %v1648, %v393
        %v1650 = vmul.f32 %v1648, %v394
        %1653 = vrot.lane.b32.xlu0 %v1649, 126
        %v1654 = vpop.permute.xlu0 %1653
        %1655 = vrot.lane.b32.xlu0 %v1650, 126
        %v1656 = vpop.permute.xlu0 %1655
        %v1659 = vadd.f32 %v1645, %v1654
        %v1660 = vadd.f32 %v1646, %v1656
        %s1661 = sld [smem:[#allocation6 + $0x2]]
        %v1662 = vstv %s1661
        %v1663 = vmul.f32 %v1659, %v1662
        %v1664 = vmul.f32 %v1660, %v1662
        %s1665 = sld [smem:[#allocation8 + $0x2]]
        %v1666 = vstv %s1665
        %v1667 = vadd.f32 %v1663, %v1666
        %v1668 = vadd.f32 %v1664, %v1666
        %v1669 = vmax.f32 %v1667, 0.0
        %v1670 = vmax.f32 %v1668, 0.0
        %1673 = vrot.lane.b32.xlu0 %v1669, 1
        %v1674 = vpop.permute.xlu0 %1673
        %1675 = vrot.lane.b32.xlu0 %v1670, 1
        %v1676 = vpop.permute.xlu0 %1675
        %s1679 = scalar_lea.vmem [#allocation2], 48
        %1680 = vst.msk [vmem:[%s1679 + $0x1] sm:$0xff] %vm821, %v1674
        %1681 = vst.msk [vmem:[%s1679 + $0x9] sm:$0xff] %vm821, %v1676
        %s1682 = sld [smem:[#allocation3 + $0x6c]]
        %v1683 = vstv %s1682
        %v1684 = vmul.f32 %v1683, %v368
        %v1685 = vmul.f32 %v1683, %v369
        %v1686 = vadd.f32 %v1684, 0.0
        %v1687 = vadd.f32 %v1685, 0.0
        %s1688 = sld [smem:[#allocation3 + $0x6d]]
        %v1689 = vstv %s1688
        %v1690 = vmul.f32 %v1689, %v368
        %v1691 = vmul.f32 %v1689, %v369
        %1694 = vrot.lane.b32.xlu0 %v1690, 127
        %v1695 = vpop.permute.xlu0 %1694
        %1696 = vrot.lane.b32.xlu0 %v1691, 127
        %v1697 = vpop.permute.xlu0 %1696
        %v1700 = vadd.f32 %v1686, %v1695
        %v1701 = vadd.f32 %v1687, %v1697
        %s1702 = sld [smem:[#allocation3 + $0x6e]]
        %v1703 = vstv %s1702
        %v1704 = vmul.f32 %v1703, %v368
        %v1705 = vmul.f32 %v1703, %v369
        %1708 = vrot.lane.b32.xlu0 %v1704, 126
        %v1709 = vpop.permute.xlu0 %1708
        %1710 = vrot.lane.b32.xlu0 %v1705, 126
        %v1711 = vpop.permute.xlu0 %1710
        %v1714 = vadd.f32 %v1700, %v1709
        %v1715 = vadd.f32 %v1701, %v1711
        %s1716 = sld [smem:[#allocation3 + $0x6f]]
        %v1717 = vstv %s1716
        %v1718 = vmul.f32 %v1717, %v370
        %v1719 = vmul.f32 %v1717, %v371
        %v1720 = vadd.f32 %v1714, %v1718
        %v1721 = vadd.f32 %v1715, %v1719
        %s1722 = sld [smem:[#allocation3 + $0x70]]
        %v1723 = vstv %s1722
        %v1724 = vmul.f32 %v1723, %v370
        %v1725 = vmul.f32 %v1723, %v371
        %1728 = vrot.lane.b32.xlu0 %v1724, 127
        %v1729 = vpop.permute.xlu0 %1728
        %1730 = vrot.lane.b32.xlu0 %v1725, 127
        %v1731 = vpop.permute.xlu0 %1730
        %v1734 = vadd.f32 %v1720, %v1729
        %v1735 = vadd.f32 %v1721, %v1731
        %s1736 = sld [smem:[#allocation3 + $0x71]]
        %v1737 = vstv %s1736
        %v1738 = vmul.f32 %v1737, %v370
        %v1739 = vmul.f32 %v1737, %v371
        %1742 = vrot.lane.b32.xlu0 %v1738, 126
        %v1743 = vpop.permute.xlu0 %1742
        %1744 = vrot.lane.b32.xlu0 %v1739, 126
        %v1745 = vpop.permute.xlu0 %1744
        %v1748 = vadd.f32 %v1734, %v1743
        %v1749 = vadd.f32 %v1735, %v1745
        %s1750 = sld [smem:[#allocation3 + $0x72]]
        %v1751 = vstv %s1750
        %v1752 = vmul.f32 %v1751, %v372
        %v1753 = vmul.f32 %v1751, %v373
        %v1754 = vadd.f32 %v1748, %v1752
        %v1755 = vadd.f32 %v1749, %v1753
        %s1756 = sld [smem:[#allocation3 + $0x73]]
        %v1757 = vstv %s1756
        %v1758 = vmul.f32 %v1757, %v372
        %v1759 = vmul.f32 %v1757, %v373
        %1762 = vrot.lane.b32.xlu0 %v1758, 127
        %v1763 = vpop.permute.xlu0 %1762
        %1764 = vrot.lane.b32.xlu0 %v1759, 127
        %v1765 = vpop.permute.xlu0 %1764
        %v1768 = vadd.f32 %v1754, %v1763
        %v1769 = vadd.f32 %v1755, %v1765
        %s1770 = sld [smem:[#allocation3 + $0x74]]
        %v1771 = vstv %s1770
        %v1772 = vmul.f32 %v1771, %v372
        %v1773 = vmul.f32 %v1771, %v373
        %1776 = vrot.lane.b32.xlu0 %v1772, 126
        %v1777 = vpop.permute.xlu0 %1776
        %1778 = vrot.lane.b32.xlu0 %v1773, 126
        %v1779 = vpop.permute.xlu0 %1778
        %v1782 = vadd.f32 %v1768, %v1777
        %v1783 = vadd.f32 %v1769, %v1779
        %s1784 = sld [smem:[#allocation3 + $0x75]]
        %v1785 = vstv %s1784
        %v1786 = vmul.f32 %v1785, %v375
        %v1787 = vmul.f32 %v1785, %v376
        %v1788 = vadd.f32 %v1782, %v1786
        %v1789 = vadd.f32 %v1783, %v1787
        %s1790 = sld [smem:[#allocation3 + $0x76]]
        %v1791 = vstv %s1790
        %v1792 = vmul.f32 %v1791, %v375
        %v1793 = vmul.f32 %v1791, %v376
        %1796 = vrot.lane.b32.xlu0 %v1792, 127
        %v1797 = vpop.permute.xlu0 %1796
        %1798 = vrot.lane.b32.xlu0 %v1793, 127
        %v1799 = vpop.permute.xlu0 %1798
        %v1802 = vadd.f32 %v1788, %v1797
        %v1803 = vadd.f32 %v1789, %v1799
        %s1804 = sld [smem:[#allocation3 + $0x77]]
        %v1805 = vstv %s1804
        %v1806 = vmul.f32 %v1805, %v375
        %v1807 = vmul.f32 %v1805, %v376
        %1810 = vrot.lane.b32.xlu0 %v1806, 126
        %v1811 = vpop.permute.xlu0 %1810
        %1812 = vrot.lane.b32.xlu0 %v1807, 126
        %v1813 = vpop.permute.xlu0 %1812
        %v1816 = vadd.f32 %v1802, %v1811
        %v1817 = vadd.f32 %v1803, %v1813
        %s1818 = sld [smem:[#allocation3 + $0x78]]
        %v1819 = vstv %s1818
        %v1820 = vmul.f32 %v1819, %v377
        %v1821 = vmul.f32 %v1819, %v378
        %v1822 = vadd.f32 %v1816, %v1820
        %v1823 = vadd.f32 %v1817, %v1821
        %s1824 = sld [smem:[#allocation3 + $0x79]]
        %v1825 = vstv %s1824
        %v1826 = vmul.f32 %v1825, %v377
        %v1827 = vmul.f32 %v1825, %v378
        %1830 = vrot.lane.b32.xlu0 %v1826, 127
        %v1831 = vpop.permute.xlu0 %1830
        %1832 = vrot.lane.b32.xlu0 %v1827, 127
        %v1833 = vpop.permute.xlu0 %1832
        %v1836 = vadd.f32 %v1822, %v1831
        %v1837 = vadd.f32 %v1823, %v1833
        %s1838 = sld [smem:[#allocation3 + $0x7a]]
        %v1839 = vstv %s1838
        %v1840 = vmul.f32 %v1839, %v377
        %v1841 = vmul.f32 %v1839, %v378
        %1844 = vrot.lane.b32.xlu0 %v1840, 126
        %v1845 = vpop.permute.xlu0 %1844
        %1846 = vrot.lane.b32.xlu0 %v1841, 126
        %v1847 = vpop.permute.xlu0 %1846
        %v1850 = vadd.f32 %v1836, %v1845
        %v1851 = vadd.f32 %v1837, %v1847
        %s1852 = sld [smem:[#allocation3 + $0x7b]]
        %v1853 = vstv %s1852
        %v1854 = vmul.f32 %v1853, %v379
        %v1855 = vmul.f32 %v1853, %v380
        %v1856 = vadd.f32 %v1850, %v1854
        %v1857 = vadd.f32 %v1851, %v1855
        %s1858 = sld [smem:[#allocation3 + $0x7c]]
        %v1859 = vstv %s1858
        %v1860 = vmul.f32 %v1859, %v379
        %v1861 = vmul.f32 %v1859, %v380
        %1864 = vrot.lane.b32.xlu0 %v1860, 127
        %v1865 = vpop.permute.xlu0 %1864
        %1866 = vrot.lane.b32.xlu0 %v1861, 127
        %v1867 = vpop.permute.xlu0 %1866
        %v1870 = vadd.f32 %v1856, %v1865
        %v1871 = vadd.f32 %v1857, %v1867
        %s1872 = sld [smem:[#allocation3 + $0x7d]]
        %v1873 = vstv %s1872
        %v1874 = vmul.f32 %v1873, %v379
        %v1875 = vmul.f32 %v1873, %v380
        %1878 = vrot.lane.b32.xlu0 %v1874, 126
        %v1879 = vpop.permute.xlu0 %1878
        %1880 = vrot.lane.b32.xlu0 %v1875, 126
        %v1881 = vpop.permute.xlu0 %1880
        %v1884 = vadd.f32 %v1870, %v1879
        %v1885 = vadd.f32 %v1871, %v1881
        %s1886 = sld [smem:[#allocation3 + $0x7e]]
        %v1887 = vstv %s1886
        %v1888 = vmul.f32 %v1887, %v382
        %v1889 = vmul.f32 %v1887, %v383
        %v1890 = vadd.f32 %v1884, %v1888
        %v1891 = vadd.f32 %v1885, %v1889
        %s1892 = sld [smem:[#allocation3 + $0x7f]]
        %v1893 = vstv %s1892
        %v1894 = vmul.f32 %v1893, %v382
        %v1895 = vmul.f32 %v1893, %v383
        %1898 = vrot.lane.b32.xlu0 %v1894, 127
        %v1899 = vpop.permute.xlu0 %1898
        %1900 = vrot.lane.b32.xlu0 %v1895, 127
        %v1901 = vpop.permute.xlu0 %1900
        %v1904 = vadd.f32 %v1890, %v1899
        %v1905 = vadd.f32 %v1891, %v1901
        %s1906 = sld [smem:[#allocation3 + $0x80]]
        %v1907 = vstv %s1906
        %v1908 = vmul.f32 %v1907, %v382
        %v1909 = vmul.f32 %v1907, %v383
        %1912 = vrot.lane.b32.xlu0 %v1908, 126
        %v1913 = vpop.permute.xlu0 %1912
        %1914 = vrot.lane.b32.xlu0 %v1909, 126
        %v1915 = vpop.permute.xlu0 %1914
        %v1918 = vadd.f32 %v1904, %v1913
        %v1919 = vadd.f32 %v1905, %v1915
        %s1920 = sld [smem:[#allocation3 + $0x81]]
        %v1921 = vstv %s1920
        %v1922 = vmul.f32 %v1921, %v384
        %v1923 = vmul.f32 %v1921, %v385
        %v1924 = vadd.f32 %v1918, %v1922
        %v1925 = vadd.f32 %v1919, %v1923
        %s1926 = sld [smem:[#allocation3 + $0x82]]
        %v1927 = vstv %s1926
        %v1928 = vmul.f32 %v1927, %v384
        %v1929 = vmul.f32 %v1927, %v385
        %1932 = vrot.lane.b32.xlu0 %v1928, 127
        %v1933 = vpop.permute.xlu0 %1932
        %1934 = vrot.lane.b32.xlu0 %v1929, 127
        %v1935 = vpop.permute.xlu0 %1934
        %v1938 = vadd.f32 %v1924, %v1933
        %v1939 = vadd.f32 %v1925, %v1935
        %s1940 = sld [smem:[#allocation3 + $0x83]]
        %v1941 = vstv %s1940
        %v1942 = vmul.f32 %v1941, %v384
        %v1943 = vmul.f32 %v1941, %v385
        %1946 = vrot.lane.b32.xlu0 %v1942, 126
        %v1947 = vpop.permute.xlu0 %1946
        %1948 = vrot.lane.b32.xlu0 %v1943, 126
        %v1949 = vpop.permute.xlu0 %1948
        %v1952 = vadd.f32 %v1938, %v1947
        %v1953 = vadd.f32 %v1939, %v1949
        %s1954 = sld [smem:[#allocation3 + $0x84]]
        %v1955 = vstv %s1954
        %v1956 = vmul.f32 %v1955, %v386
        %v1957 = vmul.f32 %v1955, %v387
        %v1958 = vadd.f32 %v1952, %v1956
        %v1959 = vadd.f32 %v1953, %v1957
        %s1960 = sld [smem:[#allocation3 + $0x85]]
        %v1961 = vstv %s1960
        %v1962 = vmul.f32 %v1961, %v386
        %v1963 = vmul.f32 %v1961, %v387
        %1966 = vrot.lane.b32.xlu0 %v1962, 127
        %v1967 = vpop.permute.xlu0 %1966
        %1968 = vrot.lane.b32.xlu0 %v1963, 127
        %v1969 = vpop.permute.xlu0 %1968
        %v1972 = vadd.f32 %v1958, %v1967
        %v1973 = vadd.f32 %v1959, %v1969
        %s1974 = sld [smem:[#allocation3 + $0x86]]
        %v1975 = vstv %s1974
        %v1976 = vmul.f32 %v1975, %v386
        %v1977 = vmul.f32 %v1975, %v387
        %1980 = vrot.lane.b32.xlu0 %v1976, 126
        %v1981 = vpop.permute.xlu0 %1980
        %1982 = vrot.lane.b32.xlu0 %v1977, 126
        %v1983 = vpop.permute.xlu0 %1982
        %v1986 = vadd.f32 %v1972, %v1981
        %v1987 = vadd.f32 %v1973, %v1983
        %s1988 = sld [smem:[#allocation3 + $0x87]]
        %v1989 = vstv %s1988
        %v1990 = vmul.f32 %v1989, %v389
        %v1991 = vmul.f32 %v1989, %v390
        %v1992 = vadd.f32 %v1986, %v1990
        %v1993 = vadd.f32 %v1987, %v1991
        %s1994 = sld [smem:[#allocation3 + $0x88]]
        %v1995 = vstv %s1994
        %v1996 = vmul.f32 %v1995, %v389
        %v1997 = vmul.f32 %v1995, %v390
        %2000 = vrot.lane.b32.xlu0 %v1996, 127
        %v2001 = vpop.permute.xlu0 %2000
        %2002 = vrot.lane.b32.xlu0 %v1997, 127
        %v2003 = vpop.permute.xlu0 %2002
        %v2006 = vadd.f32 %v1992, %v2001
        %v2007 = vadd.f32 %v1993, %v2003
        %s2008 = sld [smem:[#allocation3 + $0x89]]
        %v2009 = vstv %s2008
        %v2010 = vmul.f32 %v2009, %v389
        %v2011 = vmul.f32 %v2009, %v390
        %2014 = vrot.lane.b32.xlu0 %v2010, 126
        %v2015 = vpop.permute.xlu0 %2014
        %2016 = vrot.lane.b32.xlu0 %v2011, 126
        %v2017 = vpop.permute.xlu0 %2016
        %v2020 = vadd.f32 %v2006, %v2015
        %v2021 = vadd.f32 %v2007, %v2017
        %s2022 = sld [smem:[#allocation3 + $0x8a]]
        %v2023 = vstv %s2022
        %v2024 = vmul.f32 %v2023, %v391
        %v2025 = vmul.f32 %v2023, %v392
        %v2026 = vadd.f32 %v2020, %v2024
        %v2027 = vadd.f32 %v2021, %v2025
        %s2028 = sld [smem:[#allocation3 + $0x8b]]
        %v2029 = vstv %s2028
        %v2030 = vmul.f32 %v2029, %v391
        %v2031 = vmul.f32 %v2029, %v392
        %2034 = vrot.lane.b32.xlu0 %v2030, 127
        %v2035 = vpop.permute.xlu0 %2034
        %2036 = vrot.lane.b32.xlu0 %v2031, 127
        %v2037 = vpop.permute.xlu0 %2036
        %v2040 = vadd.f32 %v2026, %v2035
        %v2041 = vadd.f32 %v2027, %v2037
        %s2042 = sld [smem:[#allocation3 + $0x8c]]
        %v2043 = vstv %s2042
        %v2044 = vmul.f32 %v2043, %v391
        %v2045 = vmul.f32 %v2043, %v392
        %2048 = vrot.lane.b32.xlu0 %v2044, 126
        %v2049 = vpop.permute.xlu0 %2048
        %2050 = vrot.lane.b32.xlu0 %v2045, 126
        %v2051 = vpop.permute.xlu0 %2050
        %v2054 = vadd.f32 %v2040, %v2049
        %v2055 = vadd.f32 %v2041, %v2051
        %s2056 = sld [smem:[#allocation3 + $0x8d]]
        %v2057 = vstv %s2056
        %v2058 = vmul.f32 %v2057, %v393
        %v2059 = vmul.f32 %v2057, %v394
        %v2060 = vadd.f32 %v2054, %v2058
        %v2061 = vadd.f32 %v2055, %v2059
        %s2062 = sld [smem:[#allocation3 + $0x8e]]
        %v2063 = vstv %s2062
        %v2064 = vmul.f32 %v2063, %v393
        %v2065 = vmul.f32 %v2063, %v394
        %2068 = vrot.lane.b32.xlu0 %v2064, 127
        %v2069 = vpop.permute.xlu0 %2068
        %2070 = vrot.lane.b32.xlu0 %v2065, 127
        %v2071 = vpop.permute.xlu0 %2070
        %v2074 = vadd.f32 %v2060, %v2069
        %v2075 = vadd.f32 %v2061, %v2071
        %s2076 = sld [smem:[#allocation3 + $0x8f]]
        %v2077 = vstv %s2076
        %v2078 = vmul.f32 %v2077, %v393
        %v2079 = vmul.f32 %v2077, %v394
        %2082 = vrot.lane.b32.xlu0 %v2078, 126
        %v2083 = vpop.permute.xlu0 %2082
        %2084 = vrot.lane.b32.xlu0 %v2079, 126
        %v2085 = vpop.permute.xlu0 %2084
        %v2088 = vadd.f32 %v2074, %v2083
        %v2089 = vadd.f32 %v2075, %v2085
        %s2090 = sld [smem:[#allocation6 + $0x3]]
        %v2091 = vstv %s2090
        %v2092 = vmul.f32 %v2088, %v2091
        %v2093 = vmul.f32 %v2089, %v2091
        %s2094 = sld [smem:[#allocation8 + $0x3]]
        %v2095 = vstv %s2094
        %v2096 = vadd.f32 %v2092, %v2095
        %v2097 = vadd.f32 %v2093, %v2095
        %v2098 = vmax.f32 %v2096, 0.0
        %v2099 = vmax.f32 %v2097, 0.0
        %2102 = vrot.lane.b32.xlu0 %v2098, 1
        %v2103 = vpop.permute.xlu0 %2102
        %2104 = vrot.lane.b32.xlu0 %v2099, 1
        %v2105 = vpop.permute.xlu0 %2104
        %s2108 = scalar_lea.vmem [#allocation2], 72
        %2109 = vst.msk [vmem:[%s2108 + $0x1] sm:$0xff] %vm821, %v2103
        %2110 = vst.msk [vmem:[%s2108 + $0x9] sm:$0xff] %vm821, %v2105
        %v2111 = vld [vmem:[#allocation2] sm:$0xff]
        %v2112 = vld [vmem:[#allocation2 + $0x8] sm:$0xff]
        %v2113 = vld [vmem:[#allocation2 + $0x1] sm:$0xff]
        %v2114 = vld [vmem:[#allocation2 + $0x9] sm:$0xff]
        %v2115 = vld [vmem:[#allocation2 + $0x2] sm:$0xff]
        %v2116 = vld [vmem:[#allocation2 + $0xa] sm:$0xff]
        %v2117 = vld [vmem:[%s1250] sm:$0xff]
        %v2118 = vld [vmem:[%s1250 + $0x8] sm:$0xff]
        %v2119 = vld [vmem:[%s1250 + $0x1] sm:$0xff]
        %v2120 = vld [vmem:[%s1250 + $0x9] sm:$0xff]
        %v2121 = vld [vmem:[%s1250 + $0x2] sm:$0xff]
        %v2122 = vld [vmem:[%s1250 + $0xa] sm:$0xff]
        %v2123 = vld [vmem:[%s1679] sm:$0xff]
        %v2124 = vld [vmem:[%s1679 + $0x8] sm:$0xff]
        %v2125 = vld [vmem:[%s1679 + $0x1] sm:$0xff]
        %v2126 = vld [vmem:[%s1679 + $0x9] sm:$0xff]
        %v2127 = vld [vmem:[%s1679 + $0x2] sm:$0xff]
        %v2128 = vld [vmem:[%s1679 + $0xa] sm:$0xff]
        %v2129 = vld [vmem:[%s2108] sm:$0xff]
        %v2130 = vld [vmem:[%s2108 + $0x8] sm:$0xff]
        %v2131 = vld [vmem:[%s2108 + $0x1] sm:$0xff]
        %v2132 = vld [vmem:[%s2108 + $0x9] sm:$0xff]
        %v2133 = vld [vmem:[%s2108 + $0x2] sm:$0xff]
        %v2134 = vld [vmem:[%s2108 + $0xa] sm:$0xff]
        %s2135 = sld [smem:[#allocation9]]
        %v2136 = vstv %s2135
        %v2137 = vmul.f32 %v2136, %v2111
        %v2138 = vmul.f32 %v2136, %v2112
        %v2139 = vadd.f32 %v2137, 0.0
        %v2140 = vadd.f32 %v2138, 0.0
        %s2141 = sld [smem:[#allocation9 + $0x1]]
        %v2142 = vstv %s2141
        %v2143 = vmul.f32 %v2142, %v2111
        %v2144 = vmul.f32 %v2142, %v2112
        %2147 = vrot.lane.b32.xlu0 %v2143, 127
        %v2148 = vpop.permute.xlu0 %2147
        %2149 = vrot.lane.b32.xlu0 %v2144, 127
        %v2150 = vpop.permute.xlu0 %2149
        %v2153 = vadd.f32 %v2139, %v2148
        %v2154 = vadd.f32 %v2140, %v2150
        %s2155 = sld [smem:[#allocation9 + $0x2]]
        %v2156 = vstv %s2155
        %v2157 = vmul.f32 %v2156, %v2111
        %v2158 = vmul.f32 %v2156, %v2112
        %2161 = vrot.lane.b32.xlu0 %v2157, 126
        %v2162 = vpop.permute.xlu0 %2161
        %2163 = vrot.lane.b32.xlu0 %v2158, 126
        %v2164 = vpop.permute.xlu0 %2163
        %v2167 = vadd.f32 %v2153, %v2162
        %v2168 = vadd.f32 %v2154, %v2164
        %s2169 = sld [smem:[#allocation9 + $0x3]]
        %v2170 = vstv %s2169
        %v2171 = vmul.f32 %v2170, %v2113
        %v2172 = vmul.f32 %v2170, %v2114
        %v2173 = vadd.f32 %v2167, %v2171
        %v2174 = vadd.f32 %v2168, %v2172
        %s2175 = sld [smem:[#allocation9 + $0x4]]
        %v2176 = vstv %s2175
        %v2177 = vmul.f32 %v2176, %v2113
        %v2178 = vmul.f32 %v2176, %v2114
        %2181 = vrot.lane.b32.xlu0 %v2177, 127
        %v2182 = vpop.permute.xlu0 %2181
        %2183 = vrot.lane.b32.xlu0 %v2178, 127
        %v2184 = vpop.permute.xlu0 %2183
        %v2187 = vadd.f32 %v2173, %v2182
        %v2188 = vadd.f32 %v2174, %v2184
        %s2189 = sld [smem:[#allocation9 + $0x5]]
        %v2190 = vstv %s2189
        %v2191 = vmul.f32 %v2190, %v2113
        %v2192 = vmul.f32 %v2190, %v2114
        %2195 = vrot.lane.b32.xlu0 %v2191, 126
        %v2196 = vpop.permute.xlu0 %2195
        %2197 = vrot.lane.b32.xlu0 %v2192, 126
        %v2198 = vpop.permute.xlu0 %2197
        %v2201 = vadd.f32 %v2187, %v2196
        %v2202 = vadd.f32 %v2188, %v2198
        %s2203 = sld [smem:[#allocation9 + $0x6]]
        %v2204 = vstv %s2203
        %v2205 = vmul.f32 %v2204, %v2115
        %v2206 = vmul.f32 %v2204, %v2116
        %v2207 = vadd.f32 %v2201, %v2205
        %v2208 = vadd.f32 %v2202, %v2206
        %s2209 = sld [smem:[#allocation9 + $0x7]]
        %v2210 = vstv %s2209
        %v2211 = vmul.f32 %v2210, %v2115
        %v2212 = vmul.f32 %v2210, %v2116
        %2215 = vrot.lane.b32.xlu0 %v2211, 127
        %v2216 = vpop.permute.xlu0 %2215
        %2217 = vrot.lane.b32.xlu0 %v2212, 127
        %v2218 = vpop.permute.xlu0 %2217
        %v2221 = vadd.f32 %v2207, %v2216
        %v2222 = vadd.f32 %v2208, %v2218
        %s2223 = sld [smem:[#allocation9 + $0x8]]
        %v2224 = vstv %s2223
        %v2225 = vmul.f32 %v2224, %v2115
        %v2226 = vmul.f32 %v2224, %v2116
        %2229 = vrot.lane.b32.xlu0 %v2225, 126
        %v2230 = vpop.permute.xlu0 %2229
        %2231 = vrot.lane.b32.xlu0 %v2226, 126
        %v2232 = vpop.permute.xlu0 %2231
        %v2235 = vadd.f32 %v2221, %v2230
        %v2236 = vadd.f32 %v2222, %v2232
        %s2237 = sld [smem:[#allocation9 + $0x9]]
        %v2238 = vstv %s2237
        %v2239 = vmul.f32 %v2238, %v2117
        %v2240 = vmul.f32 %v2238, %v2118
        %v2241 = vadd.f32 %v2235, %v2239
        %v2242 = vadd.f32 %v2236, %v2240
        %s2243 = sld [smem:[#allocation9 + $0xa]]
        %v2244 = vstv %s2243
        %v2245 = vmul.f32 %v2244, %v2117
        %v2246 = vmul.f32 %v2244, %v2118
        %2249 = vrot.lane.b32.xlu0 %v2245, 127
        %v2250 = vpop.permute.xlu0 %2249
        %2251 = vrot.lane.b32.xlu0 %v2246, 127
        %v2252 = vpop.permute.xlu0 %2251
        %v2255 = vadd.f32 %v2241, %v2250
        %v2256 = vadd.f32 %v2242, %v2252
        %s2257 = sld [smem:[#allocation9 + $0xb]]
        %v2258 = vstv %s2257
        %v2259 = vmul.f32 %v2258, %v2117
        %v2260 = vmul.f32 %v2258, %v2118
        %2263 = vrot.lane.b32.xlu0 %v2259, 126
        %v2264 = vpop.permute.xlu0 %2263
        %2265 = vrot.lane.b32.xlu0 %v2260, 126
        %v2266 = vpop.permute.xlu0 %2265
        %v2269 = vadd.f32 %v2255, %v2264
        %v2270 = vadd.f32 %v2256, %v2266
        %s2271 = sld [smem:[#allocation9 + $0xc]]
        %v2272 = vstv %s2271
        %v2273 = vmul.f32 %v2272, %v2119
        %v2274 = vmul.f32 %v2272, %v2120
        %v2275 = vadd.f32 %v2269, %v2273
        %v2276 = vadd.f32 %v2270, %v2274
        %s2277 = sld [smem:[#allocation9 + $0xd]]
        %v2278 = vstv %s2277
        %v2279 = vmul.f32 %v2278, %v2119
        %v2280 = vmul.f32 %v2278, %v2120
        %2283 = vrot.lane.b32.xlu0 %v2279, 127
        %v2284 = vpop.permute.xlu0 %2283
        %2285 = vrot.lane.b32.xlu0 %v2280, 127
        %v2286 = vpop.permute.xlu0 %2285
        %v2289 = vadd.f32 %v2275, %v2284
        %v2290 = vadd.f32 %v2276, %v2286
        %s2291 = sld [smem:[#allocation9 + $0xe]]
        %v2292 = vstv %s2291
        %v2293 = vmul.f32 %v2292, %v2119
        %v2294 = vmul.f32 %v2292, %v2120
        %2297 = vrot.lane.b32.xlu0 %v2293, 126
        %v2298 = vpop.permute.xlu0 %2297
        %2299 = vrot.lane.b32.xlu0 %v2294, 126
        %v2300 = vpop.permute.xlu0 %2299
        %v2303 = vadd.f32 %v2289, %v2298
        %v2304 = vadd.f32 %v2290, %v2300
        %s2305 = sld [smem:[#allocation9 + $0xf]]
        %v2306 = vstv %s2305
        %v2307 = vmul.f32 %v2306, %v2121
        %v2308 = vmul.f32 %v2306, %v2122
        %v2309 = vadd.f32 %v2303, %v2307
        %v2310 = vadd.f32 %v2304, %v2308
        %s2311 = sld [smem:[#allocation9 + $0x10]]
        %v2312 = vstv %s2311
        %v2313 = vmul.f32 %v2312, %v2121
        %v2314 = vmul.f32 %v2312, %v2122
        %2317 = vrot.lane.b32.xlu0 %v2313, 127
        %v2318 = vpop.permute.xlu0 %2317
        %2319 = vrot.lane.b32.xlu0 %v2314, 127
        %v2320 = vpop.permute.xlu0 %2319
        %v2323 = vadd.f32 %v2309, %v2318
        %v2324 = vadd.f32 %v2310, %v2320
        %s2325 = sld [smem:[#allocation9 + $0x11]]
        %v2326 = vstv %s2325
        %v2327 = vmul.f32 %v2326, %v2121
        %v2328 = vmul.f32 %v2326, %v2122
        %2331 = vrot.lane.b32.xlu0 %v2327, 126
        %v2332 = vpop.permute.xlu0 %2331
        %2333 = vrot.lane.b32.xlu0 %v2328, 126
        %v2334 = vpop.permute.xlu0 %2333
        %v2337 = vadd.f32 %v2323, %v2332
        %v2338 = vadd.f32 %v2324, %v2334
        %s2339 = sld [smem:[#allocation9 + $0x12]]
        %v2340 = vstv %s2339
        %v2341 = vmul.f32 %v2340, %v2123
        %v2342 = vmul.f32 %v2340, %v2124
        %v2343 = vadd.f32 %v2337, %v2341
        %v2344 = vadd.f32 %v2338, %v2342
        %s2345 = sld [smem:[#allocation9 + $0x13]]
        %v2346 = vstv %s2345
        %v2347 = vmul.f32 %v2346, %v2123
        %v2348 = vmul.f32 %v2346, %v2124
        %2351 = vrot.lane.b32.xlu0 %v2347, 127
        %v2352 = vpop.permute.xlu0 %2351
        %2353 = vrot.lane.b32.xlu0 %v2348, 127
        %v2354 = vpop.permute.xlu0 %2353
        %v2357 = vadd.f32 %v2343, %v2352
        %v2358 = vadd.f32 %v2344, %v2354
        %s2359 = sld [smem:[#allocation9 + $0x14]]
        %v2360 = vstv %s2359
        %v2361 = vmul.f32 %v2360, %v2123
        %v2362 = vmul.f32 %v2360, %v2124
        %2365 = vrot.lane.b32.xlu0 %v2361, 126
        %v2366 = vpop.permute.xlu0 %2365
        %2367 = vrot.lane.b32.xlu0 %v2362, 126
        %v2368 = vpop.permute.xlu0 %2367
        %v2371 = vadd.f32 %v2357, %v2366
        %v2372 = vadd.f32 %v2358, %v2368
        %s2373 = sld [smem:[#allocation9 + $0x15]]
        %v2374 = vstv %s2373
        %v2375 = vmul.f32 %v2374, %v2125
        %v2376 = vmul.f32 %v2374, %v2126
        %v2377 = vadd.f32 %v2371, %v2375
        %v2378 = vadd.f32 %v2372, %v2376
        %s2379 = sld [smem:[#allocation9 + $0x16]]
        %v2380 = vstv %s2379
        %v2381 = vmul.f32 %v2380, %v2125
        %v2382 = vmul.f32 %v2380, %v2126
        %2385 = vrot.lane.b32.xlu0 %v2381, 127
        %v2386 = vpop.permute.xlu0 %2385
        %2387 = vrot.lane.b32.xlu0 %v2382, 127
        %v2388 = vpop.permute.xlu0 %2387
        %v2391 = vadd.f32 %v2377, %v2386
        %v2392 = vadd.f32 %v2378, %v2388
        %s2393 = sld [smem:[#allocation9 + $0x17]]
        %v2394 = vstv %s2393
        %v2395 = vmul.f32 %v2394, %v2125
        %v2396 = vmul.f32 %v2394, %v2126
        %2399 = vrot.lane.b32.xlu0 %v2395, 126
        %v2400 = vpop.permute.xlu0 %2399
        %2401 = vrot.lane.b32.xlu0 %v2396, 126
        %v2402 = vpop.permute.xlu0 %2401
        %v2405 = vadd.f32 %v2391, %v2400
        %v2406 = vadd.f32 %v2392, %v2402
        %s2407 = sld [smem:[#allocation9 + $0x18]]
        %v2408 = vstv %s2407
        %v2409 = vmul.f32 %v2408, %v2127
        %v2410 = vmul.f32 %v2408, %v2128
        %v2411 = vadd.f32 %v2405, %v2409
        %v2412 = vadd.f32 %v2406, %v2410
        %s2413 = sld [smem:[#allocation9 + $0x19]]
        %v2414 = vstv %s2413
        %v2415 = vmul.f32 %v2414, %v2127
        %v2416 = vmul.f32 %v2414, %v2128
        %2419 = vrot.lane.b32.xlu0 %v2415, 127
        %v2420 = vpop.permute.xlu0 %2419
        %2421 = vrot.lane.b32.xlu0 %v2416, 127
        %v2422 = vpop.permute.xlu0 %2421
        %v2425 = vadd.f32 %v2411, %v2420
        %v2426 = vadd.f32 %v2412, %v2422
        %s2427 = sld [smem:[#allocation9 + $0x1a]]
        %v2428 = vstv %s2427
        %v2429 = vmul.f32 %v2428, %v2127
        %v2430 = vmul.f32 %v2428, %v2128
        %2433 = vrot.lane.b32.xlu0 %v2429, 126
        %v2434 = vpop.permute.xlu0 %2433
        %2435 = vrot.lane.b32.xlu0 %v2430, 126
        %v2436 = vpop.permute.xlu0 %2435
        %v2439 = vadd.f32 %v2425, %v2434
        %v2440 = vadd.f32 %v2426, %v2436
        %s2441 = sld [smem:[#allocation9 + $0x1b]]
        %v2442 = vstv %s2441
        %v2443 = vmul.f32 %v2442, %v2129
        %v2444 = vmul.f32 %v2442, %v2130
        %v2445 = vadd.f32 %v2439, %v2443
        %v2446 = vadd.f32 %v2440, %v2444
        %s2447 = sld [smem:[#allocation9 + $0x1c]]
        %v2448 = vstv %s2447
        %v2449 = vmul.f32 %v2448, %v2129
        %v2450 = vmul.f32 %v2448, %v2130
        %2453 = vrot.lane.b32.xlu0 %v2449, 127
        %v2454 = vpop.permute.xlu0 %2453
        %2455 = vrot.lane.b32.xlu0 %v2450, 127
        %v2456 = vpop.permute.xlu0 %2455
        %v2459 = vadd.f32 %v2445, %v2454
        %v2460 = vadd.f32 %v2446, %v2456
        %s2461 = sld [smem:[#allocation9 + $0x1d]]
        %v2462 = vstv %s2461
        %v2463 = vmul.f32 %v2462, %v2129
        %v2464 = vmul.f32 %v2462, %v2130
        %2467 = vrot.lane.b32.xlu0 %v2463, 126
        %v2468 = vpop.permute.xlu0 %2467
        %2469 = vrot.lane.b32.xlu0 %v2464, 126
        %v2470 = vpop.permute.xlu0 %2469
        %v2473 = vadd.f32 %v2459, %v2468
        %v2474 = vadd.f32 %v2460, %v2470
        %s2475 = sld [smem:[#allocation9 + $0x1e]]
        %v2476 = vstv %s2475
        %v2477 = vmul.f32 %v2476, %v2131
        %v2478 = vmul.f32 %v2476, %v2132
        %v2479 = vadd.f32 %v2473, %v2477
        %v2480 = vadd.f32 %v2474, %v2478
        %s2481 = sld [smem:[#allocation9 + $0x1f]]
        %v2482 = vstv %s2481
        %v2483 = vmul.f32 %v2482, %v2131
        %v2484 = vmul.f32 %v2482, %v2132
        %2487 = vrot.lane.b32.xlu0 %v2483, 127
        %v2488 = vpop.permute.xlu0 %2487
        %2489 = vrot.lane.b32.xlu0 %v2484, 127
        %v2490 = vpop.permute.xlu0 %2489
        %v2493 = vadd.f32 %v2479, %v2488
        %v2494 = vadd.f32 %v2480, %v2490
        %s2495 = sld [smem:[#allocation9 + $0x20]]
        %v2496 = vstv %s2495
        %v2497 = vmul.f32 %v2496, %v2131
        %v2498 = vmul.f32 %v2496, %v2132
        %2501 = vrot.lane.b32.xlu0 %v2497, 126
        %v2502 = vpop.permute.xlu0 %2501
        %2503 = vrot.lane.b32.xlu0 %v2498, 126
        %v2504 = vpop.permute.xlu0 %2503
        %v2507 = vadd.f32 %v2493, %v2502
        %v2508 = vadd.f32 %v2494, %v2504
        %s2509 = sld [smem:[#allocation9 + $0x21]]
        %v2510 = vstv %s2509
        %v2511 = vmul.f32 %v2510, %v2133
        %v2512 = vmul.f32 %v2510, %v2134
        %v2513 = vadd.f32 %v2507, %v2511
        %v2514 = vadd.f32 %v2508, %v2512
        %s2515 = sld [smem:[#allocation9 + $0x22]]
        %v2516 = vstv %s2515
        %v2517 = vmul.f32 %v2516, %v2133
        %v2518 = vmul.f32 %v2516, %v2134
        %2521 = vrot.lane.b32.xlu0 %v2517, 127
        %v2522 = vpop.permute.xlu0 %2521
        %2523 = vrot.lane.b32.xlu0 %v2518, 127
        %v2524 = vpop.permute.xlu0 %2523
        %v2527 = vadd.f32 %v2513, %v2522
        %v2528 = vadd.f32 %v2514, %v2524
        %s2529 = sld [smem:[#allocation9 + $0x23]]
        %v2530 = vstv %s2529
        %v2531 = vmul.f32 %v2530, %v2133
        %v2532 = vmul.f32 %v2530, %v2134
        %2535 = vrot.lane.b32.xlu0 %v2531, 126
        %v2536 = vpop.permute.xlu0 %2535
        %2537 = vrot.lane.b32.xlu0 %v2532, 126
        %v2538 = vpop.permute.xlu0 %2537
        %v2541 = vadd.f32 %v2527, %v2536
        %v2542 = vadd.f32 %v2528, %v2538
        %s2543 = sld [smem:[#allocation11]]
        %v2544 = vstv %s2543
        %v2545 = vmul.f32 %v2541, %v2544
        %v2546 = vmul.f32 %v2542, %v2544
        %s2547 = sld [smem:[#allocation12]]
        %v2548 = vstv %s2547
        %v2549 = vadd.f32 %v2545, %v2548
        %v2550 = vadd.f32 %v2546, %v2548
        %v2551 = vmax.f32 %v2549, 0.0
        %v2552 = vmax.f32 %v2550, 0.0
        %vm2553 = vcmask 130048
        %2554 = vst.msk [vmem:[%s348] sm:$0xff] %vm2553, %v2551
        %2555 = vst.msk [vmem:[%s348 + $0x8] sm:$0xff] %vm2553, %v2552
        %s2556 = sld [smem:[#allocation9 + $0x24]]
        %v2557 = vstv %s2556
        %v2558 = vmul.f32 %v2557, %v2111
        %v2559 = vmul.f32 %v2557, %v2112
        %v2560 = vadd.f32 %v2558, 0.0
        %v2561 = vadd.f32 %v2559, 0.0
        %s2562 = sld [smem:[#allocation9 + $0x25]]
        %v2563 = vstv %s2562
        %v2564 = vmul.f32 %v2563, %v2111
        %v2565 = vmul.f32 %v2563, %v2112
        %2568 = vrot.lane.b32.xlu0 %v2564, 127
        %v2569 = vpop.permute.xlu0 %2568
        %2570 = vrot.lane.b32.xlu0 %v2565, 127
        %v2571 = vpop.permute.xlu0 %2570
        %v2574 = vadd.f32 %v2560, %v2569
        %v2575 = vadd.f32 %v2561, %v2571
        %s2576 = sld [smem:[#allocation9 + $0x26]]
        %v2577 = vstv %s2576
        %v2578 = vmul.f32 %v2577, %v2111
        %v2579 = vmul.f32 %v2577, %v2112
        %2582 = vrot.lane.b32.xlu0 %v2578, 126
        %v2583 = vpop.permute.xlu0 %2582
        %2584 = vrot.lane.b32.xlu0 %v2579, 126
        %v2585 = vpop.permute.xlu0 %2584
        %v2588 = vadd.f32 %v2574, %v2583
        %v2589 = vadd.f32 %v2575, %v2585
        %s2590 = sld [smem:[#allocation9 + $0x27]]
        %v2591 = vstv %s2590
        %v2592 = vmul.f32 %v2591, %v2113
        %v2593 = vmul.f32 %v2591, %v2114
        %v2594 = vadd.f32 %v2588, %v2592
        %v2595 = vadd.f32 %v2589, %v2593
        %s2596 = sld [smem:[#allocation9 + $0x28]]
        %v2597 = vstv %s2596
        %v2598 = vmul.f32 %v2597, %v2113
        %v2599 = vmul.f32 %v2597, %v2114
        %2602 = vrot.lane.b32.xlu0 %v2598, 127
        %v2603 = vpop.permute.xlu0 %2602
        %2604 = vrot.lane.b32.xlu0 %v2599, 127
        %v2605 = vpop.permute.xlu0 %2604
        %v2608 = vadd.f32 %v2594, %v2603
        %v2609 = vadd.f32 %v2595, %v2605
        %s2610 = sld [smem:[#allocation9 + $0x29]]
        %v2611 = vstv %s2610
        %v2612 = vmul.f32 %v2611, %v2113
        %v2613 = vmul.f32 %v2611, %v2114
        %2616 = vrot.lane.b32.xlu0 %v2612, 126
        %v2617 = vpop.permute.xlu0 %2616
        %2618 = vrot.lane.b32.xlu0 %v2613, 126
        %v2619 = vpop.permute.xlu0 %2618
        %v2622 = vadd.f32 %v2608, %v2617
        %v2623 = vadd.f32 %v2609, %v2619
        %s2624 = sld [smem:[#allocation9 + $0x2a]]
        %v2625 = vstv %s2624
        %v2626 = vmul.f32 %v2625, %v2115
        %v2627 = vmul.f32 %v2625, %v2116
        %v2628 = vadd.f32 %v2622, %v2626
        %v2629 = vadd.f32 %v2623, %v2627
        %s2630 = sld [smem:[#allocation9 + $0x2b]]
        %v2631 = vstv %s2630
        %v2632 = vmul.f32 %v2631, %v2115
        %v2633 = vmul.f32 %v2631, %v2116
        %2636 = vrot.lane.b32.xlu0 %v2632, 127
        %v2637 = vpop.permute.xlu0 %2636
        %2638 = vrot.lane.b32.xlu0 %v2633, 127
        %v2639 = vpop.permute.xlu0 %2638
        %v2642 = vadd.f32 %v2628, %v2637
        %v2643 = vadd.f32 %v2629, %v2639
        %s2644 = sld [smem:[#allocation9 + $0x2c]]
        %v2645 = vstv %s2644
        %v2646 = vmul.f32 %v2645, %v2115
        %v2647 = vmul.f32 %v2645, %v2116
        %2650 = vrot.lane.b32.xlu0 %v2646, 126
        %v2651 = vpop.permute.xlu0 %2650
        %2652 = vrot.lane.b32.xlu0 %v2647, 126
        %v2653 = vpop.permute.xlu0 %2652
        %v2656 = vadd.f32 %v2642, %v2651
        %v2657 = vadd.f32 %v2643, %v2653
        %s2658 = sld [smem:[#allocation9 + $0x2d]]
        %v2659 = vstv %s2658
        %v2660 = vmul.f32 %v2659, %v2117
        %v2661 = vmul.f32 %v2659, %v2118
        %v2662 = vadd.f32 %v2656, %v2660
        %v2663 = vadd.f32 %v2657, %v2661
        %s2664 = sld [smem:[#allocation9 + $0x2e]]
        %v2665 = vstv %s2664
        %v2666 = vmul.f32 %v2665, %v2117
        %v2667 = vmul.f32 %v2665, %v2118
        %2670 = vrot.lane.b32.xlu0 %v2666, 127
        %v2671 = vpop.permute.xlu0 %2670
        %2672 = vrot.lane.b32.xlu0 %v2667, 127
        %v2673 = vpop.permute.xlu0 %2672
        %v2676 = vadd.f32 %v2662, %v2671
        %v2677 = vadd.f32 %v2663, %v2673
        %s2678 = sld [smem:[#allocation9 + $0x2f]]
        %v2679 = vstv %s2678
        %v2680 = vmul.f32 %v2679, %v2117
        %v2681 = vmul.f32 %v2679, %v2118
        %2684 = vrot.lane.b32.xlu0 %v2680, 126
        %v2685 = vpop.permute.xlu0 %2684
        %2686 = vrot.lane.b32.xlu0 %v2681, 126
        %v2687 = vpop.permute.xlu0 %2686
        %v2690 = vadd.f32 %v2676, %v2685
        %v2691 = vadd.f32 %v2677, %v2687
        %s2692 = sld [smem:[#allocation9 + $0x30]]
        %v2693 = vstv %s2692
        %v2694 = vmul.f32 %v2693, %v2119
        %v2695 = vmul.f32 %v2693, %v2120
        %v2696 = vadd.f32 %v2690, %v2694
        %v2697 = vadd.f32 %v2691, %v2695
        %s2698 = sld [smem:[#allocation9 + $0x31]]
        %v2699 = vstv %s2698
        %v2700 = vmul.f32 %v2699, %v2119
        %v2701 = vmul.f32 %v2699, %v2120
        %2704 = vrot.lane.b32.xlu0 %v2700, 127
        %v2705 = vpop.permute.xlu0 %2704
        %2706 = vrot.lane.b32.xlu0 %v2701, 127
        %v2707 = vpop.permute.xlu0 %2706
        %v2710 = vadd.f32 %v2696, %v2705
        %v2711 = vadd.f32 %v2697, %v2707
        %s2712 = sld [smem:[#allocation9 + $0x32]]
        %v2713 = vstv %s2712
        %v2714 = vmul.f32 %v2713, %v2119
        %v2715 = vmul.f32 %v2713, %v2120
        %2718 = vrot.lane.b32.xlu0 %v2714, 126
        %v2719 = vpop.permute.xlu0 %2718
        %2720 = vrot.lane.b32.xlu0 %v2715, 126
        %v2721 = vpop.permute.xlu0 %2720
        %v2724 = vadd.f32 %v2710, %v2719
        %v2725 = vadd.f32 %v2711, %v2721
        %s2726 = sld [smem:[#allocation9 + $0x33]]
        %v2727 = vstv %s2726
        %v2728 = vmul.f32 %v2727, %v2121
        %v2729 = vmul.f32 %v2727, %v2122
        %v2730 = vadd.f32 %v2724, %v2728
        %v2731 = vadd.f32 %v2725, %v2729
        %s2732 = sld [smem:[#allocation9 + $0x34]]
        %v2733 = vstv %s2732
        %v2734 = vmul.f32 %v2733, %v2121
        %v2735 = vmul.f32 %v2733, %v2122
        %2738 = vrot.lane.b32.xlu0 %v2734, 127
        %v2739 = vpop.permute.xlu0 %2738
        %2740 = vrot.lane.b32.xlu0 %v2735, 127
        %v2741 = vpop.permute.xlu0 %2740
        %v2744 = vadd.f32 %v2730, %v2739
        %v2745 = vadd.f32 %v2731, %v2741
        %s2746 = sld [smem:[#allocation9 + $0x35]]
        %v2747 = vstv %s2746
        %v2748 = vmul.f32 %v2747, %v2121
        %v2749 = vmul.f32 %v2747, %v2122
        %2752 = vrot.lane.b32.xlu0 %v2748, 126
        %v2753 = vpop.permute.xlu0 %2752
        %2754 = vrot.lane.b32.xlu0 %v2749, 126
        %v2755 = vpop.permute.xlu0 %2754
        %v2758 = vadd.f32 %v2744, %v2753
        %v2759 = vadd.f32 %v2745, %v2755
        %s2760 = sld [smem:[#allocation9 + $0x36]]
        %v2761 = vstv %s2760
        %v2762 = vmul.f32 %v2761, %v2123
        %v2763 = vmul.f32 %v2761, %v2124
        %v2764 = vadd.f32 %v2758, %v2762
        %v2765 = vadd.f32 %v2759, %v2763
        %s2766 = sld [smem:[#allocation9 + $0x37]]
        %v2767 = vstv %s2766
        %v2768 = vmul.f32 %v2767, %v2123
        %v2769 = vmul.f32 %v2767, %v2124
        %2772 = vrot.lane.b32.xlu0 %v2768, 127
        %v2773 = vpop.permute.xlu0 %2772
        %2774 = vrot.lane.b32.xlu0 %v2769, 127
        %v2775 = vpop.permute.xlu0 %2774
        %v2778 = vadd.f32 %v2764, %v2773
        %v2779 = vadd.f32 %v2765, %v2775
        %s2780 = sld [smem:[#allocation9 + $0x38]]
        %v2781 = vstv %s2780
        %v2782 = vmul.f32 %v2781, %v2123
        %v2783 = vmul.f32 %v2781, %v2124
        %2786 = vrot.lane.b32.xlu0 %v2782, 126
        %v2787 = vpop.permute.xlu0 %2786
        %2788 = vrot.lane.b32.xlu0 %v2783, 126
        %v2789 = vpop.permute.xlu0 %2788
        %v2792 = vadd.f32 %v2778, %v2787
        %v2793 = vadd.f32 %v2779, %v2789
        %s2794 = sld [smem:[#allocation9 + $0x39]]
        %v2795 = vstv %s2794
        %v2796 = vmul.f32 %v2795, %v2125
        %v2797 = vmul.f32 %v2795, %v2126
        %v2798 = vadd.f32 %v2792, %v2796
        %v2799 = vadd.f32 %v2793, %v2797
        %s2800 = sld [smem:[#allocation9 + $0x3a]]
        %v2801 = vstv %s2800
        %v2802 = vmul.f32 %v2801, %v2125
        %v2803 = vmul.f32 %v2801, %v2126
        %2806 = vrot.lane.b32.xlu0 %v2802, 127
        %v2807 = vpop.permute.xlu0 %2806
        %2808 = vrot.lane.b32.xlu0 %v2803, 127
        %v2809 = vpop.permute.xlu0 %2808
        %v2812 = vadd.f32 %v2798, %v2807
        %v2813 = vadd.f32 %v2799, %v2809
        %s2814 = sld [smem:[#allocation9 + $0x3b]]
        %v2815 = vstv %s2814
        %v2816 = vmul.f32 %v2815, %v2125
        %v2817 = vmul.f32 %v2815, %v2126
        %2820 = vrot.lane.b32.xlu0 %v2816, 126
        %v2821 = vpop.permute.xlu0 %2820
        %2822 = vrot.lane.b32.xlu0 %v2817, 126
        %v2823 = vpop.permute.xlu0 %2822
        %v2826 = vadd.f32 %v2812, %v2821
        %v2827 = vadd.f32 %v2813, %v2823
        %s2828 = sld [smem:[#allocation9 + $0x3c]]
        %v2829 = vstv %s2828
        %v2830 = vmul.f32 %v2829, %v2127
        %v2831 = vmul.f32 %v2829, %v2128
        %v2832 = vadd.f32 %v2826, %v2830
        %v2833 = vadd.f32 %v2827, %v2831
        %s2834 = sld [smem:[#allocation9 + $0x3d]]
        %v2835 = vstv %s2834
        %v2836 = vmul.f32 %v2835, %v2127
        %v2837 = vmul.f32 %v2835, %v2128
        %2840 = vrot.lane.b32.xlu0 %v2836, 127
        %v2841 = vpop.permute.xlu0 %2840
        %2842 = vrot.lane.b32.xlu0 %v2837, 127
        %v2843 = vpop.permute.xlu0 %2842
        %v2846 = vadd.f32 %v2832, %v2841
        %v2847 = vadd.f32 %v2833, %v2843
        %s2848 = sld [smem:[#allocation9 + $0x3e]]
        %v2849 = vstv %s2848
        %v2850 = vmul.f32 %v2849, %v2127
        %v2851 = vmul.f32 %v2849, %v2128
        %2854 = vrot.lane.b32.xlu0 %v2850, 126
        %v2855 = vpop.permute.xlu0 %2854
        %2856 = vrot.lane.b32.xlu0 %v2851, 126
        %v2857 = vpop.permute.xlu0 %2856
        %v2860 = vadd.f32 %v2846, %v2855
        %v2861 = vadd.f32 %v2847, %v2857
        %s2862 = sld [smem:[#allocation9 + $0x3f]]
        %v2863 = vstv %s2862
        %v2864 = vmul.f32 %v2863, %v2129
        %v2865 = vmul.f32 %v2863, %v2130
        %v2866 = vadd.f32 %v2860, %v2864
        %v2867 = vadd.f32 %v2861, %v2865
        %s2868 = sld [smem:[#allocation9 + $0x40]]
        %v2869 = vstv %s2868
        %v2870 = vmul.f32 %v2869, %v2129
        %v2871 = vmul.f32 %v2869, %v2130
        %2874 = vrot.lane.b32.xlu0 %v2870, 127
        %v2875 = vpop.permute.xlu0 %2874
        %2876 = vrot.lane.b32.xlu0 %v2871, 127
        %v2877 = vpop.permute.xlu0 %2876
        %v2880 = vadd.f32 %v2866, %v2875
        %v2881 = vadd.f32 %v2867, %v2877
        %s2882 = sld [smem:[#allocation9 + $0x41]]
        %v2883 = vstv %s2882
        %v2884 = vmul.f32 %v2883, %v2129
        %v2885 = vmul.f32 %v2883, %v2130
        %2888 = vrot.lane.b32.xlu0 %v2884, 126
        %v2889 = vpop.permute.xlu0 %2888
        %2890 = vrot.lane.b32.xlu0 %v2885, 126
        %v2891 = vpop.permute.xlu0 %2890
        %v2894 = vadd.f32 %v2880, %v2889
        %v2895 = vadd.f32 %v2881, %v2891
        %s2896 = sld [smem:[#allocation9 + $0x42]]
        %v2897 = vstv %s2896
        %v2898 = vmul.f32 %v2897, %v2131
        %v2899 = vmul.f32 %v2897, %v2132
        %v2900 = vadd.f32 %v2894, %v2898
        %v2901 = vadd.f32 %v2895, %v2899
        %s2902 = sld [smem:[#allocation9 + $0x43]]
        %v2903 = vstv %s2902
        %v2904 = vmul.f32 %v2903, %v2131
        %v2905 = vmul.f32 %v2903, %v2132
        %2908 = vrot.lane.b32.xlu0 %v2904, 127
        %v2909 = vpop.permute.xlu0 %2908
        %2910 = vrot.lane.b32.xlu0 %v2905, 127
        %v2911 = vpop.permute.xlu0 %2910
        %v2914 = vadd.f32 %v2900, %v2909
        %v2915 = vadd.f32 %v2901, %v2911
        %s2916 = sld [smem:[#allocation9 + $0x44]]
        %v2917 = vstv %s2916
        %v2918 = vmul.f32 %v2917, %v2131
        %v2919 = vmul.f32 %v2917, %v2132
        %2922 = vrot.lane.b32.xlu0 %v2918, 126
        %v2923 = vpop.permute.xlu0 %2922
        %2924 = vrot.lane.b32.xlu0 %v2919, 126
        %v2925 = vpop.permute.xlu0 %2924
        %v2928 = vadd.f32 %v2914, %v2923
        %v2929 = vadd.f32 %v2915, %v2925
        %s2930 = sld [smem:[#allocation9 + $0x45]]
        %v2931 = vstv %s2930
        %v2932 = vmul.f32 %v2931, %v2133
        %v2933 = vmul.f32 %v2931, %v2134
        %v2934 = vadd.f32 %v2928, %v2932
        %v2935 = vadd.f32 %v2929, %v2933
        %s2936 = sld [smem:[#allocation9 + $0x46]]
        %v2937 = vstv %s2936
        %v2938 = vmul.f32 %v2937, %v2133
        %v2939 = vmul.f32 %v2937, %v2134
        %2942 = vrot.lane.b32.xlu0 %v2938, 127
        %v2943 = vpop.permute.xlu0 %2942
        %2944 = vrot.lane.b32.xlu0 %v2939, 127
        %v2945 = vpop.permute.xlu0 %2944
        %v2948 = vadd.f32 %v2934, %v2943
        %v2949 = vadd.f32 %v2935, %v2945
        %s2950 = sld [smem:[#allocation9 + $0x47]]
        %v2951 = vstv %s2950
        %v2952 = vmul.f32 %v2951, %v2133
        %v2953 = vmul.f32 %v2951, %v2134
        %2956 = vrot.lane.b32.xlu0 %v2952, 126
        %v2957 = vpop.permute.xlu0 %2956
        %2958 = vrot.lane.b32.xlu0 %v2953, 126
        %v2959 = vpop.permute.xlu0 %2958
        %v2962 = vadd.f32 %v2948, %v2957
        %v2963 = vadd.f32 %v2949, %v2959
        %s2964 = sld [smem:[#allocation11 + $0x1]]
        %v2965 = vstv %s2964
        %v2966 = vmul.f32 %v2962, %v2965
        %v2967 = vmul.f32 %v2963, %v2965
        %s2968 = sld [smem:[#allocation12 + $0x1]]
        %v2969 = vstv %s2968
        %v2970 = vadd.f32 %v2966, %v2969
        %v2971 = vadd.f32 %v2967, %v2969
        %v2972 = vmax.f32 %v2970, 0.0
        %v2973 = vmax.f32 %v2971, 0.0
        %s2974 = scalar_lea.vmem %s348, 16 [#allocation14]
        %2975 = vst.msk [vmem:[%s2974] sm:$0xff] %vm2553, %v2972
        %2976 = vst.msk [vmem:[%s2974 + $0x8] sm:$0xff] %vm2553, %v2973
        %s2977 = sld [smem:[#allocation9 + $0x48]]
        %v2978 = vstv %s2977
        %v2979 = vmul.f32 %v2978, %v2111
        %v2980 = vmul.f32 %v2978, %v2112
        %v2981 = vadd.f32 %v2979, 0.0
        %v2982 = vadd.f32 %v2980, 0.0
        %s2983 = sld [smem:[#allocation9 + $0x49]]
        %v2984 = vstv %s2983
        %v2985 = vmul.f32 %v2984, %v2111
        %v2986 = vmul.f32 %v2984, %v2112
        %2989 = vrot.lane.b32.xlu0 %v2985, 127
        %v2990 = vpop.permute.xlu0 %2989
        %2991 = vrot.lane.b32.xlu0 %v2986, 127
        %v2992 = vpop.permute.xlu0 %2991
        %v2995 = vadd.f32 %v2981, %v2990
        %v2996 = vadd.f32 %v2982, %v2992
        %s2997 = sld [smem:[#allocation9 + $0x4a]]
        %v2998 = vstv %s2997
        %v2999 = vmul.f32 %v2998, %v2111
        %v3000 = vmul.f32 %v2998, %v2112
        %3003 = vrot.lane.b32.xlu0 %v2999, 126
        %v3004 = vpop.permute.xlu0 %3003
        %3005 = vrot.lane.b32.xlu0 %v3000, 126
        %v3006 = vpop.permute.xlu0 %3005
        %v3009 = vadd.f32 %v2995, %v3004
        %v3010 = vadd.f32 %v2996, %v3006
        %s3011 = sld [smem:[#allocation9 + $0x4b]]
        %v3012 = vstv %s3011
        %v3013 = vmul.f32 %v3012, %v2113
        %v3014 = vmul.f32 %v3012, %v2114
        %v3015 = vadd.f32 %v3009, %v3013
        %v3016 = vadd.f32 %v3010, %v3014
        %s3017 = sld [smem:[#allocation9 + $0x4c]]
        %v3018 = vstv %s3017
        %v3019 = vmul.f32 %v3018, %v2113
        %v3020 = vmul.f32 %v3018, %v2114
        %3023 = vrot.lane.b32.xlu0 %v3019, 127
        %v3024 = vpop.permute.xlu0 %3023
        %3025 = vrot.lane.b32.xlu0 %v3020, 127
        %v3026 = vpop.permute.xlu0 %3025
        %v3029 = vadd.f32 %v3015, %v3024
        %v3030 = vadd.f32 %v3016, %v3026
        %s3031 = sld [smem:[#allocation9 + $0x4d]]
        %v3032 = vstv %s3031
        %v3033 = vmul.f32 %v3032, %v2113
        %v3034 = vmul.f32 %v3032, %v2114
        %3037 = vrot.lane.b32.xlu0 %v3033, 126
        %v3038 = vpop.permute.xlu0 %3037
        %3039 = vrot.lane.b32.xlu0 %v3034, 126
        %v3040 = vpop.permute.xlu0 %3039
        %v3043 = vadd.f32 %v3029, %v3038
        %v3044 = vadd.f32 %v3030, %v3040
        %s3045 = sld [smem:[#allocation9 + $0x4e]]
        %v3046 = vstv %s3045
        %v3047 = vmul.f32 %v3046, %v2115
        %v3048 = vmul.f32 %v3046, %v2116
        %v3049 = vadd.f32 %v3043, %v3047
        %v3050 = vadd.f32 %v3044, %v3048
        %s3051 = sld [smem:[#allocation9 + $0x4f]]
        %v3052 = vstv %s3051
        %v3053 = vmul.f32 %v3052, %v2115
        %v3054 = vmul.f32 %v3052, %v2116
        %3057 = vrot.lane.b32.xlu0 %v3053, 127
        %v3058 = vpop.permute.xlu0 %3057
        %3059 = vrot.lane.b32.xlu0 %v3054, 127
        %v3060 = vpop.permute.xlu0 %3059
        %v3063 = vadd.f32 %v3049, %v3058
        %v3064 = vadd.f32 %v3050, %v3060
        %s3065 = sld [smem:[#allocation9 + $0x50]]
        %v3066 = vstv %s3065
        %v3067 = vmul.f32 %v3066, %v2115
        %v3068 = vmul.f32 %v3066, %v2116
        %3071 = vrot.lane.b32.xlu0 %v3067, 126
        %v3072 = vpop.permute.xlu0 %3071
        %3073 = vrot.lane.b32.xlu0 %v3068, 126
        %v3074 = vpop.permute.xlu0 %3073
        %v3077 = vadd.f32 %v3063, %v3072
        %v3078 = vadd.f32 %v3064, %v3074
        %s3079 = sld [smem:[#allocation9 + $0x51]]
        %v3080 = vstv %s3079
        %v3081 = vmul.f32 %v3080, %v2117
        %v3082 = vmul.f32 %v3080, %v2118
        %v3083 = vadd.f32 %v3077, %v3081
        %v3084 = vadd.f32 %v3078, %v3082
        %s3085 = sld [smem:[#allocation9 + $0x52]]
        %v3086 = vstv %s3085
        %v3087 = vmul.f32 %v3086, %v2117
        %v3088 = vmul.f32 %v3086, %v2118
        %3091 = vrot.lane.b32.xlu0 %v3087, 127
        %v3092 = vpop.permute.xlu0 %3091
        %3093 = vrot.lane.b32.xlu0 %v3088, 127
        %v3094 = vpop.permute.xlu0 %3093
        %v3097 = vadd.f32 %v3083, %v3092
        %v3098 = vadd.f32 %v3084, %v3094
        %s3099 = sld [smem:[#allocation9 + $0x53]]
        %v3100 = vstv %s3099
        %v3101 = vmul.f32 %v3100, %v2117
        %v3102 = vmul.f32 %v3100, %v2118
        %3105 = vrot.lane.b32.xlu0 %v3101, 126
        %v3106 = vpop.permute.xlu0 %3105
        %3107 = vrot.lane.b32.xlu0 %v3102, 126
        %v3108 = vpop.permute.xlu0 %3107
        %v3111 = vadd.f32 %v3097, %v3106
        %v3112 = vadd.f32 %v3098, %v3108
        %s3113 = sld [smem:[#allocation9 + $0x54]]
        %v3114 = vstv %s3113
        %v3115 = vmul.f32 %v3114, %v2119
        %v3116 = vmul.f32 %v3114, %v2120
        %v3117 = vadd.f32 %v3111, %v3115
        %v3118 = vadd.f32 %v3112, %v3116
        %s3119 = sld [smem:[#allocation9 + $0x55]]
        %v3120 = vstv %s3119
        %v3121 = vmul.f32 %v3120, %v2119
        %v3122 = vmul.f32 %v3120, %v2120
        %3125 = vrot.lane.b32.xlu0 %v3121, 127
        %v3126 = vpop.permute.xlu0 %3125
        %3127 = vrot.lane.b32.xlu0 %v3122, 127
        %v3128 = vpop.permute.xlu0 %3127
        %v3131 = vadd.f32 %v3117, %v3126
        %v3132 = vadd.f32 %v3118, %v3128
        %s3133 = sld [smem:[#allocation9 + $0x56]]
        %v3134 = vstv %s3133
        %v3135 = vmul.f32 %v3134, %v2119
        %v3136 = vmul.f32 %v3134, %v2120
        %3139 = vrot.lane.b32.xlu0 %v3135, 126
        %v3140 = vpop.permute.xlu0 %3139
        %3141 = vrot.lane.b32.xlu0 %v3136, 126
        %v3142 = vpop.permute.xlu0 %3141
        %v3145 = vadd.f32 %v3131, %v3140
        %v3146 = vadd.f32 %v3132, %v3142
        %s3147 = sld [smem:[#allocation9 + $0x57]]
        %v3148 = vstv %s3147
        %v3149 = vmul.f32 %v3148, %v2121
        %v3150 = vmul.f32 %v3148, %v2122
        %v3151 = vadd.f32 %v3145, %v3149
        %v3152 = vadd.f32 %v3146, %v3150
        %s3153 = sld [smem:[#allocation9 + $0x58]]
        %v3154 = vstv %s3153
        %v3155 = vmul.f32 %v3154, %v2121
        %v3156 = vmul.f32 %v3154, %v2122
        %3159 = vrot.lane.b32.xlu0 %v3155, 127
        %v3160 = vpop.permute.xlu0 %3159
        %3161 = vrot.lane.b32.xlu0 %v3156, 127
        %v3162 = vpop.permute.xlu0 %3161
        %v3165 = vadd.f32 %v3151, %v3160
        %v3166 = vadd.f32 %v3152, %v3162
        %s3167 = sld [smem:[#allocation9 + $0x59]]
        %v3168 = vstv %s3167
        %v3169 = vmul.f32 %v3168, %v2121
        %v3170 = vmul.f32 %v3168, %v2122
        %3173 = vrot.lane.b32.xlu0 %v3169, 126
        %v3174 = vpop.permute.xlu0 %3173
        %3175 = vrot.lane.b32.xlu0 %v3170, 126
        %v3176 = vpop.permute.xlu0 %3175
        %v3179 = vadd.f32 %v3165, %v3174
        %v3180 = vadd.f32 %v3166, %v3176
        %s3181 = sld [smem:[#allocation9 + $0x5a]]
        %v3182 = vstv %s3181
        %v3183 = vmul.f32 %v3182, %v2123
        %v3184 = vmul.f32 %v3182, %v2124
        %v3185 = vadd.f32 %v3179, %v3183
        %v3186 = vadd.f32 %v3180, %v3184
        %s3187 = sld [smem:[#allocation9 + $0x5b]]
        %v3188 = vstv %s3187
        %v3189 = vmul.f32 %v3188, %v2123
        %v3190 = vmul.f32 %v3188, %v2124
        %3193 = vrot.lane.b32.xlu0 %v3189, 127
        %v3194 = vpop.permute.xlu0 %3193
        %3195 = vrot.lane.b32.xlu0 %v3190, 127
        %v3196 = vpop.permute.xlu0 %3195
        %v3199 = vadd.f32 %v3185, %v3194
        %v3200 = vadd.f32 %v3186, %v3196
        %s3201 = sld [smem:[#allocation9 + $0x5c]]
        %v3202 = vstv %s3201
        %v3203 = vmul.f32 %v3202, %v2123
        %v3204 = vmul.f32 %v3202, %v2124
        %3207 = vrot.lane.b32.xlu0 %v3203, 126
        %v3208 = vpop.permute.xlu0 %3207
        %3209 = vrot.lane.b32.xlu0 %v3204, 126
        %v3210 = vpop.permute.xlu0 %3209
        %v3213 = vadd.f32 %v3199, %v3208
        %v3214 = vadd.f32 %v3200, %v3210
        %s3215 = sld [smem:[#allocation9 + $0x5d]]
        %v3216 = vstv %s3215
        %v3217 = vmul.f32 %v3216, %v2125
        %v3218 = vmul.f32 %v3216, %v2126
        %v3219 = vadd.f32 %v3213, %v3217
        %v3220 = vadd.f32 %v3214, %v3218
        %s3221 = sld [smem:[#allocation9 + $0x5e]]
        %v3222 = vstv %s3221
        %v3223 = vmul.f32 %v3222, %v2125
        %v3224 = vmul.f32 %v3222, %v2126
        %3227 = vrot.lane.b32.xlu0 %v3223, 127
        %v3228 = vpop.permute.xlu0 %3227
        %3229 = vrot.lane.b32.xlu0 %v3224, 127
        %v3230 = vpop.permute.xlu0 %3229
        %v3233 = vadd.f32 %v3219, %v3228
        %v3234 = vadd.f32 %v3220, %v3230
        %s3235 = sld [smem:[#allocation9 + $0x5f]]
        %v3236 = vstv %s3235
        %v3237 = vmul.f32 %v3236, %v2125
        %v3238 = vmul.f32 %v3236, %v2126
        %3241 = vrot.lane.b32.xlu0 %v3237, 126
        %v3242 = vpop.permute.xlu0 %3241
        %3243 = vrot.lane.b32.xlu0 %v3238, 126
        %v3244 = vpop.permute.xlu0 %3243
        %v3247 = vadd.f32 %v3233, %v3242
        %v3248 = vadd.f32 %v3234, %v3244
        %s3249 = sld [smem:[#allocation9 + $0x60]]
        %v3250 = vstv %s3249
        %v3251 = vmul.f32 %v3250, %v2127
        %v3252 = vmul.f32 %v3250, %v2128
        %v3253 = vadd.f32 %v3247, %v3251
        %v3254 = vadd.f32 %v3248, %v3252
        %s3255 = sld [smem:[#allocation9 + $0x61]]
        %v3256 = vstv %s3255
        %v3257 = vmul.f32 %v3256, %v2127
        %v3258 = vmul.f32 %v3256, %v2128
        %3261 = vrot.lane.b32.xlu0 %v3257, 127
        %v3262 = vpop.permute.xlu0 %3261
        %3263 = vrot.lane.b32.xlu0 %v3258, 127
        %v3264 = vpop.permute.xlu0 %3263
        %v3267 = vadd.f32 %v3253, %v3262
        %v3268 = vadd.f32 %v3254, %v3264
        %s3269 = sld [smem:[#allocation9 + $0x62]]
        %v3270 = vstv %s3269
        %v3271 = vmul.f32 %v3270, %v2127
        %v3272 = vmul.f32 %v3270, %v2128
        %3275 = vrot.lane.b32.xlu0 %v3271, 126
        %v3276 = vpop.permute.xlu0 %3275
        %3277 = vrot.lane.b32.xlu0 %v3272, 126
        %v3278 = vpop.permute.xlu0 %3277
        %v3281 = vadd.f32 %v3267, %v3276
        %v3282 = vadd.f32 %v3268, %v3278
        %s3283 = sld [smem:[#allocation9 + $0x63]]
        %v3284 = vstv %s3283
        %v3285 = vmul.f32 %v3284, %v2129
        %v3286 = vmul.f32 %v3284, %v2130
        %v3287 = vadd.f32 %v3281, %v3285
        %v3288 = vadd.f32 %v3282, %v3286
        %s3289 = sld [smem:[#allocation9 + $0x64]]
        %v3290 = vstv %s3289
        %v3291 = vmul.f32 %v3290, %v2129
        %v3292 = vmul.f32 %v3290, %v2130
        %3295 = vrot.lane.b32.xlu0 %v3291, 127
        %v3296 = vpop.permute.xlu0 %3295
        %3297 = vrot.lane.b32.xlu0 %v3292, 127
        %v3298 = vpop.permute.xlu0 %3297
        %v3301 = vadd.f32 %v3287, %v3296
        %v3302 = vadd.f32 %v3288, %v3298
        %s3303 = sld [smem:[#allocation9 + $0x65]]
        %v3304 = vstv %s3303
        %v3305 = vmul.f32 %v3304, %v2129
        %v3306 = vmul.f32 %v3304, %v2130
        %3309 = vrot.lane.b32.xlu0 %v3305, 126
        %v3310 = vpop.permute.xlu0 %3309
        %3311 = vrot.lane.b32.xlu0 %v3306, 126
        %v3312 = vpop.permute.xlu0 %3311
        %v3315 = vadd.f32 %v3301, %v3310
        %v3316 = vadd.f32 %v3302, %v3312
        %s3317 = sld [smem:[#allocation9 + $0x66]]
        %v3318 = vstv %s3317
        %v3319 = vmul.f32 %v3318, %v2131
        %v3320 = vmul.f32 %v3318, %v2132
        %v3321 = vadd.f32 %v3315, %v3319
        %v3322 = vadd.f32 %v3316, %v3320
        %s3323 = sld [smem:[#allocation9 + $0x67]]
        %v3324 = vstv %s3323
        %v3325 = vmul.f32 %v3324, %v2131
        %v3326 = vmul.f32 %v3324, %v2132
        %3329 = vrot.lane.b32.xlu0 %v3325, 127
        %v3330 = vpop.permute.xlu0 %3329
        %3331 = vrot.lane.b32.xlu0 %v3326, 127
        %v3332 = vpop.permute.xlu0 %3331
        %v3335 = vadd.f32 %v3321, %v3330
        %v3336 = vadd.f32 %v3322, %v3332
        %s3337 = sld [smem:[#allocation9 + $0x68]]
        %v3338 = vstv %s3337
        %v3339 = vmul.f32 %v3338, %v2131
        %v3340 = vmul.f32 %v3338, %v2132
        %3343 = vrot.lane.b32.xlu0 %v3339, 126
        %v3344 = vpop.permute.xlu0 %3343
        %3345 = vrot.lane.b32.xlu0 %v3340, 126
        %v3346 = vpop.permute.xlu0 %3345
        %v3349 = vadd.f32 %v3335, %v3344
        %v3350 = vadd.f32 %v3336, %v3346
        %s3351 = sld [smem:[#allocation9 + $0x69]]
        %v3352 = vstv %s3351
        %v3353 = vmul.f32 %v3352, %v2133
        %v3354 = vmul.f32 %v3352, %v2134
        %v3355 = vadd.f32 %v3349, %v3353
        %v3356 = vadd.f32 %v3350, %v3354
        %s3357 = sld [smem:[#allocation9 + $0x6a]]
        %v3358 = vstv %s3357
        %v3359 = vmul.f32 %v3358, %v2133
        %v3360 = vmul.f32 %v3358, %v2134
        %3363 = vrot.lane.b32.xlu0 %v3359, 127
        %v3364 = vpop.permute.xlu0 %3363
        %3365 = vrot.lane.b32.xlu0 %v3360, 127
        %v3366 = vpop.permute.xlu0 %3365
        %v3369 = vadd.f32 %v3355, %v3364
        %v3370 = vadd.f32 %v3356, %v3366
        %s3371 = sld [smem:[#allocation9 + $0x6b]]
        %v3372 = vstv %s3371
        %v3373 = vmul.f32 %v3372, %v2133
        %v3374 = vmul.f32 %v3372, %v2134
        %3377 = vrot.lane.b32.xlu0 %v3373, 126
        %v3378 = vpop.permute.xlu0 %3377
        %3379 = vrot.lane.b32.xlu0 %v3374, 126
        %v3380 = vpop.permute.xlu0 %3379
        %v3383 = vadd.f32 %v3369, %v3378
        %v3384 = vadd.f32 %v3370, %v3380
        %s3385 = sld [smem:[#allocation11 + $0x2]]
        %v3386 = vstv %s3385
        %v3387 = vmul.f32 %v3383, %v3386
        %v3388 = vmul.f32 %v3384, %v3386
        %s3389 = sld [smem:[#allocation12 + $0x2]]
        %v3390 = vstv %s3389
        %v3391 = vadd.f32 %v3387, %v3390
        %v3392 = vadd.f32 %v3388, %v3390
        %v3393 = vmax.f32 %v3391, 0.0
        %v3394 = vmax.f32 %v3392, 0.0
        %s3395 = scalar_lea.vmem %s348, 32 [#allocation14]
        %3396 = vst.msk [vmem:[%s3395] sm:$0xff] %vm2553, %v3393
        %3397 = vst.msk [vmem:[%s3395 + $0x8] sm:$0xff] %vm2553, %v3394
        %s3398 = sld [smem:[#allocation9 + $0x6c]]
        %v3399 = vstv %s3398
        %v3400 = vmul.f32 %v3399, %v2111
        %v3401 = vmul.f32 %v3399, %v2112
        %v3402 = vadd.f32 %v3400, 0.0
        %v3403 = vadd.f32 %v3401, 0.0
        %s3404 = sld [smem:[#allocation9 + $0x6d]]
        %v3405 = vstv %s3404
        %v3406 = vmul.f32 %v3405, %v2111
        %v3407 = vmul.f32 %v3405, %v2112
        %3410 = vrot.lane.b32.xlu0 %v3406, 127
        %v3411 = vpop.permute.xlu0 %3410
        %3412 = vrot.lane.b32.xlu0 %v3407, 127
        %v3413 = vpop.permute.xlu0 %3412
        %v3416 = vadd.f32 %v3402, %v3411
        %v3417 = vadd.f32 %v3403, %v3413
        %s3418 = sld [smem:[#allocation9 + $0x6e]]
        %v3419 = vstv %s3418
        %v3420 = vmul.f32 %v3419, %v2111
        %v3421 = vmul.f32 %v3419, %v2112
        %3424 = vrot.lane.b32.xlu0 %v3420, 126
        %v3425 = vpop.permute.xlu0 %3424
        %3426 = vrot.lane.b32.xlu0 %v3421, 126
        %v3427 = vpop.permute.xlu0 %3426
        %v3430 = vadd.f32 %v3416, %v3425
        %v3431 = vadd.f32 %v3417, %v3427
        %s3432 = sld [smem:[#allocation9 + $0x6f]]
        %v3433 = vstv %s3432
        %v3434 = vmul.f32 %v3433, %v2113
        %v3435 = vmul.f32 %v3433, %v2114
        %v3436 = vadd.f32 %v3430, %v3434
        %v3437 = vadd.f32 %v3431, %v3435
        %s3438 = sld [smem:[#allocation9 + $0x70]]
        %v3439 = vstv %s3438
        %v3440 = vmul.f32 %v3439, %v2113
        %v3441 = vmul.f32 %v3439, %v2114
        %3444 = vrot.lane.b32.xlu0 %v3440, 127
        %v3445 = vpop.permute.xlu0 %3444
        %3446 = vrot.lane.b32.xlu0 %v3441, 127
        %v3447 = vpop.permute.xlu0 %3446
        %v3450 = vadd.f32 %v3436, %v3445
        %v3451 = vadd.f32 %v3437, %v3447
        %s3452 = sld [smem:[#allocation9 + $0x71]]
        %v3453 = vstv %s3452
        %v3454 = vmul.f32 %v3453, %v2113
        %v3455 = vmul.f32 %v3453, %v2114
        %3458 = vrot.lane.b32.xlu0 %v3454, 126
        %v3459 = vpop.permute.xlu0 %3458
        %3460 = vrot.lane.b32.xlu0 %v3455, 126
        %v3461 = vpop.permute.xlu0 %3460
        %v3464 = vadd.f32 %v3450, %v3459
        %v3465 = vadd.f32 %v3451, %v3461
        %s3466 = sld [smem:[#allocation9 + $0x72]]
        %v3467 = vstv %s3466
        %v3468 = vmul.f32 %v3467, %v2115
        %v3469 = vmul.f32 %v3467, %v2116
        %v3470 = vadd.f32 %v3464, %v3468
        %v3471 = vadd.f32 %v3465, %v3469
        %s3472 = sld [smem:[#allocation9 + $0x73]]
        %v3473 = vstv %s3472
        %v3474 = vmul.f32 %v3473, %v2115
        %v3475 = vmul.f32 %v3473, %v2116
        %3478 = vrot.lane.b32.xlu0 %v3474, 127
        %v3479 = vpop.permute.xlu0 %3478
        %3480 = vrot.lane.b32.xlu0 %v3475, 127
        %v3481 = vpop.permute.xlu0 %3480
        %v3484 = vadd.f32 %v3470, %v3479
        %v3485 = vadd.f32 %v3471, %v3481
        %s3486 = sld [smem:[#allocation9 + $0x74]]
        %v3487 = vstv %s3486
        %v3488 = vmul.f32 %v3487, %v2115
        %v3489 = vmul.f32 %v3487, %v2116
        %3492 = vrot.lane.b32.xlu0 %v3488, 126
        %v3493 = vpop.permute.xlu0 %3492
        %3494 = vrot.lane.b32.xlu0 %v3489, 126
        %v3495 = vpop.permute.xlu0 %3494
        %v3498 = vadd.f32 %v3484, %v3493
        %v3499 = vadd.f32 %v3485, %v3495
        %s3500 = sld [smem:[#allocation9 + $0x75]]
        %v3501 = vstv %s3500
        %v3502 = vmul.f32 %v3501, %v2117
        %v3503 = vmul.f32 %v3501, %v2118
        %v3504 = vadd.f32 %v3498, %v3502
        %v3505 = vadd.f32 %v3499, %v3503
        %s3506 = sld [smem:[#allocation9 + $0x76]]
        %v3507 = vstv %s3506
        %v3508 = vmul.f32 %v3507, %v2117
        %v3509 = vmul.f32 %v3507, %v2118
        %3512 = vrot.lane.b32.xlu0 %v3508, 127
        %v3513 = vpop.permute.xlu0 %3512
        %3514 = vrot.lane.b32.xlu0 %v3509, 127
        %v3515 = vpop.permute.xlu0 %3514
        %v3518 = vadd.f32 %v3504, %v3513
        %v3519 = vadd.f32 %v3505, %v3515
        %s3520 = sld [smem:[#allocation9 + $0x77]]
        %v3521 = vstv %s3520
        %v3522 = vmul.f32 %v3521, %v2117
        %v3523 = vmul.f32 %v3521, %v2118
        %3526 = vrot.lane.b32.xlu0 %v3522, 126
        %v3527 = vpop.permute.xlu0 %3526
        %3528 = vrot.lane.b32.xlu0 %v3523, 126
        %v3529 = vpop.permute.xlu0 %3528
        %v3532 = vadd.f32 %v3518, %v3527
        %v3533 = vadd.f32 %v3519, %v3529
        %s3534 = sld [smem:[#allocation9 + $0x78]]
        %v3535 = vstv %s3534
        %v3536 = vmul.f32 %v3535, %v2119
        %v3537 = vmul.f32 %v3535, %v2120
        %v3538 = vadd.f32 %v3532, %v3536
        %v3539 = vadd.f32 %v3533, %v3537
        %s3540 = sld [smem:[#allocation9 + $0x79]]
        %v3541 = vstv %s3540
        %v3542 = vmul.f32 %v3541, %v2119
        %v3543 = vmul.f32 %v3541, %v2120
        %3546 = vrot.lane.b32.xlu0 %v3542, 127
        %v3547 = vpop.permute.xlu0 %3546
        %3548 = vrot.lane.b32.xlu0 %v3543, 127
        %v3549 = vpop.permute.xlu0 %3548
        %v3552 = vadd.f32 %v3538, %v3547
        %v3553 = vadd.f32 %v3539, %v3549
        %s3554 = sld [smem:[#allocation9 + $0x7a]]
        %v3555 = vstv %s3554
        %v3556 = vmul.f32 %v3555, %v2119
        %v3557 = vmul.f32 %v3555, %v2120
        %3560 = vrot.lane.b32.xlu0 %v3556, 126
        %v3561 = vpop.permute.xlu0 %3560
        %3562 = vrot.lane.b32.xlu0 %v3557, 126
        %v3563 = vpop.permute.xlu0 %3562
        %v3566 = vadd.f32 %v3552, %v3561
        %v3567 = vadd.f32 %v3553, %v3563
        %s3568 = sld [smem:[#allocation9 + $0x7b]]
        %v3569 = vstv %s3568
        %v3570 = vmul.f32 %v3569, %v2121
        %v3571 = vmul.f32 %v3569, %v2122
        %v3572 = vadd.f32 %v3566, %v3570
        %v3573 = vadd.f32 %v3567, %v3571
        %s3574 = sld [smem:[#allocation9 + $0x7c]]
        %v3575 = vstv %s3574
        %v3576 = vmul.f32 %v3575, %v2121
        %v3577 = vmul.f32 %v3575, %v2122
        %3580 = vrot.lane.b32.xlu0 %v3576, 127
        %v3581 = vpop.permute.xlu0 %3580
        %3582 = vrot.lane.b32.xlu0 %v3577, 127
        %v3583 = vpop.permute.xlu0 %3582
        %v3586 = vadd.f32 %v3572, %v3581
        %v3587 = vadd.f32 %v3573, %v3583
        %s3588 = sld [smem:[#allocation9 + $0x7d]]
        %v3589 = vstv %s3588
        %v3590 = vmul.f32 %v3589, %v2121
        %v3591 = vmul.f32 %v3589, %v2122
        %3594 = vrot.lane.b32.xlu0 %v3590, 126
        %v3595 = vpop.permute.xlu0 %3594
        %3596 = vrot.lane.b32.xlu0 %v3591, 126
        %v3597 = vpop.permute.xlu0 %3596
        %v3600 = vadd.f32 %v3586, %v3595
        %v3601 = vadd.f32 %v3587, %v3597
        %s3602 = sld [smem:[#allocation9 + $0x7e]]
        %v3603 = vstv %s3602
        %v3604 = vmul.f32 %v3603, %v2123
        %v3605 = vmul.f32 %v3603, %v2124
        %v3606 = vadd.f32 %v3600, %v3604
        %v3607 = vadd.f32 %v3601, %v3605
        %s3608 = sld [smem:[#allocation9 + $0x7f]]
        %v3609 = vstv %s3608
        %v3610 = vmul.f32 %v3609, %v2123
        %v3611 = vmul.f32 %v3609, %v2124
        %3614 = vrot.lane.b32.xlu0 %v3610, 127
        %v3615 = vpop.permute.xlu0 %3614
        %3616 = vrot.lane.b32.xlu0 %v3611, 127
        %v3617 = vpop.permute.xlu0 %3616
        %v3620 = vadd.f32 %v3606, %v3615
        %v3621 = vadd.f32 %v3607, %v3617
        %s3622 = sld [smem:[#allocation9 + $0x80]]
        %v3623 = vstv %s3622
        %v3624 = vmul.f32 %v3623, %v2123
        %v3625 = vmul.f32 %v3623, %v2124
        %3628 = vrot.lane.b32.xlu0 %v3624, 126
        %v3629 = vpop.permute.xlu0 %3628
        %3630 = vrot.lane.b32.xlu0 %v3625, 126
        %v3631 = vpop.permute.xlu0 %3630
        %v3634 = vadd.f32 %v3620, %v3629
        %v3635 = vadd.f32 %v3621, %v3631
        %s3636 = sld [smem:[#allocation9 + $0x81]]
        %v3637 = vstv %s3636
        %v3638 = vmul.f32 %v3637, %v2125
        %v3639 = vmul.f32 %v3637, %v2126
        %v3640 = vadd.f32 %v3634, %v3638
        %v3641 = vadd.f32 %v3635, %v3639
        %s3642 = sld [smem:[#allocation9 + $0x82]]
        %v3643 = vstv %s3642
        %v3644 = vmul.f32 %v3643, %v2125
        %v3645 = vmul.f32 %v3643, %v2126
        %3648 = vrot.lane.b32.xlu0 %v3644, 127
        %v3649 = vpop.permute.xlu0 %3648
        %3650 = vrot.lane.b32.xlu0 %v3645, 127
        %v3651 = vpop.permute.xlu0 %3650
        %v3654 = vadd.f32 %v3640, %v3649
        %v3655 = vadd.f32 %v3641, %v3651
        %s3656 = sld [smem:[#allocation9 + $0x83]]
        %v3657 = vstv %s3656
        %v3658 = vmul.f32 %v3657, %v2125
        %v3659 = vmul.f32 %v3657, %v2126
        %3662 = vrot.lane.b32.xlu0 %v3658, 126
        %v3663 = vpop.permute.xlu0 %3662
        %3664 = vrot.lane.b32.xlu0 %v3659, 126
        %v3665 = vpop.permute.xlu0 %3664
        %v3668 = vadd.f32 %v3654, %v3663
        %v3669 = vadd.f32 %v3655, %v3665
        %s3670 = sld [smem:[#allocation9 + $0x84]]
        %v3671 = vstv %s3670
        %v3672 = vmul.f32 %v3671, %v2127
        %v3673 = vmul.f32 %v3671, %v2128
        %v3674 = vadd.f32 %v3668, %v3672
        %v3675 = vadd.f32 %v3669, %v3673
        %s3676 = sld [smem:[#allocation9 + $0x85]]
        %v3677 = vstv %s3676
        %v3678 = vmul.f32 %v3677, %v2127
        %v3679 = vmul.f32 %v3677, %v2128
        %3682 = vrot.lane.b32.xlu0 %v3678, 127
        %v3683 = vpop.permute.xlu0 %3682
        %3684 = vrot.lane.b32.xlu0 %v3679, 127
        %v3685 = vpop.permute.xlu0 %3684
        %v3688 = vadd.f32 %v3674, %v3683
        %v3689 = vadd.f32 %v3675, %v3685
        %s3690 = sld [smem:[#allocation9 + $0x86]]
        %v3691 = vstv %s3690
        %v3692 = vmul.f32 %v3691, %v2127
        %v3693 = vmul.f32 %v3691, %v2128
        %3696 = vrot.lane.b32.xlu0 %v3692, 126
        %v3697 = vpop.permute.xlu0 %3696
        %3698 = vrot.lane.b32.xlu0 %v3693, 126
        %v3699 = vpop.permute.xlu0 %3698
        %v3702 = vadd.f32 %v3688, %v3697
        %v3703 = vadd.f32 %v3689, %v3699
        %s3704 = sld [smem:[#allocation9 + $0x87]]
        %v3705 = vstv %s3704
        %v3706 = vmul.f32 %v3705, %v2129
        %v3707 = vmul.f32 %v3705, %v2130
        %v3708 = vadd.f32 %v3702, %v3706
        %v3709 = vadd.f32 %v3703, %v3707
        %s3710 = sld [smem:[#allocation9 + $0x88]]
        %v3711 = vstv %s3710
        %v3712 = vmul.f32 %v3711, %v2129
        %v3713 = vmul.f32 %v3711, %v2130
        %3716 = vrot.lane.b32.xlu0 %v3712, 127
        %v3717 = vpop.permute.xlu0 %3716
        %3718 = vrot.lane.b32.xlu0 %v3713, 127
        %v3719 = vpop.permute.xlu0 %3718
        %v3722 = vadd.f32 %v3708, %v3717
        %v3723 = vadd.f32 %v3709, %v3719
        %s3724 = sld [smem:[#allocation9 + $0x89]]
        %v3725 = vstv %s3724
        %v3726 = vmul.f32 %v3725, %v2129
        %v3727 = vmul.f32 %v3725, %v2130
        %3730 = vrot.lane.b32.xlu0 %v3726, 126
        %v3731 = vpop.permute.xlu0 %3730
        %3732 = vrot.lane.b32.xlu0 %v3727, 126
        %v3733 = vpop.permute.xlu0 %3732
        %v3736 = vadd.f32 %v3722, %v3731
        %v3737 = vadd.f32 %v3723, %v3733
        %s3738 = sld [smem:[#allocation9 + $0x8a]]
        %v3739 = vstv %s3738
        %v3740 = vmul.f32 %v3739, %v2131
        %v3741 = vmul.f32 %v3739, %v2132
        %v3742 = vadd.f32 %v3736, %v3740
        %v3743 = vadd.f32 %v3737, %v3741
        %s3744 = sld [smem:[#allocation9 + $0x8b]]
        %v3745 = vstv %s3744
        %v3746 = vmul.f32 %v3745, %v2131
        %v3747 = vmul.f32 %v3745, %v2132
        %3750 = vrot.lane.b32.xlu0 %v3746, 127
        %v3751 = vpop.permute.xlu0 %3750
        %3752 = vrot.lane.b32.xlu0 %v3747, 127
        %v3753 = vpop.permute.xlu0 %3752
        %v3756 = vadd.f32 %v3742, %v3751
        %v3757 = vadd.f32 %v3743, %v3753
        %s3758 = sld [smem:[#allocation9 + $0x8c]]
        %v3759 = vstv %s3758
        %v3760 = vmul.f32 %v3759, %v2131
        %v3761 = vmul.f32 %v3759, %v2132
        %3764 = vrot.lane.b32.xlu0 %v3760, 126
        %v3765 = vpop.permute.xlu0 %3764
        %3766 = vrot.lane.b32.xlu0 %v3761, 126
        %v3767 = vpop.permute.xlu0 %3766
        %v3770 = vadd.f32 %v3756, %v3765
        %v3771 = vadd.f32 %v3757, %v3767
        %s3772 = sld [smem:[#allocation9 + $0x8d]]
        %v3773 = vstv %s3772
        %v3774 = vmul.f32 %v3773, %v2133
        %v3775 = vmul.f32 %v3773, %v2134
        %v3776 = vadd.f32 %v3770, %v3774
        %v3777 = vadd.f32 %v3771, %v3775
        %s3778 = sld [smem:[#allocation9 + $0x8e]]
        %v3779 = vstv %s3778
        %v3780 = vmul.f32 %v3779, %v2133
        %v3781 = vmul.f32 %v3779, %v2134
        %3784 = vrot.lane.b32.xlu0 %v3780, 127
        %v3785 = vpop.permute.xlu0 %3784
        %3786 = vrot.lane.b32.xlu0 %v3781, 127
        %v3787 = vpop.permute.xlu0 %3786
        %v3790 = vadd.f32 %v3776, %v3785
        %v3791 = vadd.f32 %v3777, %v3787
        %s3792 = sld [smem:[#allocation9 + $0x8f]]
        %v3793 = vstv %s3792
        %v3794 = vmul.f32 %v3793, %v2133
        %v3795 = vmul.f32 %v3793, %v2134
        %3798 = vrot.lane.b32.xlu0 %v3794, 126
        %v3799 = vpop.permute.xlu0 %3798
        %3800 = vrot.lane.b32.xlu0 %v3795, 126
        %v3801 = vpop.permute.xlu0 %3800
        %v3804 = vadd.f32 %v3790, %v3799
        %v3805 = vadd.f32 %v3791, %v3801
        %s3806 = sld [smem:[#allocation11 + $0x3]]
        %v3807 = vstv %s3806
        %v3808 = vmul.f32 %v3804, %v3807
        %v3809 = vmul.f32 %v3805, %v3807
        %s3810 = sld [smem:[#allocation12 + $0x3]]
        %v3811 = vstv %s3810
        %v3812 = vadd.f32 %v3808, %v3811
        %v3813 = vadd.f32 %v3809, %v3811
        %v3814 = vmax.f32 %v3812, 0.0
        %v3815 = vmax.f32 %v3813, 0.0
        %s3816 = scalar_lea.vmem %s348, 48 [#allocation14]
        %3817 = vst.msk [vmem:[%s3816] sm:$0xff] %vm2553, %v3814
        %3818 = vst.msk [vmem:[%s3816 + $0x8] sm:$0xff] %vm2553, %v3815
        %s3819 = sand.u32 %s185, 1
        %s3820 = scalar_lea.sflag [#allocation4], %s3819
        %s3821 = sand.u32 %s185, 1
        %s3822 = smul.addr %s3821, 64
        %s3823 = scalar_lea.vmem [#allocation14], %s3822
        // Predicated region
        $region73: #{tpu_custom_call.1} parent=47 // pred_check
          %p3824 = pneg %p195
        $region74: #{tpu_custom_call.1} parent=47 // pred_check_branch
          %3826 = sbr.rel (%p3824) target = $region76
        $region75: #{tpu_custom_call.1} parent=47 // pred_region
          %s3828 = ssub.s32 1024, 1024
          %3829 = vsyncadd %s3820, %s3828
          %s3830 = smul.addr %s25, 8
          %s3831 = smul.addr %s3830, 128
          %s3832 = scalar_lea.hbm %s7, %s3831
          %s3833 = sshll.u32 %s3823, 4
          %s3834 = int_to_ptr.vmem [resolvable:$true] %s3833
          %3839 = dma.vmem_to_hbm [thread:$0]  %s3834, 1024, %s3832, %s3820, 128, 128, 8
        $region76: #{tpu_custom_call.1} parent=47 // pred_fallthru
          _
      $region48: #{tpu_custom_call.1} parent=5 // pred_fallthru
        _
      %p3840 = scmp.le.s32.totalorder 2, %s20
      // Predicated region
      $region77: #{tpu_custom_call.1} parent=5 // pred_check
        %p3841 = pneg %p3840
      $region78: #{tpu_custom_call.1} parent=5 // pred_check_branch
        %3843 = sbr.rel (%p3841) target = $region80
      $region79: #{tpu_custom_call.1} parent=5 // pred_region
        %s3844 = ssub.s32 %s20, 2
        // Predicated region
        $region81: #{tpu_custom_call.1} parent=79 // pred_check
          %p3845 = pneg %p201
        $region82: #{tpu_custom_call.1} parent=79 // pred_check_branch
          %3847 = sbr.rel (%p3845) target = $region84
        $region83: #{tpu_custom_call.1} parent=79 // pred_region
          %s3848 = sand.u32 %s186, 1
          %s3849 = scalar_lea.sflag [#allocation4], %s3848
          %s3850 = sand.u32 %s186, 1
          %s3851 = smul.addr %s3850, 64
          %s3852 = scalar_lea.vmem [#allocation14], %s3851
          %3853 = dma.done %s3849, 1024
        $region84: #{tpu_custom_call.1} parent=79 // pred_fallthru
          _
      $region80: #{tpu_custom_call.1} parent=5 // pred_fallthru
        _
    $region6: #{tpu_custom_call.1} parent=1 // loop_footer
      %s24 = sadd.s32 1, %s20
    $region7: #{tpu_custom_call.1} parent=1 // loop_footer_branch
      %19 = sbr.rel target = $region3
    $region8: #{tpu_custom_call.1} parent=1 // loop_exit
      _
    %3854 = vsyncpa [#allocation4], 1
    %s3855 = scalar_lea.sflag [#allocation4], 1
    %3856 = vsyncpa %s3855, 1
    %3857 = vsyncpa [#allocation5], 1
    %s3858 = scalar_lea.sflag [#allocation5], 1
    %3859 = vsyncpa %s3858, 1
    %3860 = vsyncpa [#allocation7], 1
    %3861 = vsyncpa [#allocation10], 1
    %3862 = vsyncpa [#allocation13], 1

</llo_original>
